<compile_context>
chip_gen: v7x
topology: tpu7x:2x2x1
jax: 0.10.0
libtpu: 0.0.40
codegen_flags: <defaults>
</compile_context>

<pallas_src>
import functools

import jax
import jax.numpy as jnp
from jax import lax
from jax.experimental import pallas as pl
from jax.experimental.pallas import tpu as pltpu


def _upsample_conv_kernel(x_ref, w_ref, b_ref, o_ref, *, m0, neg_slope):
    # x_ref : (1, Hin_p, Wup_p, Cin)  original-row-resolution input; columns already
    #                                  2x-duplicated + padded, rows pre-padded by ceil(pad/2).
    # w_ref : (KH, KW, Cin, Cout)
    # b_ref : (1, Cout)
    # o_ref : (1, tile_h, Wo, Cout)
    _, tile_h, wo, cout = o_ref.shape
    kh, kw, cin, _ = w_ref.shape
    t = pl.program_id(1)

    thh = tile_h + kh - 1                      # upsampled rows needed by this tile
    n_rows = (m0 + thh + 1) // 2               # original-resolution rows needed
    m = tile_h * wo                            # matmul M dimension (whole tile)

    # First original-resolution row needed by this output-row tile.
    r0 = pl.multiple_of(t * (tile_h // 2), tile_h // 2)

    acc = jnp.zeros((m, cout), jnp.float32)
    for j in range(kw):                                             # static, fully unrolled
        xtj = x_ref[0, pl.ds(r0, n_rows), pl.ds(j, wo), :]          # (n_rows, Wo, Cin)
        # Fused nearest-2x row upsample: each original row feeds two upsampled rows;
        # m0 accounts for the zero-pad parity.
        xhj = jnp.repeat(xtj, 2, axis=0)[m0:m0 + thh]               # (thh, Wo, Cin)
        xfj = xhj.reshape(thh * wo, cin)                            # Wo % 8 == 0 -> cheap
        for i in range(kh):
            patch = xfj[i * wo:i * wo + m, :]                       # 8-aligned row window
            acc = acc + jnp.dot(patch, w_ref[i, j],
                                preferred_element_type=jnp.float32)

    acc = acc + b_ref[...]                                          # bias, once per tile
    acc = jnp.where(acc >= 0, acc, neg_slope * acc)                 # LeakyReLU
    o_ref[...] = acc.reshape(1, tile_h, wo, cout).astype(o_ref.dtype)


def upsample_conv_layer(x_nchw, weight, bias, *, padding=1, negative_slope=0.01,
                        tile_h_max=16):
    """Nearest-2x upsample -> Conv2d(stride=1, padding) -> LeakyReLU.

    x_nchw: (N, Cin, H, W); weight: (Cout, Cin, KH, KW) (PyTorch OIHW); bias: (Cout,).
    Returns NCHW (N, Cout, Ho, Wo).
    """
    N, Cin, H, W = x_nchw.shape
    Cout, Cin_w, KH, KW = weight.shape
    assert Cin_w == Cin
    # TODO(synk): only stride=1 (the module default) and odd kernel heights are
    # implemented by the fused in-kernel row upsample.
    assert KH % 2 == 1

    pt = (padding + 1) // 2                  # zero rows pre-padded at original resolution
    m0 = 2 * pt - padding                    # phase offset of the fused row upsample
    Ho = 2 * H + 2 * padding - KH + 1
    Wo = 2 * W + 2 * padding - KW + 1
    Hin_p = H + 2 * pt
    Wup_p = 2 * W + 2 * padding

    # Output-row tile: largest even divisor of Ho <= tile_h_max.  Several grid steps per
    # image keep the output-DMA / compute pipeline busy; shrink tile_h_max for very large
    # images on v7x (64 MiB VMEM).
    tile_h = 2
    start = min(tile_h_max, Ho)
    start -= start % 2
    for cand in range(start, 1, -2):
        if Ho % cand == 0:
            tile_h = cand
            break
    n_rows = (m0 + tile_h + KH) // 2         # original-resolution rows needed per tile
    assert (Ho // tile_h - 1) * (tile_h // 2) + n_rows <= Hin_p

    # Cheap wrapper glue at ORIGINAL row resolution: NCHW->NHWC, duplicate columns (2x),
    # zero-pad columns by `padding` and rows by ceil(padding/2).  The 4x-upsampled image
    # never touches HBM; row duplication happens inside the kernel.
    x_nhwc = jnp.transpose(x_nchw, (0, 2, 3, 1))
    x_w = jnp.repeat(x_nhwc, 2, axis=2)
    x_w = jnp.pad(x_w, ((0, 0), (pt, pt), (padding, padding), (0, 0)))

    w_hwio = jnp.transpose(weight, (2, 3, 1, 0))        # (KH, KW, Cin, Cout)
    b2 = bias.reshape(1, Cout)

    kernel = functools.partial(_upsample_conv_kernel, m0=m0, neg_slope=negative_slope)

    out_nhwc = pl.pallas_call(
        kernel,
        out_shape=jax.ShapeDtypeStruct((N, Ho, Wo, Cout), x_nchw.dtype),
        grid_spec=pltpu.PrefetchScalarGridSpec(
            num_scalar_prefetch=0,
            grid=(N, Ho // tile_h),
            in_specs=[
                # Constant block index across row tiles -> fetched once per image, reused.
                pl.BlockSpec((1, Hin_p, Wup_p, Cin), lambda n, t: (n, 0, 0, 0)),
                pl.BlockSpec((KH, KW, Cin, Cout), lambda n, t: (0, 0, 0, 0)),
                pl.BlockSpec((1, Cout), lambda n, t: (0, 0)),
            ],
            out_specs=pl.BlockSpec((1, tile_h, Wo, Cout), lambda n, t: (n, t, 0, 0)),
        ),
        compiler_params=pltpu.CompilerParams(
            dimension_semantics=("parallel", "parallel")),
    )(x_w, w_hwio, b2)

    # PyTorch Conv2d semantics -> NCHW output.
    # TODO(synk): if the downstream layer accepts NHWC, return out_nhwc directly and save
    # this full-output HBM round trip (or fold the layout into the next kernel's in_spec).
    return jnp.transpose(out_nhwc, (0, 3, 1, 2))


if __name__ == "__main__":
    key = jax.random.PRNGKey(0)
    kx, kw_, kb = jax.random.split(key, 3)

    N, Cin, H, W = 2, 4, 16, 16
    Cout, K, pad = 8, 3, 1

    x = jax.random.normal(kx, (N, Cin, H, W), jnp.float32)

    # Deterministic parameter init (PyTorch Conv2d default: U(-b, b), b = 1/sqrt(fan_in)).
    fan_in = Cin * K * K
    bound = 1.0 / (fan_in ** 0.5)
    weight = jax.random.uniform(kw_, (Cout, Cin, K, K), jnp.float32, -bound, bound)
    bias = jax.random.uniform(kb, (Cout,), jnp.float32, -bound, bound)

    out = upsample_conv_layer(x, weight, bias, padding=pad, negative_slope=0.01)
    out = jax.block_until_ready(out)

    # Pure-JAX reference for the exact forward semantics.
    xu = jnp.repeat(jnp.repeat(x, 2, axis=2), 2, axis=3)
    ref = lax.conv_general_dilated(
        xu, weight, window_strides=(1, 1),
        padding=[(pad, pad), (pad, pad)],
        dimension_numbers=("NCHW", "OIHW", "NCHW"),
        precision=lax.Precision.HIGHEST,
    )
    ref = ref + bias[None, :, None, None]
    ref = jnp.where(ref >= 0, ref, 0.01 * ref)

    assert out.shape == (N, Cout, 2 * H, 2 * W), out.shape
    assert jnp.allclose(out, ref, atol=1e-5, rtol=1e-5)
    print("KERNEL_OK")
</pallas_src>

<mosaic_0001>
module attributes {stable_mosaic.version = 11 : i64} {
  func.func @_upsample_conv_kernel(%arg0: i32, %arg1: i32, %arg2: memref<1x18x34x4xf32, #tpu.memory_space<vmem>>, %arg3: memref<3x3x4x8xf32, #tpu.memory_space<vmem>>, %arg4: memref<1x8xf32, #tpu.memory_space<vmem>>, %arg5: memref<1x16x32x8xf32, #tpu.memory_space<vmem>>) attributes {dimension_semantics = [#tpu.dimension_semantics<parallel>, #tpu.dimension_semantics<parallel>], iteration_bounds = array<i64: 2, 2>, scalar_prefetch = 0 : i64, scratch_operands = 0 : i64, tpu.core_type = #tpu.core_type<tc>, window_params = [{transform_indices = @transform_0, window_bounds = array<i64: 1, 18, 34, 4>}, {pipeline_mode = #tpu.pipeline_mode<synchronous>, transform_indices = @transform_1, window_bounds = array<i64: 3, 3, 4, 8>}, {pipeline_mode = #tpu.pipeline_mode<synchronous>, transform_indices = @transform_2, window_bounds = array<i64: 1, 8>}, {transform_indices = @transform_3, window_bounds = array<i64: 1, 16, 32, 8>}]} {
    %c8_i32 = arith.constant 8 : i32
    %0 = arith.muli %arg1, %c8_i32 : i32
    %1 = tpu.assume_multiple %0, 8 : i32
    %cst = arith.constant 0.000000e+00 : f32
    %2 = vector.broadcast %cst : f32 to vector<512x8xf32>
    %c0 = arith.constant 0 : index
    %3 = arith.index_cast %1 : i32 to index
    %c0_0 = arith.constant 0 : index
    %c0_1 = arith.constant 0 : index
    %4 = vector.load %arg2[%c0, %3, %c0_0, %c0_1] : memref<1x18x34x4xf32, #tpu.memory_space<vmem>>, vector<1x10x32x4xf32>
    %5 = vector.shape_cast %4 : vector<1x10x32x4xf32> to vector<10x32x4xf32>
    %6 = vector.shape_cast %5 : vector<10x32x4xf32> to vector<10x1x32x4xf32>
    %7 = vector.broadcast %6 : vector<10x1x32x4xf32> to vector<10x2x32x4xf32>
    %8 = vector.shape_cast %7 : vector<10x2x32x4xf32> to vector<20x32x4xf32>
    %9 = vector.extract_strided_slice %8 {offsets = [1, 0, 0], sizes = [18, 32, 4], strides = [1, 1, 1]} : vector<20x32x4xf32> to vector<18x32x4xf32>
    %10 = vector.shape_cast %9 : vector<18x32x4xf32> to vector<576x4xf32>
    %11 = vector.extract_strided_slice %10 {offsets = [0, 0], sizes = [512, 4], strides = [1, 1]} : vector<576x4xf32> to vector<512x4xf32>
    %c0_2 = arith.constant 0 : index
    %c0_3 = arith.constant 0 : index
    %c0_4 = arith.constant 0 : index
    %c0_5 = arith.constant 0 : index
    %12 = vector.load %arg3[%c0_2, %c0_3, %c0_4, %c0_5] : memref<3x3x4x8xf32, #tpu.memory_space<vmem>>, vector<1x1x4x8xf32>
    %13 = vector.shape_cast %12 : vector<1x1x4x8xf32> to vector<4x8xf32>
    %cst_6 = arith.constant dense<0.000000e+00> : vector<512x8xf32>
    %14 = tpu.matmul %11, %13, %cst_6 {dimension_numbers = #tpu.dot_dimension_numbers<[1], [0], [0], [1], [0, 0, 1, 1], [], []>} : vector<512x4xf32>, vector<4x8xf32>, vector<512x8xf32> -> vector<512x8xf32>
    %15 = arith.addf %2, %14 : vector<512x8xf32>
    %16 = vector.extract_strided_slice %10 {offsets = [32, 0], sizes = [512, 4], strides = [1, 1]} : vector<576x4xf32> to vector<512x4xf32>
    %c1 = arith.constant 1 : index
    %c0_7 = arith.constant 0 : index
    %c0_8 = arith.constant 0 : index
    %c0_9 = arith.constant 0 : index
    %17 = vector.load %arg3[%c1, %c0_7, %c0_8, %c0_9] : memref<3x3x4x8xf32, #tpu.memory_space<vmem>>, vector<1x1x4x8xf32>
    %18 = vector.shape_cast %17 : vector<1x1x4x8xf32> to vector<4x8xf32>
    %cst_10 = arith.constant dense<0.000000e+00> : vector<512x8xf32>
    %19 = tpu.matmul %16, %18, %cst_10 {dimension_numbers = #tpu.dot_dimension_numbers<[1], [0], [0], [1], [0, 0, 1, 1], [], []>} : vector<512x4xf32>, vector<4x8xf32>, vector<512x8xf32> -> vector<512x8xf32>
    %20 = arith.addf %15, %19 : vector<512x8xf32>
    %21 = vector.extract_strided_slice %10 {offsets = [64, 0], sizes = [512, 4], strides = [1, 1]} : vector<576x4xf32> to vector<512x4xf32>
    %c2 = arith.constant 2 : index
    %c0_11 = arith.constant 0 : index
    %c0_12 = arith.constant 0 : index
    %c0_13 = arith.constant 0 : index
    %22 = vector.load %arg3[%c2, %c0_11, %c0_12, %c0_13] : memref<3x3x4x8xf32, #tpu.memory_space<vmem>>, vector<1x1x4x8xf32>
    %23 = vector.shape_cast %22 : vector<1x1x4x8xf32> to vector<4x8xf32>
    %cst_14 = arith.constant dense<0.000000e+00> : vector<512x8xf32>
    %24 = tpu.matmul %21, %23, %cst_14 {dimension_numbers = #tpu.dot_dimension_numbers<[1], [0], [0], [1], [0, 0, 1, 1], [], []>} : vector<512x4xf32>, vector<4x8xf32>, vector<512x8xf32> -> vector<512x8xf32>
    %25 = arith.addf %20, %24 : vector<512x8xf32>
    %c0_15 = arith.constant 0 : index
    %26 = arith.index_cast %1 : i32 to index
    %c1_16 = arith.constant 1 : index
    %c0_17 = arith.constant 0 : index
    %27 = vector.load %arg2[%c0_15, %26, %c1_16, %c0_17] : memref<1x18x34x4xf32, #tpu.memory_space<vmem>>, vector<1x10x32x4xf32>
    %28 = vector.shape_cast %27 : vector<1x10x32x4xf32> to vector<10x32x4xf32>
    %29 = vector.shape_cast %28 : vector<10x32x4xf32> to vector<10x1x32x4xf32>
    %30 = vector.broadcast %29 : vector<10x1x32x4xf32> to vector<10x2x32x4xf32>
    %31 = vector.shape_cast %30 : vector<10x2x32x4xf32> to vector<20x32x4xf32>
    %32 = vector.extract_strided_slice %31 {offsets = [1, 0, 0], sizes = [18, 32, 4], strides = [1, 1, 1]} : vector<20x32x4xf32> to vector<18x32x4xf32>
    %33 = vector.shape_cast %32 : vector<18x32x4xf32> to vector<576x4xf32>
    %34 = vector.extract_strided_slice %33 {offsets = [0, 0], sizes = [512, 4], strides = [1, 1]} : vector<576x4xf32> to vector<512x4xf32>
    %c0_18 = arith.constant 0 : index
    %c1_19 = arith.constant 1 : index
    %c0_20 = arith.constant 0 : index
    %c0_21 = arith.constant 0 : index
    %35 = vector.load %arg3[%c0_18, %c1_19, %c0_20, %c0_21] : memref<3x3x4x8xf32, #tpu.memory_space<vmem>>, vector<1x1x4x8xf32>
    %36 = vector.shape_cast %35 : vector<1x1x4x8xf32> to vector<4x8xf32>
    %cst_22 = arith.constant dense<0.000000e+00> : vector<512x8xf32>
    %37 = tpu.matmul %34, %36, %cst_22 {dimension_numbers = #tpu.dot_dimension_numbers<[1], [0], [0], [1], [0, 0, 1, 1], [], []>} : vector<512x4xf32>, vector<4x8xf32>, vector<512x8xf32> -> vector<512x8xf32>
    %38 = arith.addf %25, %37 : vector<512x8xf32>
    %39 = vector.extract_strided_slice %33 {offsets = [32, 0], sizes = [512, 4], strides = [1, 1]} : vector<576x4xf32> to vector<512x4xf32>
    %c1_23 = arith.constant 1 : index
    %c1_24 = arith.constant 1 : index
    %c0_25 = arith.constant 0 : index
    %c0_26 = arith.constant 0 : index
    %40 = vector.load %arg3[%c1_23, %c1_24, %c0_25, %c0_26] : memref<3x3x4x8xf32, #tpu.memory_space<vmem>>, vector<1x1x4x8xf32>
    %41 = vector.shape_cast %40 : vector<1x1x4x8xf32> to vector<4x8xf32>
    %cst_27 = arith.constant dense<0.000000e+00> : vector<512x8xf32>
    %42 = tpu.matmul %39, %41, %cst_27 {dimension_numbers = #tpu.dot_dimension_numbers<[1], [0], [0], [1], [0, 0, 1, 1], [], []>} : vector<512x4xf32>, vector<4x8xf32>, vector<512x8xf32> -> vector<512x8xf32>
    %43 = arith.addf %38, %42 : vector<512x8xf32>
    %44 = vector.extract_strided_slice %33 {offsets = [64, 0], sizes = [512, 4], strides = [1, 1]} : vector<576x4xf32> to vector<512x4xf32>
    %c2_28 = arith.constant 2 : index
    %c1_29 = arith.constant 1 : index
    %c0_30 = arith.constant 0 : index
    %c0_31 = arith.constant 0 : index
    %45 = vector.load %arg3[%c2_28, %c1_29, %c0_30, %c0_31] : memref<3x3x4x8xf32, #tpu.memory_space<vmem>>, vector<1x1x4x8xf32>
    %46 = vector.shape_cast %45 : vector<1x1x4x8xf32> to vector<4x8xf32>
    %cst_32 = arith.constant dense<0.000000e+00> : vector<512x8xf32>
    %47 = tpu.matmul %44, %46, %cst_32 {dimension_numbers = #tpu.dot_dimension_numbers<[1], [0], [0], [1], [0, 0, 1, 1], [], []>} : vector<512x4xf32>, vector<4x8xf32>, vector<512x8xf32> -> vector<512x8xf32>
    %48 = arith.addf %43, %47 : vector<512x8xf32>
    %c0_33 = arith.constant 0 : index
    %49 = arith.index_cast %1 : i32 to index
    %c2_34 = arith.constant 2 : index
    %c0_35 = arith.constant 0 : index
    %50 = vector.load %arg2[%c0_33, %49, %c2_34, %c0_35] : memref<1x18x34x4xf32, #tpu.memory_space<vmem>>, vector<1x10x32x4xf32>
    %51 = vector.shape_cast %50 : vector<1x10x32x4xf32> to vector<10x32x4xf32>
    %52 = vector.shape_cast %51 : vector<10x32x4xf32> to vector<10x1x32x4xf32>
    %53 = vector.broadcast %52 : vector<10x1x32x4xf32> to vector<10x2x32x4xf32>
    %54 = vector.shape_cast %53 : vector<10x2x32x4xf32> to vector<20x32x4xf32>
    %55 = vector.extract_strided_slice %54 {offsets = [1, 0, 0], sizes = [18, 32, 4], strides = [1, 1, 1]} : vector<20x32x4xf32> to vector<18x32x4xf32>
    %56 = vector.shape_cast %55 : vector<18x32x4xf32> to vector<576x4xf32>
    %57 = vector.extract_strided_slice %56 {offsets = [0, 0], sizes = [512, 4], strides = [1, 1]} : vector<576x4xf32> to vector<512x4xf32>
    %c0_36 = arith.constant 0 : index
    %c2_37 = arith.constant 2 : index
    %c0_38 = arith.constant 0 : index
    %c0_39 = arith.constant 0 : index
    %58 = vector.load %arg3[%c0_36, %c2_37, %c0_38, %c0_39] : memref<3x3x4x8xf32, #tpu.memory_space<vmem>>, vector<1x1x4x8xf32>
    %59 = vector.shape_cast %58 : vector<1x1x4x8xf32> to vector<4x8xf32>
    %cst_40 = arith.constant dense<0.000000e+00> : vector<512x8xf32>
    %60 = tpu.matmul %57, %59, %cst_40 {dimension_numbers = #tpu.dot_dimension_numbers<[1], [0], [0], [1], [0, 0, 1, 1], [], []>} : vector<512x4xf32>, vector<4x8xf32>, vector<512x8xf32> -> vector<512x8xf32>
    %61 = arith.addf %48, %60 : vector<512x8xf32>
    %62 = vector.extract_strided_slice %56 {offsets = [32, 0], sizes = [512, 4], strides = [1, 1]} : vector<576x4xf32> to vector<512x4xf32>
    %c1_41 = arith.constant 1 : index
    %c2_42 = arith.constant 2 : index
    %c0_43 = arith.constant 0 : index
    %c0_44 = arith.constant 0 : index
    %63 = vector.load %arg3[%c1_41, %c2_42, %c0_43, %c0_44] : memref<3x3x4x8xf32, #tpu.memory_space<vmem>>, vector<1x1x4x8xf32>
    %64 = vector.shape_cast %63 : vector<1x1x4x8xf32> to vector<4x8xf32>
    %cst_45 = arith.constant dense<0.000000e+00> : vector<512x8xf32>
    %65 = tpu.matmul %62, %64, %cst_45 {dimension_numbers = #tpu.dot_dimension_numbers<[1], [0], [0], [1], [0, 0, 1, 1], [], []>} : vector<512x4xf32>, vector<4x8xf32>, vector<512x8xf32> -> vector<512x8xf32>
    %66 = arith.addf %61, %65 : vector<512x8xf32>
    %67 = vector.extract_strided_slice %56 {offsets = [64, 0], sizes = [512, 4], strides = [1, 1]} : vector<576x4xf32> to vector<512x4xf32>
    %c2_46 = arith.constant 2 : index
    %c2_47 = arith.constant 2 : index
    %c0_48 = arith.constant 0 : index
    %c0_49 = arith.constant 0 : index
    %68 = vector.load %arg3[%c2_46, %c2_47, %c0_48, %c0_49] : memref<3x3x4x8xf32, #tpu.memory_space<vmem>>, vector<1x1x4x8xf32>
    %69 = vector.shape_cast %68 : vector<1x1x4x8xf32> to vector<4x8xf32>
    %cst_50 = arith.constant dense<0.000000e+00> : vector<512x8xf32>
    %70 = tpu.matmul %67, %69, %cst_50 {dimension_numbers = #tpu.dot_dimension_numbers<[1], [0], [0], [1], [0, 0, 1, 1], [], []>} : vector<512x4xf32>, vector<4x8xf32>, vector<512x8xf32> -> vector<512x8xf32>
    %71 = arith.addf %66, %70 : vector<512x8xf32>
    %c0_51 = arith.constant 0 : index
    %c0_52 = arith.constant 0 : index
    %72 = vector.load %arg4[%c0_51, %c0_52] : memref<1x8xf32, #tpu.memory_space<vmem>>, vector<1x8xf32>
    %73 = vector.broadcast %72 : vector<1x8xf32> to vector<512x8xf32>
    %74 = arith.addf %71, %73 : vector<512x8xf32>
    %cst_53 = arith.constant 0.000000e+00 : f32
    %75 = vector.broadcast %cst_53 : f32 to vector<512x8xf32>
    %76 = arith.cmpf oge, %74, %75 : vector<512x8xf32>
    %cst_54 = arith.constant 0.00999999977 : f32
    %77 = vector.broadcast %cst_54 : f32 to vector<512x8xf32>
    %78 = arith.mulf %77, %74 : vector<512x8xf32>
    %79 = arith.select %76, %74, %78 : vector<512x8xi1>, vector<512x8xf32>
    %80 = vector.shape_cast %79 : vector<512x8xf32> to vector<1x16x32x8xf32>
    %c0_55 = arith.constant 0 : index
    %c0_56 = arith.constant 0 : index
    %c0_57 = arith.constant 0 : index
    %c0_58 = arith.constant 0 : index
    %81 = vector.load %arg5[%c0_55, %c0_56, %c0_57, %c0_58] : memref<1x16x32x8xf32, #tpu.memory_space<vmem>>, vector<1x16x32x8xf32>
    tpu.vector_store %arg5[%c0_55, %c0_56, %c0_57, %c0_58], %80 {strides = array<i32>} : memref<1x16x32x8xf32, #tpu.memory_space<vmem>>, vector<1x16x32x8xf32>,
    return
  }
  func.func @transform_0(%arg0: i32, %arg1: i32) -> (i32, i32, i32, i32) {
    %c0_i32 = arith.constant 0 : i32
    %c0_i32_0 = arith.constant 0 : i32
    %c0_i32_1 = arith.constant 0 : i32
    %c0_i32_2 = arith.constant 0 : i32
    return %arg0, %c0_i32, %c0_i32_0, %c0_i32_1 : i32, i32, i32, i32
  }
  func.func @transform_1(%arg0: i32, %arg1: i32) -> (i32, i32, i32, i32) {
    %c0_i32 = arith.constant 0 : i32
    %c0_i32_0 = arith.constant 0 : i32
    %c0_i32_1 = arith.constant 0 : i32
    %c0_i32_2 = arith.constant 0 : i32
    %c0_i32_3 = arith.constant 0 : i32
    return %c0_i32, %c0_i32_0, %c0_i32_1, %c0_i32_2 : i32, i32, i32, i32
  }
  func.func @transform_2(%arg0: i32, %arg1: i32) -> (i32, i32) {
    %c0_i32 = arith.constant 0 : i32
    %c0_i32_0 = arith.constant 0 : i32
    %c0_i32_1 = arith.constant 0 : i32
    return %c0_i32, %c0_i32_0 : i32, i32
  }
  func.func @transform_3(%arg0: i32, %arg1: i32) -> (i32, i32, i32, i32) {
    %c0_i32 = arith.constant 0 : i32
    %c0_i32_0 = arith.constant 0 : i32
    %c0_i32_1 = arith.constant 0 : i32
    return %arg0, %arg1, %c0_i32, %c0_i32_0 : i32, i32, i32, i32
  }
}

</mosaic_0001>

<llo_original>
// kernel: tpu_custom_call.1
$region0: #{tpu_custom_call.1}
  #allocation0 [shape = 'u32[]', space=smem, size = 0x4, offset = 0x4, fixed_abs, tag = 'smem constant byte address 0x4 - core index']
  #allocation1 [shape = 'u32[144,128]{1,0:T(1,128)}', space=vmem, size = 0x12000, scoped, tag = 'internal scratch']
  %s0 = inlined_call_operand.vmem [shape: f32[2,18,34,4], index: 0, kind: input, shape index: {}]
  %s1 = inlined_call_operand.vmem [shape: f32[3,3,4,8], index: 1, kind: input, shape index: {}]
  %s2 = inlined_call_operand.vmem [shape: f32[1,8], index: 2, kind: input, shape index: {}]
  %s3 = inlined_call_operand.vmem [shape: f32[2,32,32,8], index: 3, kind: output, shape index: {}]
  %s4 = sld [smem:[#allocation0]]
  $region45: #{tpu_custom_call.1} parent=0
    _
  %s6 = ssub.s32 1, %s4
  %s7 = scalar_select 0, %s6, %s4
  loop: start=0, step=1, limit=6
  $region2: #{tpu_custom_call.1} parent=0 // loop_pre_header
    _
  $region3: #{tpu_custom_call.1} parent=0 // loop_header
    %s9 = sphi 0, %s13
    %p10 = scmp.ge.s32.totalorder %s9, 6
    %s16 = sphi 0, %s28
    %s17 = sphi 0, %s24
    %s18 = sphi 0, %s16
    %s19 = sphi 0, %s17
    %s20 = sphi 0, %s18
    %s21 = sphi 0, %s19
    %s31 = sphi 0, %s33
    %s34 = sphi 0, %s31
    %s35 = sphi 0, %s34
    %s51 = sphi 0, %s35
    %s55 = sphi 0, %s55
    %s57 = sphi 0, %s55
    %s58 = sphi 0, %s57
    %s72 = sphi 0, %s58
    %s76 = sphi 0, %s76
    %s78 = sphi 0, %s76
    %s79 = sphi 0, %s78
    %s93 = sphi 0, %s79
    %s101 = sphi 0, %s103
    %s104 = sphi 0, %s101
    %s105 = sphi 0, %s104
    %s121 = sphi 0, %s105
  $region4: #{tpu_custom_call.1} parent=0 // loop_header_branch
    %12 = sbr.rel (%p10) target = $region8
  $region5: #{tpu_custom_call.1} parent=0 // loop_body
    %s14 = ssub.s32 %s9, 1
    %s15 = ssub.s32 %s9, 2
    %s22 = sadd.s32 1, %s17
    %p23 = scmp.ge.s32.totalorder %s22, 2
    %s24 = scalar_select %p23, 0, %s22
    %s25 = sadd.s32 1, %s16
    %s26 = scalar_select %p23, %s25, %s16
    %p27 = scmp.ge.s32.totalorder %s26, 2
    %s28 = scalar_select %p27, 0, %s26
    %s29 = ssub.s32 %s16, %s28
    %p30 = scmp.eq.s32.totalorder %s29, 0
    %s32 = sadd.s32 %s31, 1
    %s33 = scalar_select %p30, %s31, %s32
    %p36 = pneg %p30
    %p37 = scmp.eq.s32.totalorder %s9, 3
    %p38 = por %p36, %p37
    %p39 = scmp.ne.s32.totalorder %s31, %s34
    %p40 = scmp.eq.s32.totalorder %s9, 0
    %p41 = por %p39, %p40
    %p42 = scmp.ne.s32.totalorder %s31, %s34
    %p43 = scmp.eq.s32.totalorder %s14, 3
    %p44 = por %p42, %p43
    %p45 = scmp.ne.s32.totalorder %s34, %s35
    %p46 = scmp.eq.s32.totalorder %s14, 0
    %p47 = por %p45, %p46
    %p48 = scmp.ne.s32.totalorder %s34, %s35
    %p49 = scmp.eq.s32.totalorder %s15, 3
    %p50 = por %p48, %p49
    %p52 = scmp.ne.s32.totalorder %s35, %s51
    %p53 = scmp.eq.s32.totalorder %s15, 0
    %p54 = por %p52, %p53
    %s56 = sadd.s32 %s55, 1
    %p59 = scmp.eq.s32.totalorder %s9, 3
    %p60 = scmp.ne.s32.totalorder %s55, %s57
    %p61 = scmp.eq.s32.totalorder %s9, 0
    %p62 = por %p60, %p61
    %p63 = scmp.ne.s32.totalorder %s55, %s57
    %p64 = scmp.eq.s32.totalorder %s14, 3
    %p65 = por %p63, %p64
    %p66 = scmp.ne.s32.totalorder %s57, %s58
    %p67 = scmp.eq.s32.totalorder %s14, 0
    %p68 = por %p66, %p67
    %p69 = scmp.ne.s32.totalorder %s57, %s58
    %p70 = scmp.eq.s32.totalorder %s15, 3
    %p71 = por %p69, %p70
    %p73 = scmp.ne.s32.totalorder %s58, %s72
    %p74 = scmp.eq.s32.totalorder %s15, 0
    %p75 = por %p73, %p74
    %s77 = sadd.s32 %s76, 1
    %p80 = scmp.eq.s32.totalorder %s9, 3
    %p81 = scmp.ne.s32.totalorder %s76, %s78
    %p82 = scmp.eq.s32.totalorder %s9, 0
    %p83 = por %p81, %p82
    %p84 = scmp.ne.s32.totalorder %s76, %s78
    %p85 = scmp.eq.s32.totalorder %s14, 3
    %p86 = por %p84, %p85
    %p87 = scmp.ne.s32.totalorder %s78, %s79
    %p88 = scmp.eq.s32.totalorder %s14, 0
    %p89 = por %p87, %p88
    %p90 = scmp.ne.s32.totalorder %s78, %s79
    %p91 = scmp.eq.s32.totalorder %s15, 3
    %p92 = por %p90, %p91
    %p94 = scmp.ne.s32.totalorder %s79, %s93
    %p95 = scmp.eq.s32.totalorder %s15, 0
    %p96 = por %p94, %p95
    %s97 = ssub.s32 %s16, %s28
    %s98 = ssub.s32 %s17, %s24
    %s99 = sor.u32 %s97, %s98
    %p100 = scmp.eq.s32.totalorder %s99, 0
    %s102 = sadd.s32 %s101, 1
    %s103 = scalar_select %p100, %s101, %s102
    %p106 = pneg %p100
    %p107 = scmp.eq.s32.totalorder %s9, 3
    %p108 = por %p106, %p107
    %p109 = scmp.ne.s32.totalorder %s101, %s104
    %p110 = scmp.eq.s32.totalorder %s9, 0
    %p111 = por %p109, %p110
    %p112 = scmp.ne.s32.totalorder %s101, %s104
    %p113 = scmp.eq.s32.totalorder %s14, 3
    %p114 = por %p112, %p113
    %p115 = scmp.ne.s32.totalorder %s104, %s105
    %p116 = scmp.eq.s32.totalorder %s14, 0
    %p117 = por %p115, %p116
    %p118 = scmp.ne.s32.totalorder %s104, %s105
    %p119 = scmp.eq.s32.totalorder %s15, 3
    %p120 = por %p118, %p119
    %p122 = scmp.ne.s32.totalorder %s105, %s121
    %p123 = scmp.eq.s32.totalorder %s15, 0
    %p124 = por %p122, %p123
    %p125 = scmp.le.s32.totalorder 1, %s9
    %p126 = scmp.lt.s32.totalorder %s9, 5
    %p127 = pnand %p125, %p126
    %p128 = pneg %p127
    // Predicated region
    $region9: #{tpu_custom_call.1} parent=5 // pred_check
      _
    $region10: #{tpu_custom_call.1} parent=5 // pred_check_branch
      %130 = sbr.rel (%p127) target = $region12
    $region11: #{tpu_custom_call.1} parent=5 // pred_region
      %s131 = ssub.s32 %s9, 1
      // Predicated region
      $region13: #{tpu_custom_call.1} parent=11 // pred_check
        %p132 = pneg %p68
      $region14: #{tpu_custom_call.1} parent=11 // pred_check_branch
        %134 = sbr.rel (%p132) target = $region16
      $region15: #{tpu_custom_call.1} parent=11 // pred_region
        _
      $region16: #{tpu_custom_call.1} parent=11 // pred_fallthru
        _
      // Predicated region
      $region17: #{tpu_custom_call.1} parent=11 // pred_check
        %p135 = pneg %p89
      $region18: #{tpu_custom_call.1} parent=11 // pred_check_branch
        %137 = sbr.rel (%p135) target = $region20
      $region19: #{tpu_custom_call.1} parent=11 // pred_region
        _
      $region20: #{tpu_custom_call.1} parent=11 // pred_fallthru
        _
    $region12: #{tpu_custom_call.1} parent=5 // pred_fallthru
      _
    %p138 = scmp.lt.s32.totalorder %s9, 4
    // Predicated region
    $region21: #{tpu_custom_call.1} parent=5 // pred_check
      %p139 = pneg %p138
    $region22: #{tpu_custom_call.1} parent=5 // pred_check_branch
      %141 = sbr.rel (%p139) target = $region24
    $region23: #{tpu_custom_call.1} parent=5 // pred_region
      // Predicated region
      $region25: #{tpu_custom_call.1} parent=23 // pred_check
        %p142 = pneg %p41
      $region26: #{tpu_custom_call.1} parent=23 // pred_check_branch
        %144 = sbr.rel (%p142) target = $region28
      $region27: #{tpu_custom_call.1} parent=23 // pred_region
        %p145 = scmp.lt.s32.totalorder %s16, 1
        %s146 = scalar_select %p145, %s16, 1
        %s147 = smul.addr %s146, 90
        %s148 = smul.addr %s147, 8
        %s149 = scalar_lea.vmem %s0, %s148
      $region28: #{tpu_custom_call.1} parent=23 // pred_fallthru
        _
    $region24: #{tpu_custom_call.1} parent=5 // pred_fallthru
      _
    %p150 = scmp.le.s32.totalorder 1, %s9
    %p151 = scmp.lt.s32.totalorder %s9, 5
    %p152 = pnand %p150, %p151
    %p153 = pneg %p152
    // Predicated region
    $region29: #{tpu_custom_call.1} parent=5 // pred_check
      _
    $region30: #{tpu_custom_call.1} parent=5 // pred_check_branch
      %155 = sbr.rel (%p152) target = $region32
    $region31: #{tpu_custom_call.1} parent=5 // pred_region
      %s156 = ssub.s32 %s9, 1
      %p157 = scmp.lt.s32.totalorder %s18, 1
      %s158 = scalar_select %p157, %s18, 1
      %s159 = smul.addr %s158, 90
      %s160 = smul.addr %s159, 8
      %s161 = scalar_lea.vmem %s0, %s160
      %p162 = pneg %p47
      %p163 = pneg %p44
      %p164 = pneg %p68
      %p165 = pneg %p65
      %p166 = pneg %p89
      %p167 = pneg %p86
      %p168 = pneg %p117
      %p169 = pneg %p114
      %s170 = smul.u32 16, %s19
      %p171 = scmp.lt.s32.totalorder %s18, 1
      %s172 = scalar_select %p171, %s18, 1
      %p173 = scmp.lt.s32.totalorder %s170, 31
      %s174 = scalar_select %p173, %s170, 31
      %s175 = smul.addr %s174, 4
      %s176 = smul.addr %s172, 128
      %s177 = sadd.s32 %s175, %s176
      %s178 = smul.addr %s177, 8
      %s179 = scalar_lea.vmem %s3, %s178
      %p180 = scmp.lt.s32.totalorder %s18, 1
      %s181 = scalar_select %p180, %s18, 1
      %s182 = smul.addr %s181, 90
      %s183 = smul.addr %s182, 8
      %s184 = scalar_lea.vmem %s0, %s183
      %s185 = smul.u32 16, %s19
      %p186 = scmp.lt.s32.totalorder %s18, 1
      %s187 = scalar_select %p186, %s18, 1
      %p188 = scmp.lt.s32.totalorder %s185, 31
      %s189 = scalar_select %p188, %s185, 31
      %s190 = smul.addr %s189, 4
      %s191 = smul.addr %s187, 128
      %s192 = sadd.s32 %s190, %s191
      %s193 = smul.addr %s192, 8
      %s194 = scalar_lea.vmem %s3, %s193
      %s195 = smul.u32 16, %s19
      %s196 = smul.u32 %s19, 8
      %s197 = smul.u32 %s196, 40
      %s198 = scalar_lea.vmem %s184, %s197
      %v199 = vld [vmem:[%s198] sm:$0xff]
      %v200 = vld [vmem:[%s198 + $0x8] sm:$0xff]
      %v201 = vld [vmem:[%s198 + $0x10] sm:$0xff]
      %v202 = vld [vmem:[%s198 + $0x18] sm:$0xff]
      %v203 = vld [vmem:[%s198 + $0x28] sm:$0xff]
      %v204 = vld [vmem:[%s198 + $0x30] sm:$0xff]
      %v205 = vld [vmem:[%s198 + $0x38] sm:$0xff]
      %v206 = vld [vmem:[%s198 + $0x40] sm:$0xff]
      %v207 = vld [vmem:[%s198 + $0x50] sm:$0xff]
      %v208 = vld [vmem:[%s198 + $0x58] sm:$0xff]
      %v209 = vld [vmem:[%s198 + $0x60] sm:$0xff]
      %v210 = vld [vmem:[%s198 + $0x68] sm:$0xff]
      %v211 = vld [vmem:[%s198 + $0x78] sm:$0xff]
      %v212 = vld [vmem:[%s198 + $0x80] sm:$0xff]
      %v213 = vld [vmem:[%s198 + $0x88] sm:$0xff]
      %v214 = vld [vmem:[%s198 + $0x90] sm:$0xff]
      %v215 = vld [vmem:[%s198 + $0xa0] sm:$0xff]
      %v216 = vld [vmem:[%s198 + $0xa8] sm:$0xff]
      %v217 = vld [vmem:[%s198 + $0xb0] sm:$0xff]
      %v218 = vld [vmem:[%s198 + $0xb8] sm:$0xff]
      %v219 = vld [vmem:[%s198 + $0xc8] sm:$0xff]
      %v220 = vld [vmem:[%s198 + $0xd0] sm:$0xff]
      %v221 = vld [vmem:[%s198 + $0xd8] sm:$0xff]
      %v222 = vld [vmem:[%s198 + $0xe0] sm:$0xff]
      %v223 = vld [vmem:[%s198 + $0xf0] sm:$0xff]
      %v224 = vld [vmem:[%s198 + $0xf8] sm:$0xff]
      %v225 = vld [vmem:[%s198 + $0x100] sm:$0xff]
      %v226 = vld [vmem:[%s198 + $0x108] sm:$0xff]
      %v227 = vld [vmem:[%s198 + $0x118] sm:$0xff]
      %v228 = vld [vmem:[%s198 + $0x120] sm:$0xff]
      %v229 = vld [vmem:[%s198 + $0x128] sm:$0xff]
      %v230 = vld [vmem:[%s198 + $0x130] sm:$0xff]
      %v231 = vld [vmem:[%s198 + $0x140] sm:$0xff]
      %v232 = vld [vmem:[%s198 + $0x148] sm:$0xff]
      %v233 = vld [vmem:[%s198 + $0x150] sm:$0xff]
      %v234 = vld [vmem:[%s198 + $0x158] sm:$0xff]
      %v235 = vld [vmem:[%s198 + $0x168] sm:$0xff]
      %v236 = vld [vmem:[%s198 + $0x170] sm:$0xff]
      %v237 = vld [vmem:[%s198 + $0x178] sm:$0xff]
      %v238 = vld [vmem:[%s198 + $0x180] sm:$0xff]
      %v239 = vld [vmem:[%s1] sm:$0xf]
      %s240 = scalar_lea.vmem %s1, 12
      %v241 = vld [vmem:[%s240] sm:$0xf]
      %vm242 = vcmask 31744
      %v244 = vsel %vm242, %v203, 0
      %v247 = vsel %vm242, %v204, 0
      %v250 = vsel %vm242, %v205, 0
      %v253 = vsel %vm242, %v206, 0
      %v256 = vsel %vm242, %v207, 0
      %v259 = vsel %vm242, %v208, 0
      %v262 = vsel %vm242, %v209, 0
      %v265 = vsel %vm242, %v210, 0
      %v268 = vsel %vm242, %v211, 0
      %v271 = vsel %vm242, %v212, 0
      %v274 = vsel %vm242, %v213, 0
      %v277 = vsel %vm242, %v214, 0
      %v280 = vsel %vm242, %v215, 0
      %v283 = vsel %vm242, %v216, 0
      %v286 = vsel %vm242, %v217, 0
      %v289 = vsel %vm242, %v218, 0
      %v292 = vsel %vm242, %v219, 0
      %v295 = vsel %vm242, %v220, 0
      %v298 = vsel %vm242, %v221, 0
      %v301 = vsel %vm242, %v222, 0
      %v304 = vsel %vm242, %v223, 0
      %v307 = vsel %vm242, %v224, 0
      %v310 = vsel %vm242, %v225, 0
      %v313 = vsel %vm242, %v226, 0
      %v316 = vsel %vm242, %v227, 0
      %v319 = vsel %vm242, %v228, 0
      %v322 = vsel %vm242, %v229, 0
      %v325 = vsel %vm242, %v230, 0
      %v328 = vsel %vm242, %v231, 0
      %v331 = vsel %vm242, %v232, 0
      %v334 = vsel %vm242, %v233, 0
      %v337 = vsel %vm242, %v234, 0
      %vm339 = vcmask 1043456
      %v341 = vsel %vm339, %v241, 0
      %343 = vmatprep.subr.mxu0 0.0
      %344 = vmatpush1.msra.mxu0 %v341
      %345 = vmatprep.subr.mxu0 0.0
      %346 = vmatpush1.msra.mxu0 0.0
      %347 = vmatprep.subr.mxu0 0.0
      %348 = vmatpush1.msra.mxu0 0.0
      %349 = vmatprep.subr.mxu0 0.0
      %350 = vmatpush1.msra.mxu0 0.0
      %351 = vmatprep.subr.mxu0 0.0
      %352 = vmatpush1.msra.mxu0 0.0
      %353 = vmatprep.subr.mxu0 0.0
      %354 = vmatpush1.msra.mxu0 0.0
      %355 = vmatprep.subr.mxu0 0.0
      %356 = vmatpush1.msra.mxu0 0.0
      %357 = vmatprep.subr.mxu0 0.0
      %358 = vmatpush1.msra.mxu0 0.0
      %359 = vmatprep.subr.mxu0 0.0
      %360 = vmatpush1.msra.mxu0 0.0
      %361 = vmatprep.subr.mxu0 0.0
      %362 = vmatpush1.msra.mxu0 0.0
      %363 = vmatprep.subr.mxu0 0.0
      %364 = vmatpush1.msra.mxu0 0.0
      %365 = vmatprep.subr.mxu0 0.0
      %366 = vmatpush1.msra.mxu0 0.0
      %367 = vmatprep.subr.mxu0 0.0
      %368 = vmatpush1.msra.mxu0 0.0
      %369 = vmatprep.subr.mxu0 0.0
      %370 = vmatpush1.msra.mxu0 0.0
      %371 = vmatprep.subr.mxu0 0.0
      %372 = vmatpush1.msra.mxu0 0.0
      %373 = vmatprep.subr.mxu0 0.0
      %374 = vmatpush1.msra.mxu0 0.0
      %375 = vmatprep.subr.mxu0 0.0
      %376 = vmatpush1.msra.mxu0 0.0
      %377 = vmatprep.subr.mxu0 0.0
      %378 = vmatpush1.msra.mxu0 0.0
      %379 = vmatprep.subr.mxu0 0.0
      %380 = vmatpush1.msra.mxu0 0.0
      %381 = vmatprep.subr.mxu0 0.0
      %382 = vmatpush1.msra.mxu0 0.0
      %383 = vmatprep.subr.mxu0 0.0
      %384 = vmatpush1.msra.mxu0 0.0
      %385 = vmatprep.subr.mxu0 0.0
      %386 = vmatpush1.msra.mxu0 0.0
      %387 = vmatprep.subr.mxu0 0.0
      %388 = vmatpush1.msra.mxu0 0.0
      %389 = vmatprep.subr.mxu0 0.0
      %390 = vmatpush1.msra.mxu0 0.0
      %391 = vmatprep.subr.mxu0 0.0
      %392 = vmatpush1.msra.mxu0 0.0
      %393 = vmatprep.subr.mxu0 0.0
      %394 = vmatpush1.msra.mxu0 0.0
      %395 = vmatprep.subr.mxu0 0.0
      %396 = vmatpush1.msra.mxu0 0.0
      %397 = vmatprep.subr.mxu0 0.0
      %398 = vmatpush1.msra.mxu0 0.0
      %399 = vmatprep.subr.mxu0 0.0
      %400 = vmatpush1.msra.mxu0 0.0
      %401 = vmatprep.subr.mxu0 0.0
      %402 = vmatpush1.msra.mxu0 0.0
      %403 = vmatprep.subr.mxu0 0.0
      %404 = vmatpush1.msra.mxu0 0.0
      %405 = vmatprep.subr.mxu0 0.0
      %406 = vmatpush1.msra.mxu0 0.0
      %407 = vmatprep.mubr.f32.mxu0 0.0
      %408 = vmatmul.mubr.f32.gmra.mrb[0].mxu0 %v244
      %v409 = vpop.f32.mrb[0].mxu0
      %v410 = vadd.f32 0.0, %v409
      %v411 = vpop.f32.mrb[0].mxu0
      %412 = vmatprep.mubr.f32.mxu0 0.0
      %413 = vmatmul.mubr.f32.gmra.mrb[0].mxu0 %v247
      %v414 = vpop.f32.mrb[0].mxu0
      %v415 = vadd.f32 0.0, %v414
      %v416 = vpop.f32.mrb[0].mxu0
      %417 = vmatprep.mubr.f32.mxu0 0.0
      %418 = vmatmul.mubr.f32.gmra.mrb[0].mxu0 %v250
      %v419 = vpop.f32.mrb[0].mxu0
      %v420 = vadd.f32 0.0, %v419
      %v421 = vpop.f32.mrb[0].mxu0
      %422 = vmatprep.mubr.f32.mxu0 0.0
      %423 = vmatmul.mubr.f32.gmra.mrb[0].mxu0 %v253
      %v424 = vpop.f32.mrb[0].mxu0
      %v425 = vadd.f32 0.0, %v424
      %v426 = vpop.f32.mrb[0].mxu0
      %427 = vmatprep.mubr.f32.mxu0 0.0
      %428 = vmatmul.mubr.f32.gmra.mrb[0].mxu0 %v244
      %v429 = vpop.f32.mrb[0].mxu0
      %v430 = vadd.f32 0.0, %v429
      %v431 = vpop.f32.mrb[0].mxu0
      %432 = vmatprep.mubr.f32.mxu0 0.0
      %433 = vmatmul.mubr.f32.gmra.mrb[0].mxu0 %v247
      %v434 = vpop.f32.mrb[0].mxu0
      %v435 = vadd.f32 0.0, %v434
      %v436 = vpop.f32.mrb[0].mxu0
      %437 = vmatprep.mubr.f32.mxu0 0.0
      %438 = vmatmul.mubr.f32.gmra.mrb[0].mxu0 %v250
      %v439 = vpop.f32.mrb[0].mxu0
      %v440 = vadd.f32 0.0, %v439
      %v441 = vpop.f32.mrb[0].mxu0
      %442 = vmatprep.mubr.f32.mxu0 0.0
      %443 = vmatmul.mubr.f32.gmra.mrb[0].mxu0 %v253
      %v444 = vpop.f32.mrb[0].mxu0
      %v445 = vadd.f32 0.0, %v444
      %v446 = vpop.f32.mrb[0].mxu0
      %447 = vmatprep.mubr.f32.mxu0 0.0
      %448 = vmatmul.mubr.f32.gmra.mrb[0].mxu0 %v256
      %v449 = vpop.f32.mrb[0].mxu0
      %v450 = vadd.f32 0.0, %v449
      %v451 = vpop.f32.mrb[0].mxu0
      %452 = vmatprep.mubr.f32.mxu0 0.0
      %453 = vmatmul.mubr.f32.gmra.mrb[0].mxu0 %v259
      %v454 = vpop.f32.mrb[0].mxu0
      %v455 = vadd.f32 0.0, %v454
      %v456 = vpop.f32.mrb[0].mxu0
      %457 = vmatprep.mubr.f32.mxu0 0.0
      %458 = vmatmul.mubr.f32.gmra.mrb[0].mxu0 %v262
      %v459 = vpop.f32.mrb[0].mxu0
      %v460 = vadd.f32 0.0, %v459
      %v461 = vpop.f32.mrb[0].mxu0
      %462 = vmatprep.mubr.f32.mxu0 0.0
      %463 = vmatmul.mubr.f32.gmra.mrb[0].mxu0 %v265
      %v464 = vpop.f32.mrb[0].mxu0
      %v465 = vadd.f32 0.0, %v464
      %v466 = vpop.f32.mrb[0].mxu0
      %467 = vmatprep.mubr.f32.mxu0 0.0
      %468 = vmatmul.mubr.f32.gmra.mrb[0].mxu0 %v256
      %v469 = vpop.f32.mrb[0].mxu0
      %v470 = vadd.f32 0.0, %v469
      %v471 = vpop.f32.mrb[0].mxu0
      %472 = vmatprep.mubr.f32.mxu0 0.0
      %473 = vmatmul.mubr.f32.gmra.mrb[0].mxu0 %v259
      %v474 = vpop.f32.mrb[0].mxu0
      %v475 = vadd.f32 0.0, %v474
      %v476 = vpop.f32.mrb[0].mxu0
      %477 = vmatprep.mubr.f32.mxu0 0.0
      %478 = vmatmul.mubr.f32.gmra.mrb[0].mxu0 %v262
      %v479 = vpop.f32.mrb[0].mxu0
      %v480 = vadd.f32 0.0, %v479
      %v481 = vpop.f32.mrb[0].mxu0
      %482 = vmatprep.mubr.f32.mxu0 0.0
      %483 = vmatmul.mubr.f32.gmra.mrb[0].mxu0 %v265
      %v484 = vpop.f32.mrb[0].mxu0
      %v485 = vadd.f32 0.0, %v484
      %v486 = vpop.f32.mrb[0].mxu0
      %487 = vmatprep.mubr.f32.mxu0 0.0
      %488 = vmatmul.mubr.f32.gmra.mrb[0].mxu0 %v268
      %v489 = vpop.f32.mrb[0].mxu0
      %v490 = vadd.f32 0.0, %v489
      %v491 = vpop.f32.mrb[0].mxu0
      %492 = vmatprep.mubr.f32.mxu0 0.0
      %493 = vmatmul.mubr.f32.gmra.mrb[0].mxu0 %v271
      %v494 = vpop.f32.mrb[0].mxu0
      %v495 = vadd.f32 0.0, %v494
      %v496 = vpop.f32.mrb[0].mxu0
      %497 = vmatprep.mubr.f32.mxu0 0.0
      %498 = vmatmul.mubr.f32.gmra.mrb[0].mxu0 %v274
      %v499 = vpop.f32.mrb[0].mxu0
      %v500 = vadd.f32 0.0, %v499
      %v501 = vpop.f32.mrb[0].mxu0
      %502 = vmatprep.mubr.f32.mxu0 0.0
      %503 = vmatmul.mubr.f32.gmra.mrb[0].mxu0 %v277
      %v504 = vpop.f32.mrb[0].mxu0
      %v505 = vadd.f32 0.0, %v504
      %v506 = vpop.f32.mrb[0].mxu0
      %507 = vmatprep.mubr.f32.mxu0 0.0
      %508 = vmatmul.mubr.f32.gmra.mrb[0].mxu0 %v268
      %v509 = vpop.f32.mrb[0].mxu0
      %v510 = vadd.f32 0.0, %v509
      %v511 = vpop.f32.mrb[0].mxu0
      %512 = vmatprep.mubr.f32.mxu0 0.0
      %513 = vmatmul.mubr.f32.gmra.mrb[0].mxu0 %v271
      %v514 = vpop.f32.mrb[0].mxu0
      %v515 = vadd.f32 0.0, %v514
      %v516 = vpop.f32.mrb[0].mxu0
      %517 = vmatprep.mubr.f32.mxu0 0.0
      %518 = vmatmul.mubr.f32.gmra.mrb[0].mxu0 %v274
      %v519 = vpop.f32.mrb[0].mxu0
      %v520 = vadd.f32 0.0, %v519
      %v521 = vpop.f32.mrb[0].mxu0
      %522 = vmatprep.mubr.f32.mxu0 0.0
      %523 = vmatmul.mubr.f32.gmra.mrb[0].mxu0 %v277
      %v524 = vpop.f32.mrb[0].mxu0
      %v525 = vadd.f32 0.0, %v524
      %v526 = vpop.f32.mrb[0].mxu0
      %527 = vmatprep.mubr.f32.mxu0 0.0
      %528 = vmatmul.mubr.f32.gmra.mrb[0].mxu0 %v280
      %v529 = vpop.f32.mrb[0].mxu0
      %v530 = vadd.f32 0.0, %v529
      %v531 = vpop.f32.mrb[0].mxu0
      %532 = vmatprep.mubr.f32.mxu0 0.0
      %533 = vmatmul.mubr.f32.gmra.mrb[0].mxu0 %v283
      %v534 = vpop.f32.mrb[0].mxu0
      %v535 = vadd.f32 0.0, %v534
      %v536 = vpop.f32.mrb[0].mxu0
      %537 = vmatprep.mubr.f32.mxu0 0.0
      %538 = vmatmul.mubr.f32.gmra.mrb[0].mxu0 %v286
      %v539 = vpop.f32.mrb[0].mxu0
      %v540 = vadd.f32 0.0, %v539
      %v541 = vpop.f32.mrb[0].mxu0
      %542 = vmatprep.mubr.f32.mxu0 0.0
      %543 = vmatmul.mubr.f32.gmra.mrb[0].mxu0 %v289
      %v544 = vpop.f32.mrb[0].mxu0
      %v545 = vadd.f32 0.0, %v544
      %v546 = vpop.f32.mrb[0].mxu0
      %547 = vmatprep.mubr.f32.mxu0 0.0
      %548 = vmatmul.mubr.f32.gmra.mrb[0].mxu0 %v280
      %v549 = vpop.f32.mrb[0].mxu0
      %v550 = vadd.f32 0.0, %v549
      %v551 = vpop.f32.mrb[0].mxu0
      %552 = vmatprep.mubr.f32.mxu0 0.0
      %553 = vmatmul.mubr.f32.gmra.mrb[0].mxu0 %v283
      %v554 = vpop.f32.mrb[0].mxu0
      %v555 = vadd.f32 0.0, %v554
      %v556 = vpop.f32.mrb[0].mxu0
      %557 = vmatprep.mubr.f32.mxu0 0.0
      %558 = vmatmul.mubr.f32.gmra.mrb[0].mxu0 %v286
      %v559 = vpop.f32.mrb[0].mxu0
      %v560 = vadd.f32 0.0, %v559
      %v561 = vpop.f32.mrb[0].mxu0
      %562 = vmatprep.mubr.f32.mxu0 0.0
      %563 = vmatmul.mubr.f32.gmra.mrb[0].mxu0 %v289
      %v564 = vpop.f32.mrb[0].mxu0
      %v565 = vadd.f32 0.0, %v564
      %v566 = vpop.f32.mrb[0].mxu0
      %567 = vmatprep.mubr.f32.mxu0 0.0
      %568 = vmatmul.mubr.f32.gmra.mrb[0].mxu0 %v292
      %v569 = vpop.f32.mrb[0].mxu0
      %v570 = vadd.f32 0.0, %v569
      %v571 = vpop.f32.mrb[0].mxu0
      %572 = vmatprep.mubr.f32.mxu0 0.0
      %573 = vmatmul.mubr.f32.gmra.mrb[0].mxu0 %v295
      %v574 = vpop.f32.mrb[0].mxu0
      %v575 = vadd.f32 0.0, %v574
      %v576 = vpop.f32.mrb[0].mxu0
      %577 = vmatprep.mubr.f32.mxu0 0.0
      %578 = vmatmul.mubr.f32.gmra.mrb[0].mxu0 %v298
      %v579 = vpop.f32.mrb[0].mxu0
      %v580 = vadd.f32 0.0, %v579
      %v581 = vpop.f32.mrb[0].mxu0
      %582 = vmatprep.mubr.f32.mxu0 0.0
      %583 = vmatmul.mubr.f32.gmra.mrb[0].mxu0 %v301
      %v584 = vpop.f32.mrb[0].mxu0
      %v585 = vadd.f32 0.0, %v584
      %v586 = vpop.f32.mrb[0].mxu0
      %587 = vmatprep.mubr.f32.mxu0 0.0
      %588 = vmatmul.mubr.f32.gmra.mrb[0].mxu0 %v292
      %v589 = vpop.f32.mrb[0].mxu0
      %v590 = vadd.f32 0.0, %v589
      %v591 = vpop.f32.mrb[0].mxu0
      %592 = vmatprep.mubr.f32.mxu0 0.0
      %593 = vmatmul.mubr.f32.gmra.mrb[0].mxu0 %v295
      %v594 = vpop.f32.mrb[0].mxu0
      %v595 = vadd.f32 0.0, %v594
      %v596 = vpop.f32.mrb[0].mxu0
      %597 = vmatprep.mubr.f32.mxu0 0.0
      %598 = vmatmul.mubr.f32.gmra.mrb[0].mxu0 %v298
      %v599 = vpop.f32.mrb[0].mxu0
      %v600 = vadd.f32 0.0, %v599
      %v601 = vpop.f32.mrb[0].mxu0
      %602 = vmatprep.mubr.f32.mxu0 0.0
      %603 = vmatmul.mubr.f32.gmra.mrb[0].mxu0 %v301
      %v604 = vpop.f32.mrb[0].mxu0
      %v605 = vadd.f32 0.0, %v604
      %v606 = vpop.f32.mrb[0].mxu0
      %607 = vmatprep.mubr.f32.mxu0 0.0
      %608 = vmatmul.mubr.f32.gmra.mrb[0].mxu0 %v304
      %v609 = vpop.f32.mrb[0].mxu0
      %v610 = vadd.f32 0.0, %v609
      %v611 = vpop.f32.mrb[0].mxu0
      %612 = vmatprep.mubr.f32.mxu0 0.0
      %613 = vmatmul.mubr.f32.gmra.mrb[0].mxu0 %v307
      %v614 = vpop.f32.mrb[0].mxu0
      %v615 = vadd.f32 0.0, %v614
      %v616 = vpop.f32.mrb[0].mxu0
      %617 = vmatprep.mubr.f32.mxu0 0.0
      %618 = vmatmul.mubr.f32.gmra.mrb[0].mxu0 %v310
      %v619 = vpop.f32.mrb[0].mxu0
      %v620 = vadd.f32 0.0, %v619
      %v621 = vpop.f32.mrb[0].mxu0
      %622 = vmatprep.mubr.f32.mxu0 0.0
      %623 = vmatmul.mubr.f32.gmra.mrb[0].mxu0 %v313
      %v624 = vpop.f32.mrb[0].mxu0
      %v625 = vadd.f32 0.0, %v624
      %v626 = vpop.f32.mrb[0].mxu0
      %627 = vmatprep.mubr.f32.mxu0 0.0
      %628 = vmatmul.mubr.f32.gmra.mrb[0].mxu0 %v304
      %v629 = vpop.f32.mrb[0].mxu0
      %v630 = vadd.f32 0.0, %v629
      %v631 = vpop.f32.mrb[0].mxu0
      %632 = vmatprep.mubr.f32.mxu0 0.0
      %633 = vmatmul.mubr.f32.gmra.mrb[0].mxu0 %v307
      %v634 = vpop.f32.mrb[0].mxu0
      %v635 = vadd.f32 0.0, %v634
      %v636 = vpop.f32.mrb[0].mxu0
      %637 = vmatprep.mubr.f32.mxu0 0.0
      %638 = vmatmul.mubr.f32.gmra.mrb[0].mxu0 %v310
      %v639 = vpop.f32.mrb[0].mxu0
      %v640 = vadd.f32 0.0, %v639
      %v641 = vpop.f32.mrb[0].mxu0
      %642 = vmatprep.mubr.f32.mxu0 0.0
      %643 = vmatmul.mubr.f32.gmra.mrb[0].mxu0 %v313
      %v644 = vpop.f32.mrb[0].mxu0
      %v645 = vadd.f32 0.0, %v644
      %v646 = vpop.f32.mrb[0].mxu0
      %647 = vmatprep.mubr.f32.mxu0 0.0
      %648 = vmatmul.mubr.f32.gmra.mrb[0].mxu0 %v316
      %v649 = vpop.f32.mrb[0].mxu0
      %v650 = vadd.f32 0.0, %v649
      %v651 = vpop.f32.mrb[0].mxu0
      %652 = vmatprep.mubr.f32.mxu0 0.0
      %653 = vmatmul.mubr.f32.gmra.mrb[0].mxu0 %v319
      %v654 = vpop.f32.mrb[0].mxu0
      %v655 = vadd.f32 0.0, %v654
      %v656 = vpop.f32.mrb[0].mxu0
      %657 = vmatprep.mubr.f32.mxu0 0.0
      %658 = vmatmul.mubr.f32.gmra.mrb[0].mxu0 %v322
      %v659 = vpop.f32.mrb[0].mxu0
      %v660 = vadd.f32 0.0, %v659
      %v661 = vpop.f32.mrb[0].mxu0
      %662 = vmatprep.mubr.f32.mxu0 0.0
      %663 = vmatmul.mubr.f32.gmra.mrb[0].mxu0 %v325
      %v664 = vpop.f32.mrb[0].mxu0
      %v665 = vadd.f32 0.0, %v664
      %v666 = vpop.f32.mrb[0].mxu0
      %667 = vmatprep.mubr.f32.mxu0 0.0
      %668 = vmatmul.mubr.f32.gmra.mrb[0].mxu0 %v316
      %v669 = vpop.f32.mrb[0].mxu0
      %v670 = vadd.f32 0.0, %v669
      %v671 = vpop.f32.mrb[0].mxu0
      %672 = vmatprep.mubr.f32.mxu0 0.0
      %673 = vmatmul.mubr.f32.gmra.mrb[0].mxu0 %v319
      %v674 = vpop.f32.mrb[0].mxu0
      %v675 = vadd.f32 0.0, %v674
      %v676 = vpop.f32.mrb[0].mxu0
      %677 = vmatprep.mubr.f32.mxu0 0.0
      %678 = vmatmul.mubr.f32.gmra.mrb[0].mxu0 %v322
      %v679 = vpop.f32.mrb[0].mxu0
      %v680 = vadd.f32 0.0, %v679
      %v681 = vpop.f32.mrb[0].mxu0
      %682 = vmatprep.mubr.f32.mxu0 0.0
      %683 = vmatmul.mubr.f32.gmra.mrb[0].mxu0 %v325
      %v684 = vpop.f32.mrb[0].mxu0
      %v685 = vadd.f32 0.0, %v684
      %v686 = vpop.f32.mrb[0].mxu0
      %687 = vmatprep.mubr.f32.mxu0 0.0
      %688 = vmatmul.mubr.f32.gmra.mrb[0].mxu0 %v328
      %v689 = vpop.f32.mrb[0].mxu0
      %v690 = vadd.f32 0.0, %v689
      %v691 = vpop.f32.mrb[0].mxu0
      %692 = vmatprep.mubr.f32.mxu0 0.0
      %693 = vmatmul.mubr.f32.gmra.mrb[0].mxu0 %v331
      %v694 = vpop.f32.mrb[0].mxu0
      %v695 = vadd.f32 0.0, %v694
      %v696 = vpop.f32.mrb[0].mxu0
      %697 = vmatprep.mubr.f32.mxu0 0.0
      %698 = vmatmul.mubr.f32.gmra.mrb[0].mxu0 %v334
      %v699 = vpop.f32.mrb[0].mxu0
      %v700 = vadd.f32 0.0, %v699
      %v701 = vpop.f32.mrb[0].mxu0
      %702 = vmatprep.mubr.f32.mxu0 0.0
      %703 = vmatmul.mubr.f32.gmra.mrb[0].mxu0 %v337
      %v704 = vpop.f32.mrb[0].mxu0
      %v705 = vadd.f32 0.0, %v704
      %v706 = vpop.f32.mrb[0].mxu0
      %707 = vmatprep.mubr.f32.mxu0 0.0
      %708 = vmatmul.mubr.f32.gmra.mrb[0].mxu0 %v328
      %v709 = vpop.f32.mrb[0].mxu0
      %v710 = vadd.f32 0.0, %v709
      %v711 = vpop.f32.mrb[0].mxu0
      %712 = vmatprep.mubr.f32.mxu0 0.0
      %713 = vmatmul.mubr.f32.gmra.mrb[0].mxu0 %v331
      %v714 = vpop.f32.mrb[0].mxu0
      %v715 = vadd.f32 0.0, %v714
      %v716 = vpop.f32.mrb[0].mxu0
      %717 = vmatprep.mubr.f32.mxu0 0.0
      %718 = vmatmul.mubr.f32.gmra.mrb[0].mxu0 %v334
      %v719 = vpop.f32.mrb[0].mxu0
      %v720 = vadd.f32 0.0, %v719
      %v721 = vpop.f32.mrb[0].mxu0
      %722 = vmatprep.mubr.f32.mxu0 0.0
      %723 = vmatmul.mubr.f32.gmra.mrb[0].mxu0 %v337
      %v724 = vpop.f32.mrb[0].mxu0
      %v725 = vadd.f32 0.0, %v724
      %v726 = vpop.f32.mrb[0].mxu0
      %727 = vdwg.mxu0
      %v729 = vsel %vm242, %v199, 0
      %v732 = vsel %vm242, %v200, 0
      %v735 = vsel %vm242, %v201, 0
      %v738 = vsel %vm242, %v202, 0
      %v741 = vsel %vm339, %v239, 0
      %743 = vmatprep.subr.mxu0 0.0
      %744 = vmatpush1.msra.mxu0 %v741
      %745 = vmatprep.subr.mxu0 0.0
      %746 = vmatpush1.msra.mxu0 0.0
      %747 = vmatprep.subr.mxu0 0.0
      %748 = vmatpush1.msra.mxu0 0.0
      %749 = vmatprep.subr.mxu0 0.0
      %750 = vmatpush1.msra.mxu0 0.0
      %751 = vmatprep.subr.mxu0 0.0
      %752 = vmatpush1.msra.mxu0 0.0
      %753 = vmatprep.subr.mxu0 0.0
      %754 = vmatpush1.msra.mxu0 0.0
      %755 = vmatprep.subr.mxu0 0.0
      %756 = vmatpush1.msra.mxu0 0.0
      %757 = vmatprep.subr.mxu0 0.0
      %758 = vmatpush1.msra.mxu0 0.0
      %759 = vmatprep.subr.mxu0 0.0
      %760 = vmatpush1.msra.mxu0 0.0
      %761 = vmatprep.subr.mxu0 0.0
      %762 = vmatpush1.msra.mxu0 0.0
      %763 = vmatprep.subr.mxu0 0.0
      %764 = vmatpush1.msra.mxu0 0.0
      %765 = vmatprep.subr.mxu0 0.0
      %766 = vmatpush1.msra.mxu0 0.0
      %767 = vmatprep.subr.mxu0 0.0
      %768 = vmatpush1.msra.mxu0 0.0
      %769 = vmatprep.subr.mxu0 0.0
      %770 = vmatpush1.msra.mxu0 0.0
      %771 = vmatprep.subr.mxu0 0.0
      %772 = vmatpush1.msra.mxu0 0.0
      %773 = vmatprep.subr.mxu0 0.0
      %774 = vmatpush1.msra.mxu0 0.0
      %775 = vmatprep.subr.mxu0 0.0
      %776 = vmatpush1.msra.mxu0 0.0
      %777 = vmatprep.subr.mxu0 0.0
      %778 = vmatpush1.msra.mxu0 0.0
      %779 = vmatprep.subr.mxu0 0.0
      %780 = vmatpush1.msra.mxu0 0.0
      %781 = vmatprep.subr.mxu0 0.0
      %782 = vmatpush1.msra.mxu0 0.0
      %783 = vmatprep.subr.mxu0 0.0
      %784 = vmatpush1.msra.mxu0 0.0
      %785 = vmatprep.subr.mxu0 0.0
      %786 = vmatpush1.msra.mxu0 0.0
      %787 = vmatprep.subr.mxu0 0.0
      %788 = vmatpush1.msra.mxu0 0.0
      %789 = vmatprep.subr.mxu0 0.0
      %790 = vmatpush1.msra.mxu0 0.0
      %791 = vmatprep.subr.mxu0 0.0
      %792 = vmatpush1.msra.mxu0 0.0
      %793 = vmatprep.subr.mxu0 0.0
      %794 = vmatpush1.msra.mxu0 0.0
      %795 = vmatprep.subr.mxu0 0.0
      %796 = vmatpush1.msra.mxu0 0.0
      %797 = vmatprep.subr.mxu0 0.0
      %798 = vmatpush1.msra.mxu0 0.0
      %799 = vmatprep.subr.mxu0 0.0
      %800 = vmatpush1.msra.mxu0 0.0
      %801 = vmatprep.subr.mxu0 0.0
      %802 = vmatpush1.msra.mxu0 0.0
      %803 = vmatprep.subr.mxu0 0.0
      %804 = vmatpush1.msra.mxu0 0.0
      %805 = vmatprep.subr.mxu0 0.0
      %806 = vmatpush1.msra.mxu0 0.0
      %807 = vmatprep.mubr.f32.mxu0 0.0
      %808 = vmatmul.mubr.f32.gmra.mrb[0].mxu0 %v729
      %v809 = vpop.f32.mrb[0].mxu0
      %v810 = vadd.f32 %v410, %v809
      %v811 = vpop.f32.mrb[0].mxu0
      %812 = vmatprep.mubr.f32.mxu0 0.0
      %813 = vmatmul.mubr.f32.gmra.mrb[0].mxu0 %v732
      %v814 = vpop.f32.mrb[0].mxu0
      %v815 = vadd.f32 %v415, %v814
      %v816 = vpop.f32.mrb[0].mxu0
      %817 = vmatprep.mubr.f32.mxu0 0.0
      %818 = vmatmul.mubr.f32.gmra.mrb[0].mxu0 %v735
      %v819 = vpop.f32.mrb[0].mxu0
      %v820 = vadd.f32 %v420, %v819
      %v821 = vpop.f32.mrb[0].mxu0
      %822 = vmatprep.mubr.f32.mxu0 0.0
      %823 = vmatmul.mubr.f32.gmra.mrb[0].mxu0 %v738
      %v824 = vpop.f32.mrb[0].mxu0
      %v825 = vadd.f32 %v425, %v824
      %v826 = vpop.f32.mrb[0].mxu0
      %827 = vmatprep.mubr.f32.mxu0 0.0
      %828 = vmatmul.mubr.f32.gmra.mrb[0].mxu0 %v244
      %v829 = vpop.f32.mrb[0].mxu0
      %v830 = vadd.f32 %v430, %v829
      %v831 = vpop.f32.mrb[0].mxu0
      %832 = vmatprep.mubr.f32.mxu0 0.0
      %833 = vmatmul.mubr.f32.gmra.mrb[0].mxu0 %v247
      %v834 = vpop.f32.mrb[0].mxu0
      %v835 = vadd.f32 %v435, %v834
      %v836 = vpop.f32.mrb[0].mxu0
      %837 = vmatprep.mubr.f32.mxu0 0.0
      %838 = vmatmul.mubr.f32.gmra.mrb[0].mxu0 %v250
      %v839 = vpop.f32.mrb[0].mxu0
      %v840 = vadd.f32 %v440, %v839
      %v841 = vpop.f32.mrb[0].mxu0
      %842 = vmatprep.mubr.f32.mxu0 0.0
      %843 = vmatmul.mubr.f32.gmra.mrb[0].mxu0 %v253
      %v844 = vpop.f32.mrb[0].mxu0
      %v845 = vadd.f32 %v445, %v844
      %v846 = vpop.f32.mrb[0].mxu0
      %847 = vmatprep.mubr.f32.mxu0 0.0
      %848 = vmatmul.mubr.f32.gmra.mrb[0].mxu0 %v244
      %v849 = vpop.f32.mrb[0].mxu0
      %v850 = vadd.f32 %v450, %v849
      %v851 = vpop.f32.mrb[0].mxu0
      %852 = vmatprep.mubr.f32.mxu0 0.0
      %853 = vmatmul.mubr.f32.gmra.mrb[0].mxu0 %v247
      %v854 = vpop.f32.mrb[0].mxu0
      %v855 = vadd.f32 %v455, %v854
      %v856 = vpop.f32.mrb[0].mxu0
      %857 = vmatprep.mubr.f32.mxu0 0.0
      %858 = vmatmul.mubr.f32.gmra.mrb[0].mxu0 %v250
      %v859 = vpop.f32.mrb[0].mxu0
      %v860 = vadd.f32 %v460, %v859
      %v861 = vpop.f32.mrb[0].mxu0
      %862 = vmatprep.mubr.f32.mxu0 0.0
      %863 = vmatmul.mubr.f32.gmra.mrb[0].mxu0 %v253
      %v864 = vpop.f32.mrb[0].mxu0
      %v865 = vadd.f32 %v465, %v864
      %v866 = vpop.f32.mrb[0].mxu0
      %867 = vmatprep.mubr.f32.mxu0 0.0
      %868 = vmatmul.mubr.f32.gmra.mrb[0].mxu0 %v256
      %v869 = vpop.f32.mrb[0].mxu0
      %v870 = vadd.f32 %v470, %v869
      %v871 = vpop.f32.mrb[0].mxu0
      %872 = vmatprep.mubr.f32.mxu0 0.0
      %873 = vmatmul.mubr.f32.gmra.mrb[0].mxu0 %v259
      %v874 = vpop.f32.mrb[0].mxu0
      %v875 = vadd.f32 %v475, %v874
      %v876 = vpop.f32.mrb[0].mxu0
      %877 = vmatprep.mubr.f32.mxu0 0.0
      %878 = vmatmul.mubr.f32.gmra.mrb[0].mxu0 %v262
      %v879 = vpop.f32.mrb[0].mxu0
      %v880 = vadd.f32 %v480, %v879
      %v881 = vpop.f32.mrb[0].mxu0
      %882 = vmatprep.mubr.f32.mxu0 0.0
      %883 = vmatmul.mubr.f32.gmra.mrb[0].mxu0 %v265
      %v884 = vpop.f32.mrb[0].mxu0
      %v885 = vadd.f32 %v485, %v884
      %v886 = vpop.f32.mrb[0].mxu0
      %887 = vmatprep.mubr.f32.mxu0 0.0
      %888 = vmatmul.mubr.f32.gmra.mrb[0].mxu0 %v256
      %v889 = vpop.f32.mrb[0].mxu0
      %v890 = vadd.f32 %v490, %v889
      %v891 = vpop.f32.mrb[0].mxu0
      %892 = vmatprep.mubr.f32.mxu0 0.0
      %893 = vmatmul.mubr.f32.gmra.mrb[0].mxu0 %v259
      %v894 = vpop.f32.mrb[0].mxu0
      %v895 = vadd.f32 %v495, %v894
      %v896 = vpop.f32.mrb[0].mxu0
      %897 = vmatprep.mubr.f32.mxu0 0.0
      %898 = vmatmul.mubr.f32.gmra.mrb[0].mxu0 %v262
      %v899 = vpop.f32.mrb[0].mxu0
      %v900 = vadd.f32 %v500, %v899
      %v901 = vpop.f32.mrb[0].mxu0
      %902 = vmatprep.mubr.f32.mxu0 0.0
      %903 = vmatmul.mubr.f32.gmra.mrb[0].mxu0 %v265
      %v904 = vpop.f32.mrb[0].mxu0
      %v905 = vadd.f32 %v505, %v904
      %v906 = vpop.f32.mrb[0].mxu0
      %907 = vmatprep.mubr.f32.mxu0 0.0
      %908 = vmatmul.mubr.f32.gmra.mrb[0].mxu0 %v268
      %v909 = vpop.f32.mrb[0].mxu0
      %v910 = vadd.f32 %v510, %v909
      %v911 = vpop.f32.mrb[0].mxu0
      %912 = vmatprep.mubr.f32.mxu0 0.0
      %913 = vmatmul.mubr.f32.gmra.mrb[0].mxu0 %v271
      %v914 = vpop.f32.mrb[0].mxu0
      %v915 = vadd.f32 %v515, %v914
      %v916 = vpop.f32.mrb[0].mxu0
      %917 = vmatprep.mubr.f32.mxu0 0.0
      %918 = vmatmul.mubr.f32.gmra.mrb[0].mxu0 %v274
      %v919 = vpop.f32.mrb[0].mxu0
      %v920 = vadd.f32 %v520, %v919
      %v921 = vpop.f32.mrb[0].mxu0
      %922 = vmatprep.mubr.f32.mxu0 0.0
      %923 = vmatmul.mubr.f32.gmra.mrb[0].mxu0 %v277
      %v924 = vpop.f32.mrb[0].mxu0
      %v925 = vadd.f32 %v525, %v924
      %v926 = vpop.f32.mrb[0].mxu0
      %927 = vmatprep.mubr.f32.mxu0 0.0
      %928 = vmatmul.mubr.f32.gmra.mrb[0].mxu0 %v268
      %v929 = vpop.f32.mrb[0].mxu0
      %v930 = vadd.f32 %v530, %v929
      %v931 = vpop.f32.mrb[0].mxu0
      %932 = vmatprep.mubr.f32.mxu0 0.0
      %933 = vmatmul.mubr.f32.gmra.mrb[0].mxu0 %v271
      %v934 = vpop.f32.mrb[0].mxu0
      %v935 = vadd.f32 %v535, %v934
      %v936 = vpop.f32.mrb[0].mxu0
      %937 = vmatprep.mubr.f32.mxu0 0.0
      %938 = vmatmul.mubr.f32.gmra.mrb[0].mxu0 %v274
      %v939 = vpop.f32.mrb[0].mxu0
      %v940 = vadd.f32 %v540, %v939
      %v941 = vpop.f32.mrb[0].mxu0
      %942 = vmatprep.mubr.f32.mxu0 0.0
      %943 = vmatmul.mubr.f32.gmra.mrb[0].mxu0 %v277
      %v944 = vpop.f32.mrb[0].mxu0
      %v945 = vadd.f32 %v545, %v944
      %v946 = vpop.f32.mrb[0].mxu0
      %947 = vmatprep.mubr.f32.mxu0 0.0
      %948 = vmatmul.mubr.f32.gmra.mrb[0].mxu0 %v280
      %v949 = vpop.f32.mrb[0].mxu0
      %v950 = vadd.f32 %v550, %v949
      %v951 = vpop.f32.mrb[0].mxu0
      %952 = vmatprep.mubr.f32.mxu0 0.0
      %953 = vmatmul.mubr.f32.gmra.mrb[0].mxu0 %v283
      %v954 = vpop.f32.mrb[0].mxu0
      %v955 = vadd.f32 %v555, %v954
      %v956 = vpop.f32.mrb[0].mxu0
      %957 = vmatprep.mubr.f32.mxu0 0.0
      %958 = vmatmul.mubr.f32.gmra.mrb[0].mxu0 %v286
      %v959 = vpop.f32.mrb[0].mxu0
      %v960 = vadd.f32 %v560, %v959
      %v961 = vpop.f32.mrb[0].mxu0
      %962 = vmatprep.mubr.f32.mxu0 0.0
      %963 = vmatmul.mubr.f32.gmra.mrb[0].mxu0 %v289
      %v964 = vpop.f32.mrb[0].mxu0
      %v965 = vadd.f32 %v565, %v964
      %v966 = vpop.f32.mrb[0].mxu0
      %967 = vmatprep.mubr.f32.mxu0 0.0
      %968 = vmatmul.mubr.f32.gmra.mrb[0].mxu0 %v280
      %v969 = vpop.f32.mrb[0].mxu0
      %v970 = vadd.f32 %v570, %v969
      %v971 = vpop.f32.mrb[0].mxu0
      %972 = vmatprep.mubr.f32.mxu0 0.0
      %973 = vmatmul.mubr.f32.gmra.mrb[0].mxu0 %v283
      %v974 = vpop.f32.mrb[0].mxu0
      %v975 = vadd.f32 %v575, %v974
      %v976 = vpop.f32.mrb[0].mxu0
      %977 = vmatprep.mubr.f32.mxu0 0.0
      %978 = vmatmul.mubr.f32.gmra.mrb[0].mxu0 %v286
      %v979 = vpop.f32.mrb[0].mxu0
      %v980 = vadd.f32 %v580, %v979
      %v981 = vpop.f32.mrb[0].mxu0
      %982 = vmatprep.mubr.f32.mxu0 0.0
      %983 = vmatmul.mubr.f32.gmra.mrb[0].mxu0 %v289
      %v984 = vpop.f32.mrb[0].mxu0
      %v985 = vadd.f32 %v585, %v984
      %v986 = vpop.f32.mrb[0].mxu0
      %987 = vmatprep.mubr.f32.mxu0 0.0
      %988 = vmatmul.mubr.f32.gmra.mrb[0].mxu0 %v292
      %v989 = vpop.f32.mrb[0].mxu0
      %v990 = vadd.f32 %v590, %v989
      %v991 = vpop.f32.mrb[0].mxu0
      %992 = vmatprep.mubr.f32.mxu0 0.0
      %993 = vmatmul.mubr.f32.gmra.mrb[0].mxu0 %v295
      %v994 = vpop.f32.mrb[0].mxu0
      %v995 = vadd.f32 %v595, %v994
      %v996 = vpop.f32.mrb[0].mxu0
      %997 = vmatprep.mubr.f32.mxu0 0.0
      %998 = vmatmul.mubr.f32.gmra.mrb[0].mxu0 %v298
      %v999 = vpop.f32.mrb[0].mxu0
      %v1000 = vadd.f32 %v600, %v999
      %v1001 = vpop.f32.mrb[0].mxu0
      %1002 = vmatprep.mubr.f32.mxu0 0.0
      %1003 = vmatmul.mubr.f32.gmra.mrb[0].mxu0 %v301
      %v1004 = vpop.f32.mrb[0].mxu0
      %v1005 = vadd.f32 %v605, %v1004
      %v1006 = vpop.f32.mrb[0].mxu0
      %1007 = vmatprep.mubr.f32.mxu0 0.0
      %1008 = vmatmul.mubr.f32.gmra.mrb[0].mxu0 %v292
      %v1009 = vpop.f32.mrb[0].mxu0
      %v1010 = vadd.f32 %v610, %v1009
      %v1011 = vpop.f32.mrb[0].mxu0
      %1012 = vmatprep.mubr.f32.mxu0 0.0
      %1013 = vmatmul.mubr.f32.gmra.mrb[0].mxu0 %v295
      %v1014 = vpop.f32.mrb[0].mxu0
      %v1015 = vadd.f32 %v615, %v1014
      %v1016 = vpop.f32.mrb[0].mxu0
      %1017 = vmatprep.mubr.f32.mxu0 0.0
      %1018 = vmatmul.mubr.f32.gmra.mrb[0].mxu0 %v298
      %v1019 = vpop.f32.mrb[0].mxu0
      %v1020 = vadd.f32 %v620, %v1019
      %v1021 = vpop.f32.mrb[0].mxu0
      %1022 = vmatprep.mubr.f32.mxu0 0.0
      %1023 = vmatmul.mubr.f32.gmra.mrb[0].mxu0 %v301
      %v1024 = vpop.f32.mrb[0].mxu0
      %v1025 = vadd.f32 %v625, %v1024
      %v1026 = vpop.f32.mrb[0].mxu0
      %1027 = vmatprep.mubr.f32.mxu0 0.0
      %1028 = vmatmul.mubr.f32.gmra.mrb[0].mxu0 %v304
      %v1029 = vpop.f32.mrb[0].mxu0
      %v1030 = vadd.f32 %v630, %v1029
      %v1031 = vpop.f32.mrb[0].mxu0
      %1032 = vmatprep.mubr.f32.mxu0 0.0
      %1033 = vmatmul.mubr.f32.gmra.mrb[0].mxu0 %v307
      %v1034 = vpop.f32.mrb[0].mxu0
      %v1035 = vadd.f32 %v635, %v1034
      %v1036 = vpop.f32.mrb[0].mxu0
      %1037 = vmatprep.mubr.f32.mxu0 0.0
      %1038 = vmatmul.mubr.f32.gmra.mrb[0].mxu0 %v310
      %v1039 = vpop.f32.mrb[0].mxu0
      %v1040 = vadd.f32 %v640, %v1039
      %v1041 = vpop.f32.mrb[0].mxu0
      %1042 = vmatprep.mubr.f32.mxu0 0.0
      %1043 = vmatmul.mubr.f32.gmra.mrb[0].mxu0 %v313
      %v1044 = vpop.f32.mrb[0].mxu0
      %v1045 = vadd.f32 %v645, %v1044
      %v1046 = vpop.f32.mrb[0].mxu0
      %1047 = vmatprep.mubr.f32.mxu0 0.0
      %1048 = vmatmul.mubr.f32.gmra.mrb[0].mxu0 %v304
      %v1049 = vpop.f32.mrb[0].mxu0
      %v1050 = vadd.f32 %v650, %v1049
      %v1051 = vpop.f32.mrb[0].mxu0
      %1052 = vmatprep.mubr.f32.mxu0 0.0
      %1053 = vmatmul.mubr.f32.gmra.mrb[0].mxu0 %v307
      %v1054 = vpop.f32.mrb[0].mxu0
      %v1055 = vadd.f32 %v655, %v1054
      %v1056 = vpop.f32.mrb[0].mxu0
      %1057 = vmatprep.mubr.f32.mxu0 0.0
      %1058 = vmatmul.mubr.f32.gmra.mrb[0].mxu0 %v310
      %v1059 = vpop.f32.mrb[0].mxu0
      %v1060 = vadd.f32 %v660, %v1059
      %v1061 = vpop.f32.mrb[0].mxu0
      %1062 = vmatprep.mubr.f32.mxu0 0.0
      %1063 = vmatmul.mubr.f32.gmra.mrb[0].mxu0 %v313
      %v1064 = vpop.f32.mrb[0].mxu0
      %v1065 = vadd.f32 %v665, %v1064
      %v1066 = vpop.f32.mrb[0].mxu0
      %1067 = vmatprep.mubr.f32.mxu0 0.0
      %1068 = vmatmul.mubr.f32.gmra.mrb[0].mxu0 %v316
      %v1069 = vpop.f32.mrb[0].mxu0
      %v1070 = vadd.f32 %v670, %v1069
      %v1071 = vpop.f32.mrb[0].mxu0
      %1072 = vmatprep.mubr.f32.mxu0 0.0
      %1073 = vmatmul.mubr.f32.gmra.mrb[0].mxu0 %v319
      %v1074 = vpop.f32.mrb[0].mxu0
      %v1075 = vadd.f32 %v675, %v1074
      %v1076 = vpop.f32.mrb[0].mxu0
      %1077 = vmatprep.mubr.f32.mxu0 0.0
      %1078 = vmatmul.mubr.f32.gmra.mrb[0].mxu0 %v322
      %v1079 = vpop.f32.mrb[0].mxu0
      %v1080 = vadd.f32 %v680, %v1079
      %v1081 = vpop.f32.mrb[0].mxu0
      %1082 = vmatprep.mubr.f32.mxu0 0.0
      %1083 = vmatmul.mubr.f32.gmra.mrb[0].mxu0 %v325
      %v1084 = vpop.f32.mrb[0].mxu0
      %v1085 = vadd.f32 %v685, %v1084
      %v1086 = vpop.f32.mrb[0].mxu0
      %1087 = vmatprep.mubr.f32.mxu0 0.0
      %1088 = vmatmul.mubr.f32.gmra.mrb[0].mxu0 %v316
      %v1089 = vpop.f32.mrb[0].mxu0
      %v1090 = vadd.f32 %v690, %v1089
      %v1091 = vpop.f32.mrb[0].mxu0
      %1092 = vmatprep.mubr.f32.mxu0 0.0
      %1093 = vmatmul.mubr.f32.gmra.mrb[0].mxu0 %v319
      %v1094 = vpop.f32.mrb[0].mxu0
      %v1095 = vadd.f32 %v695, %v1094
      %v1096 = vpop.f32.mrb[0].mxu0
      %1097 = vmatprep.mubr.f32.mxu0 0.0
      %1098 = vmatmul.mubr.f32.gmra.mrb[0].mxu0 %v322
      %v1099 = vpop.f32.mrb[0].mxu0
      %v1100 = vadd.f32 %v700, %v1099
      %v1101 = vpop.f32.mrb[0].mxu0
      %1102 = vmatprep.mubr.f32.mxu0 0.0
      %1103 = vmatmul.mubr.f32.gmra.mrb[0].mxu0 %v325
      %v1104 = vpop.f32.mrb[0].mxu0
      %v1105 = vadd.f32 %v705, %v1104
      %v1106 = vpop.f32.mrb[0].mxu0
      %1107 = vmatprep.mubr.f32.mxu0 0.0
      %1108 = vmatmul.mubr.f32.gmra.mrb[0].mxu0 %v328
      %v1109 = vpop.f32.mrb[0].mxu0
      %v1110 = vadd.f32 %v710, %v1109
      %v1111 = vpop.f32.mrb[0].mxu0
      %1112 = vmatprep.mubr.f32.mxu0 0.0
      %1113 = vmatmul.mubr.f32.gmra.mrb[0].mxu0 %v331
      %v1114 = vpop.f32.mrb[0].mxu0
      %v1115 = vadd.f32 %v715, %v1114
      %v1116 = vpop.f32.mrb[0].mxu0
      %1117 = vmatprep.mubr.f32.mxu0 0.0
      %1118 = vmatmul.mubr.f32.gmra.mrb[0].mxu0 %v334
      %v1119 = vpop.f32.mrb[0].mxu0
      %v1120 = vadd.f32 %v720, %v1119
      %v1121 = vpop.f32.mrb[0].mxu0
      %1122 = vmatprep.mubr.f32.mxu0 0.0
      %1123 = vmatmul.mubr.f32.gmra.mrb[0].mxu0 %v337
      %v1124 = vpop.f32.mrb[0].mxu0
      %v1125 = vadd.f32 %v725, %v1124
      %v1126 = vpop.f32.mrb[0].mxu0
      %1127 = vdwg.mxu0
      %s1128 = scalar_lea.vmem %s1, 24
      %v1129 = vld [vmem:[%s1128] sm:$0xf]
      %v1131 = vsel %vm242, %v235, 0
      %v1134 = vsel %vm242, %v236, 0
      %v1137 = vsel %vm242, %v237, 0
      %v1140 = vsel %vm242, %v238, 0
      %v1143 = vsel %vm339, %v1129, 0
      %1145 = vmatprep.subr.mxu0 0.0
      %1146 = vmatpush1.msra.mxu0 %v1143
      %1147 = vmatprep.subr.mxu0 0.0
      %1148 = vmatpush1.msra.mxu0 0.0
      %1149 = vmatprep.subr.mxu0 0.0
      %1150 = vmatpush1.msra.mxu0 0.0
      %1151 = vmatprep.subr.mxu0 0.0
      %1152 = vmatpush1.msra.mxu0 0.0
      %1153 = vmatprep.subr.mxu0 0.0
      %1154 = vmatpush1.msra.mxu0 0.0
      %1155 = vmatprep.subr.mxu0 0.0
      %1156 = vmatpush1.msra.mxu0 0.0
      %1157 = vmatprep.subr.mxu0 0.0
      %1158 = vmatpush1.msra.mxu0 0.0
      %1159 = vmatprep.subr.mxu0 0.0
      %1160 = vmatpush1.msra.mxu0 0.0
      %1161 = vmatprep.subr.mxu0 0.0
      %1162 = vmatpush1.msra.mxu0 0.0
      %1163 = vmatprep.subr.mxu0 0.0
      %1164 = vmatpush1.msra.mxu0 0.0
      %1165 = vmatprep.subr.mxu0 0.0
      %1166 = vmatpush1.msra.mxu0 0.0
      %1167 = vmatprep.subr.mxu0 0.0
      %1168 = vmatpush1.msra.mxu0 0.0
      %1169 = vmatprep.subr.mxu0 0.0
      %1170 = vmatpush1.msra.mxu0 0.0
      %1171 = vmatprep.subr.mxu0 0.0
      %1172 = vmatpush1.msra.mxu0 0.0
      %1173 = vmatprep.subr.mxu0 0.0
      %1174 = vmatpush1.msra.mxu0 0.0
      %1175 = vmatprep.subr.mxu0 0.0
      %1176 = vmatpush1.msra.mxu0 0.0
      %1177 = vmatprep.subr.mxu0 0.0
      %1178 = vmatpush1.msra.mxu0 0.0
      %1179 = vmatprep.subr.mxu0 0.0
      %1180 = vmatpush1.msra.mxu0 0.0
      %1181 = vmatprep.subr.mxu0 0.0
      %1182 = vmatpush1.msra.mxu0 0.0
      %1183 = vmatprep.subr.mxu0 0.0
      %1184 = vmatpush1.msra.mxu0 0.0
      %1185 = vmatprep.subr.mxu0 0.0
      %1186 = vmatpush1.msra.mxu0 0.0
      %1187 = vmatprep.subr.mxu0 0.0
      %1188 = vmatpush1.msra.mxu0 0.0
      %1189 = vmatprep.subr.mxu0 0.0
      %1190 = vmatpush1.msra.mxu0 0.0
      %1191 = vmatprep.subr.mxu0 0.0
      %1192 = vmatpush1.msra.mxu0 0.0
      %1193 = vmatprep.subr.mxu0 0.0
      %1194 = vmatpush1.msra.mxu0 0.0
      %1195 = vmatprep.subr.mxu0 0.0
      %1196 = vmatpush1.msra.mxu0 0.0
      %1197 = vmatprep.subr.mxu0 0.0
      %1198 = vmatpush1.msra.mxu0 0.0
      %1199 = vmatprep.subr.mxu0 0.0
      %1200 = vmatpush1.msra.mxu0 0.0
      %1201 = vmatprep.subr.mxu0 0.0
      %1202 = vmatpush1.msra.mxu0 0.0
      %1203 = vmatprep.subr.mxu0 0.0
      %1204 = vmatpush1.msra.mxu0 0.0
      %1205 = vmatprep.subr.mxu0 0.0
      %1206 = vmatpush1.msra.mxu0 0.0
      %1207 = vmatprep.subr.mxu0 0.0
      %1208 = vmatpush1.msra.mxu0 0.0
      %1209 = vmatprep.mubr.f32.mxu0 0.0
      %1210 = vmatmul.mubr.f32.gmra.mrb[0].mxu0 %v244
      %v1211 = vpop.f32.mrb[0].mxu0
      %v1212 = vadd.f32 0.0, %v1211
      %v1213 = vpop.f32.mrb[0].mxu0
      %1214 = vmatprep.mubr.f32.mxu0 0.0
      %1215 = vmatmul.mubr.f32.gmra.mrb[0].mxu0 %v247
      %v1216 = vpop.f32.mrb[0].mxu0
      %v1217 = vadd.f32 0.0, %v1216
      %v1218 = vpop.f32.mrb[0].mxu0
      %1219 = vmatprep.mubr.f32.mxu0 0.0
      %1220 = vmatmul.mubr.f32.gmra.mrb[0].mxu0 %v250
      %v1221 = vpop.f32.mrb[0].mxu0
      %v1222 = vadd.f32 0.0, %v1221
      %v1223 = vpop.f32.mrb[0].mxu0
      %1224 = vmatprep.mubr.f32.mxu0 0.0
      %1225 = vmatmul.mubr.f32.gmra.mrb[0].mxu0 %v253
      %v1226 = vpop.f32.mrb[0].mxu0
      %v1227 = vadd.f32 0.0, %v1226
      %v1228 = vpop.f32.mrb[0].mxu0
      %1229 = vmatprep.mubr.f32.mxu0 0.0
      %1230 = vmatmul.mubr.f32.gmra.mrb[0].mxu0 %v256
      %v1231 = vpop.f32.mrb[0].mxu0
      %v1232 = vadd.f32 0.0, %v1231
      %v1233 = vpop.f32.mrb[0].mxu0
      %1234 = vmatprep.mubr.f32.mxu0 0.0
      %1235 = vmatmul.mubr.f32.gmra.mrb[0].mxu0 %v259
      %v1236 = vpop.f32.mrb[0].mxu0
      %v1237 = vadd.f32 0.0, %v1236
      %v1238 = vpop.f32.mrb[0].mxu0
      %1239 = vmatprep.mubr.f32.mxu0 0.0
      %1240 = vmatmul.mubr.f32.gmra.mrb[0].mxu0 %v262
      %v1241 = vpop.f32.mrb[0].mxu0
      %v1242 = vadd.f32 0.0, %v1241
      %v1243 = vpop.f32.mrb[0].mxu0
      %1244 = vmatprep.mubr.f32.mxu0 0.0
      %1245 = vmatmul.mubr.f32.gmra.mrb[0].mxu0 %v265
      %v1246 = vpop.f32.mrb[0].mxu0
      %v1247 = vadd.f32 0.0, %v1246
      %v1248 = vpop.f32.mrb[0].mxu0
      %1249 = vmatprep.mubr.f32.mxu0 0.0
      %1250 = vmatmul.mubr.f32.gmra.mrb[0].mxu0 %v256
      %v1251 = vpop.f32.mrb[0].mxu0
      %v1252 = vadd.f32 0.0, %v1251
      %v1253 = vpop.f32.mrb[0].mxu0
      %1254 = vmatprep.mubr.f32.mxu0 0.0
      %1255 = vmatmul.mubr.f32.gmra.mrb[0].mxu0 %v259
      %v1256 = vpop.f32.mrb[0].mxu0
      %v1257 = vadd.f32 0.0, %v1256
      %v1258 = vpop.f32.mrb[0].mxu0
      %1259 = vmatprep.mubr.f32.mxu0 0.0
      %1260 = vmatmul.mubr.f32.gmra.mrb[0].mxu0 %v262
      %v1261 = vpop.f32.mrb[0].mxu0
      %v1262 = vadd.f32 0.0, %v1261
      %v1263 = vpop.f32.mrb[0].mxu0
      %1264 = vmatprep.mubr.f32.mxu0 0.0
      %1265 = vmatmul.mubr.f32.gmra.mrb[0].mxu0 %v265
      %v1266 = vpop.f32.mrb[0].mxu0
      %v1267 = vadd.f32 0.0, %v1266
      %v1268 = vpop.f32.mrb[0].mxu0
      %1269 = vmatprep.mubr.f32.mxu0 0.0
      %1270 = vmatmul.mubr.f32.gmra.mrb[0].mxu0 %v268
      %v1271 = vpop.f32.mrb[0].mxu0
      %v1272 = vadd.f32 0.0, %v1271
      %v1273 = vpop.f32.mrb[0].mxu0
      %1274 = vmatprep.mubr.f32.mxu0 0.0
      %1275 = vmatmul.mubr.f32.gmra.mrb[0].mxu0 %v271
      %v1276 = vpop.f32.mrb[0].mxu0
      %v1277 = vadd.f32 0.0, %v1276
      %v1278 = vpop.f32.mrb[0].mxu0
      %1279 = vmatprep.mubr.f32.mxu0 0.0
      %1280 = vmatmul.mubr.f32.gmra.mrb[0].mxu0 %v274
      %v1281 = vpop.f32.mrb[0].mxu0
      %v1282 = vadd.f32 0.0, %v1281
      %v1283 = vpop.f32.mrb[0].mxu0
      %1284 = vmatprep.mubr.f32.mxu0 0.0
      %1285 = vmatmul.mubr.f32.gmra.mrb[0].mxu0 %v277
      %v1286 = vpop.f32.mrb[0].mxu0
      %v1287 = vadd.f32 0.0, %v1286
      %v1288 = vpop.f32.mrb[0].mxu0
      %1289 = vmatprep.mubr.f32.mxu0 0.0
      %1290 = vmatmul.mubr.f32.gmra.mrb[0].mxu0 %v268
      %v1291 = vpop.f32.mrb[0].mxu0
      %v1292 = vadd.f32 0.0, %v1291
      %v1293 = vpop.f32.mrb[0].mxu0
      %1294 = vmatprep.mubr.f32.mxu0 0.0
      %1295 = vmatmul.mubr.f32.gmra.mrb[0].mxu0 %v271
      %v1296 = vpop.f32.mrb[0].mxu0
      %v1297 = vadd.f32 0.0, %v1296
      %v1298 = vpop.f32.mrb[0].mxu0
      %1299 = vmatprep.mubr.f32.mxu0 0.0
      %1300 = vmatmul.mubr.f32.gmra.mrb[0].mxu0 %v274
      %v1301 = vpop.f32.mrb[0].mxu0
      %v1302 = vadd.f32 0.0, %v1301
      %v1303 = vpop.f32.mrb[0].mxu0
      %1304 = vmatprep.mubr.f32.mxu0 0.0
      %1305 = vmatmul.mubr.f32.gmra.mrb[0].mxu0 %v277
      %v1306 = vpop.f32.mrb[0].mxu0
      %v1307 = vadd.f32 0.0, %v1306
      %v1308 = vpop.f32.mrb[0].mxu0
      %1309 = vmatprep.mubr.f32.mxu0 0.0
      %1310 = vmatmul.mubr.f32.gmra.mrb[0].mxu0 %v280
      %v1311 = vpop.f32.mrb[0].mxu0
      %v1312 = vadd.f32 0.0, %v1311
      %v1313 = vpop.f32.mrb[0].mxu0
      %1314 = vmatprep.mubr.f32.mxu0 0.0
      %1315 = vmatmul.mubr.f32.gmra.mrb[0].mxu0 %v283
      %v1316 = vpop.f32.mrb[0].mxu0
      %v1317 = vadd.f32 0.0, %v1316
      %v1318 = vpop.f32.mrb[0].mxu0
      %1319 = vmatprep.mubr.f32.mxu0 0.0
      %1320 = vmatmul.mubr.f32.gmra.mrb[0].mxu0 %v286
      %v1321 = vpop.f32.mrb[0].mxu0
      %v1322 = vadd.f32 0.0, %v1321
      %v1323 = vpop.f32.mrb[0].mxu0
      %1324 = vmatprep.mubr.f32.mxu0 0.0
      %1325 = vmatmul.mubr.f32.gmra.mrb[0].mxu0 %v289
      %v1326 = vpop.f32.mrb[0].mxu0
      %v1327 = vadd.f32 0.0, %v1326
      %v1328 = vpop.f32.mrb[0].mxu0
      %1329 = vmatprep.mubr.f32.mxu0 0.0
      %1330 = vmatmul.mubr.f32.gmra.mrb[0].mxu0 %v280
      %v1331 = vpop.f32.mrb[0].mxu0
      %v1332 = vadd.f32 0.0, %v1331
      %v1333 = vpop.f32.mrb[0].mxu0
      %1334 = vmatprep.mubr.f32.mxu0 0.0
      %1335 = vmatmul.mubr.f32.gmra.mrb[0].mxu0 %v283
      %v1336 = vpop.f32.mrb[0].mxu0
      %v1337 = vadd.f32 0.0, %v1336
      %v1338 = vpop.f32.mrb[0].mxu0
      %1339 = vmatprep.mubr.f32.mxu0 0.0
      %1340 = vmatmul.mubr.f32.gmra.mrb[0].mxu0 %v286
      %v1341 = vpop.f32.mrb[0].mxu0
      %v1342 = vadd.f32 0.0, %v1341
      %v1343 = vpop.f32.mrb[0].mxu0
      %1344 = vmatprep.mubr.f32.mxu0 0.0
      %1345 = vmatmul.mubr.f32.gmra.mrb[0].mxu0 %v289
      %v1346 = vpop.f32.mrb[0].mxu0
      %v1347 = vadd.f32 0.0, %v1346
      %v1348 = vpop.f32.mrb[0].mxu0
      %1349 = vmatprep.mubr.f32.mxu0 0.0
      %1350 = vmatmul.mubr.f32.gmra.mrb[0].mxu0 %v292
      %v1351 = vpop.f32.mrb[0].mxu0
      %v1352 = vadd.f32 0.0, %v1351
      %v1353 = vpop.f32.mrb[0].mxu0
      %1354 = vmatprep.mubr.f32.mxu0 0.0
      %1355 = vmatmul.mubr.f32.gmra.mrb[0].mxu0 %v295
      %v1356 = vpop.f32.mrb[0].mxu0
      %v1357 = vadd.f32 0.0, %v1356
      %v1358 = vpop.f32.mrb[0].mxu0
      %1359 = vmatprep.mubr.f32.mxu0 0.0
      %1360 = vmatmul.mubr.f32.gmra.mrb[0].mxu0 %v298
      %v1361 = vpop.f32.mrb[0].mxu0
      %v1362 = vadd.f32 0.0, %v1361
      %v1363 = vpop.f32.mrb[0].mxu0
      %1364 = vmatprep.mubr.f32.mxu0 0.0
      %1365 = vmatmul.mubr.f32.gmra.mrb[0].mxu0 %v301
      %v1366 = vpop.f32.mrb[0].mxu0
      %v1367 = vadd.f32 0.0, %v1366
      %v1368 = vpop.f32.mrb[0].mxu0
      %1369 = vmatprep.mubr.f32.mxu0 0.0
      %1370 = vmatmul.mubr.f32.gmra.mrb[0].mxu0 %v292
      %v1371 = vpop.f32.mrb[0].mxu0
      %v1372 = vadd.f32 0.0, %v1371
      %v1373 = vpop.f32.mrb[0].mxu0
      %1374 = vmatprep.mubr.f32.mxu0 0.0
      %1375 = vmatmul.mubr.f32.gmra.mrb[0].mxu0 %v295
      %v1376 = vpop.f32.mrb[0].mxu0
      %v1377 = vadd.f32 0.0, %v1376
      %v1378 = vpop.f32.mrb[0].mxu0
      %1379 = vmatprep.mubr.f32.mxu0 0.0
      %1380 = vmatmul.mubr.f32.gmra.mrb[0].mxu0 %v298
      %v1381 = vpop.f32.mrb[0].mxu0
      %v1382 = vadd.f32 0.0, %v1381
      %v1383 = vpop.f32.mrb[0].mxu0
      %1384 = vmatprep.mubr.f32.mxu0 0.0
      %1385 = vmatmul.mubr.f32.gmra.mrb[0].mxu0 %v301
      %v1386 = vpop.f32.mrb[0].mxu0
      %v1387 = vadd.f32 0.0, %v1386
      %v1388 = vpop.f32.mrb[0].mxu0
      %1389 = vmatprep.mubr.f32.mxu0 0.0
      %1390 = vmatmul.mubr.f32.gmra.mrb[0].mxu0 %v304
      %v1391 = vpop.f32.mrb[0].mxu0
      %v1392 = vadd.f32 0.0, %v1391
      %v1393 = vpop.f32.mrb[0].mxu0
      %1394 = vmatprep.mubr.f32.mxu0 0.0
      %1395 = vmatmul.mubr.f32.gmra.mrb[0].mxu0 %v307
      %v1396 = vpop.f32.mrb[0].mxu0
      %v1397 = vadd.f32 0.0, %v1396
      %v1398 = vpop.f32.mrb[0].mxu0
      %1399 = vmatprep.mubr.f32.mxu0 0.0
      %1400 = vmatmul.mubr.f32.gmra.mrb[0].mxu0 %v310
      %v1401 = vpop.f32.mrb[0].mxu0
      %v1402 = vadd.f32 0.0, %v1401
      %v1403 = vpop.f32.mrb[0].mxu0
      %1404 = vmatprep.mubr.f32.mxu0 0.0
      %1405 = vmatmul.mubr.f32.gmra.mrb[0].mxu0 %v313
      %v1406 = vpop.f32.mrb[0].mxu0
      %v1407 = vadd.f32 0.0, %v1406
      %v1408 = vpop.f32.mrb[0].mxu0
      %1409 = vmatprep.mubr.f32.mxu0 0.0
      %1410 = vmatmul.mubr.f32.gmra.mrb[0].mxu0 %v304
      %v1411 = vpop.f32.mrb[0].mxu0
      %v1412 = vadd.f32 0.0, %v1411
      %v1413 = vpop.f32.mrb[0].mxu0
      %1414 = vmatprep.mubr.f32.mxu0 0.0
      %1415 = vmatmul.mubr.f32.gmra.mrb[0].mxu0 %v307
      %v1416 = vpop.f32.mrb[0].mxu0
      %v1417 = vadd.f32 0.0, %v1416
      %v1418 = vpop.f32.mrb[0].mxu0
      %1419 = vmatprep.mubr.f32.mxu0 0.0
      %1420 = vmatmul.mubr.f32.gmra.mrb[0].mxu0 %v310
      %v1421 = vpop.f32.mrb[0].mxu0
      %v1422 = vadd.f32 0.0, %v1421
      %v1423 = vpop.f32.mrb[0].mxu0
      %1424 = vmatprep.mubr.f32.mxu0 0.0
      %1425 = vmatmul.mubr.f32.gmra.mrb[0].mxu0 %v313
      %v1426 = vpop.f32.mrb[0].mxu0
      %v1427 = vadd.f32 0.0, %v1426
      %v1428 = vpop.f32.mrb[0].mxu0
      %1429 = vmatprep.mubr.f32.mxu0 0.0
      %1430 = vmatmul.mubr.f32.gmra.mrb[0].mxu0 %v316
      %v1431 = vpop.f32.mrb[0].mxu0
      %v1432 = vadd.f32 0.0, %v1431
      %v1433 = vpop.f32.mrb[0].mxu0
      %1434 = vmatprep.mubr.f32.mxu0 0.0
      %1435 = vmatmul.mubr.f32.gmra.mrb[0].mxu0 %v319
      %v1436 = vpop.f32.mrb[0].mxu0
      %v1437 = vadd.f32 0.0, %v1436
      %v1438 = vpop.f32.mrb[0].mxu0
      %1439 = vmatprep.mubr.f32.mxu0 0.0
      %1440 = vmatmul.mubr.f32.gmra.mrb[0].mxu0 %v322
      %v1441 = vpop.f32.mrb[0].mxu0
      %v1442 = vadd.f32 0.0, %v1441
      %v1443 = vpop.f32.mrb[0].mxu0
      %1444 = vmatprep.mubr.f32.mxu0 0.0
      %1445 = vmatmul.mubr.f32.gmra.mrb[0].mxu0 %v325
      %v1446 = vpop.f32.mrb[0].mxu0
      %v1447 = vadd.f32 0.0, %v1446
      %v1448 = vpop.f32.mrb[0].mxu0
      %1449 = vmatprep.mubr.f32.mxu0 0.0
      %1450 = vmatmul.mubr.f32.gmra.mrb[0].mxu0 %v316
      %v1451 = vpop.f32.mrb[0].mxu0
      %v1452 = vadd.f32 0.0, %v1451
      %v1453 = vpop.f32.mrb[0].mxu0
      %1454 = vmatprep.mubr.f32.mxu0 0.0
      %1455 = vmatmul.mubr.f32.gmra.mrb[0].mxu0 %v319
      %v1456 = vpop.f32.mrb[0].mxu0
      %v1457 = vadd.f32 0.0, %v1456
      %v1458 = vpop.f32.mrb[0].mxu0
      %1459 = vmatprep.mubr.f32.mxu0 0.0
      %1460 = vmatmul.mubr.f32.gmra.mrb[0].mxu0 %v322
      %v1461 = vpop.f32.mrb[0].mxu0
      %v1462 = vadd.f32 0.0, %v1461
      %v1463 = vpop.f32.mrb[0].mxu0
      %1464 = vmatprep.mubr.f32.mxu0 0.0
      %1465 = vmatmul.mubr.f32.gmra.mrb[0].mxu0 %v325
      %v1466 = vpop.f32.mrb[0].mxu0
      %v1467 = vadd.f32 0.0, %v1466
      %v1468 = vpop.f32.mrb[0].mxu0
      %1469 = vmatprep.mubr.f32.mxu0 0.0
      %1470 = vmatmul.mubr.f32.gmra.mrb[0].mxu0 %v328
      %v1471 = vpop.f32.mrb[0].mxu0
      %v1472 = vadd.f32 0.0, %v1471
      %v1473 = vpop.f32.mrb[0].mxu0
      %1474 = vmatprep.mubr.f32.mxu0 0.0
      %1475 = vmatmul.mubr.f32.gmra.mrb[0].mxu0 %v331
      %v1476 = vpop.f32.mrb[0].mxu0
      %v1477 = vadd.f32 0.0, %v1476
      %v1478 = vpop.f32.mrb[0].mxu0
      %1479 = vmatprep.mubr.f32.mxu0 0.0
      %1480 = vmatmul.mubr.f32.gmra.mrb[0].mxu0 %v334
      %v1481 = vpop.f32.mrb[0].mxu0
      %v1482 = vadd.f32 0.0, %v1481
      %v1483 = vpop.f32.mrb[0].mxu0
      %1484 = vmatprep.mubr.f32.mxu0 0.0
      %1485 = vmatmul.mubr.f32.gmra.mrb[0].mxu0 %v337
      %v1486 = vpop.f32.mrb[0].mxu0
      %v1487 = vadd.f32 0.0, %v1486
      %v1488 = vpop.f32.mrb[0].mxu0
      %1489 = vmatprep.mubr.f32.mxu0 0.0
      %1490 = vmatmul.mubr.f32.gmra.mrb[0].mxu0 %v328
      %v1491 = vpop.f32.mrb[0].mxu0
      %v1492 = vadd.f32 0.0, %v1491
      %v1493 = vpop.f32.mrb[0].mxu0
      %1494 = vmatprep.mubr.f32.mxu0 0.0
      %1495 = vmatmul.mubr.f32.gmra.mrb[0].mxu0 %v331
      %v1496 = vpop.f32.mrb[0].mxu0
      %v1497 = vadd.f32 0.0, %v1496
      %v1498 = vpop.f32.mrb[0].mxu0
      %1499 = vmatprep.mubr.f32.mxu0 0.0
      %1500 = vmatmul.mubr.f32.gmra.mrb[0].mxu0 %v334
      %v1501 = vpop.f32.mrb[0].mxu0
      %v1502 = vadd.f32 0.0, %v1501
      %v1503 = vpop.f32.mrb[0].mxu0
      %1504 = vmatprep.mubr.f32.mxu0 0.0
      %1505 = vmatmul.mubr.f32.gmra.mrb[0].mxu0 %v337
      %v1506 = vpop.f32.mrb[0].mxu0
      %v1507 = vadd.f32 0.0, %v1506
      %v1508 = vpop.f32.mrb[0].mxu0
      %1509 = vmatprep.mubr.f32.mxu0 0.0
      %1510 = vmatmul.mubr.f32.gmra.mrb[0].mxu0 %v1131
      %v1511 = vpop.f32.mrb[0].mxu0
      %v1512 = vadd.f32 0.0, %v1511
      %v1513 = vpop.f32.mrb[0].mxu0
      %1514 = vmatprep.mubr.f32.mxu0 0.0
      %1515 = vmatmul.mubr.f32.gmra.mrb[0].mxu0 %v1134
      %v1516 = vpop.f32.mrb[0].mxu0
      %v1517 = vadd.f32 0.0, %v1516
      %v1518 = vpop.f32.mrb[0].mxu0
      %1519 = vmatprep.mubr.f32.mxu0 0.0
      %1520 = vmatmul.mubr.f32.gmra.mrb[0].mxu0 %v1137
      %v1521 = vpop.f32.mrb[0].mxu0
      %v1522 = vadd.f32 0.0, %v1521
      %v1523 = vpop.f32.mrb[0].mxu0
      %1524 = vmatprep.mubr.f32.mxu0 0.0
      %1525 = vmatmul.mubr.f32.gmra.mrb[0].mxu0 %v1140
      %v1526 = vpop.f32.mrb[0].mxu0
      %v1527 = vadd.f32 0.0, %v1526
      %v1528 = vpop.f32.mrb[0].mxu0
      %1529 = vdwg.mxu0
      %v1530 = vadd.f32 %v810, %v1212
      %v1531 = vadd.f32 %v815, %v1217
      %v1532 = vadd.f32 %v820, %v1222
      %v1533 = vadd.f32 %v825, %v1227
      %v1534 = vadd.f32 %v830, %v1232
      %v1535 = vadd.f32 %v835, %v1237
      %v1536 = vadd.f32 %v840, %v1242
      %v1537 = vadd.f32 %v845, %v1247
      %v1538 = vadd.f32 %v850, %v1252
      %v1539 = vadd.f32 %v855, %v1257
      %v1540 = vadd.f32 %v860, %v1262
      %v1541 = vadd.f32 %v865, %v1267
      %v1542 = vadd.f32 %v870, %v1272
      %v1543 = vadd.f32 %v875, %v1277
      %v1544 = vadd.f32 %v880, %v1282
      %v1545 = vadd.f32 %v885, %v1287
      %v1546 = vadd.f32 %v890, %v1292
      %v1547 = vadd.f32 %v895, %v1297
      %v1548 = vadd.f32 %v900, %v1302
      %v1549 = vadd.f32 %v905, %v1307
      %v1550 = vadd.f32 %v910, %v1312
      %v1551 = vadd.f32 %v915, %v1317
      %v1552 = vadd.f32 %v920, %v1322
      %v1553 = vadd.f32 %v925, %v1327
      %v1554 = vadd.f32 %v930, %v1332
      %v1555 = vadd.f32 %v935, %v1337
      %v1556 = vadd.f32 %v940, %v1342
      %v1557 = vadd.f32 %v945, %v1347
      %v1558 = vadd.f32 %v950, %v1352
      %v1559 = vadd.f32 %v955, %v1357
      %v1560 = vadd.f32 %v960, %v1362
      %v1561 = vadd.f32 %v965, %v1367
      %v1562 = vadd.f32 %v970, %v1372
      %v1563 = vadd.f32 %v975, %v1377
      %v1564 = vadd.f32 %v980, %v1382
      %v1565 = vadd.f32 %v985, %v1387
      %v1566 = vadd.f32 %v990, %v1392
      %v1567 = vadd.f32 %v995, %v1397
      %v1568 = vadd.f32 %v1000, %v1402
      %v1569 = vadd.f32 %v1005, %v1407
      %v1570 = vadd.f32 %v1010, %v1412
      %v1571 = vadd.f32 %v1015, %v1417
      %v1572 = vadd.f32 %v1020, %v1422
      %v1573 = vadd.f32 %v1025, %v1427
      %v1574 = vadd.f32 %v1030, %v1432
      %v1575 = vadd.f32 %v1035, %v1437
      %v1576 = vadd.f32 %v1040, %v1442
      %v1577 = vadd.f32 %v1045, %v1447
      %v1578 = vadd.f32 %v1050, %v1452
      %v1579 = vadd.f32 %v1055, %v1457
      %v1580 = vadd.f32 %v1060, %v1462
      %v1581 = vadd.f32 %v1065, %v1467
      %v1582 = vadd.f32 %v1070, %v1472
      %v1583 = vadd.f32 %v1075, %v1477
      %v1584 = vadd.f32 %v1080, %v1482
      %v1585 = vadd.f32 %v1085, %v1487
      %v1586 = vadd.f32 %v1090, %v1492
      %v1587 = vadd.f32 %v1095, %v1497
      %v1588 = vadd.f32 %v1100, %v1502
      %v1589 = vadd.f32 %v1105, %v1507
      %v1590 = vadd.f32 %v1110, %v1512
      %v1591 = vadd.f32 %v1115, %v1517
      %v1592 = vadd.f32 %v1120, %v1522
      %v1593 = vadd.f32 %v1125, %v1527
      %v1594 = vld [vmem:[%s198 + $0x1] sm:$0xff]
      %v1595 = vld [vmem:[%s198 + $0x9] sm:$0xff]
      %v1596 = vld [vmem:[%s198 + $0x11] sm:$0xff]
      %v1597 = vld [vmem:[%s198 + $0x19] sm:$0xff]
      %v1598 = vld [vmem:[%s198 + $0x29] sm:$0xff]
      %v1599 = vld [vmem:[%s198 + $0x31] sm:$0xff]
      %v1600 = vld [vmem:[%s198 + $0x39] sm:$0xff]
      %v1601 = vld [vmem:[%s198 + $0x41] sm:$0xff]
      %v1602 = vld [vmem:[%s198 + $0x51] sm:$0xff]
      %v1603 = vld [vmem:[%s198 + $0x59] sm:$0xff]
      %v1604 = vld [vmem:[%s198 + $0x61] sm:$0xff]
      %v1605 = vld [vmem:[%s198 + $0x69] sm:$0xff]
      %v1606 = vld [vmem:[%s198 + $0x79] sm:$0xff]
      %v1607 = vld [vmem:[%s198 + $0x81] sm:$0xff]
      %v1608 = vld [vmem:[%s198 + $0x89] sm:$0xff]
      %v1609 = vld [vmem:[%s198 + $0x91] sm:$0xff]
      %v1610 = vld [vmem:[%s198 + $0xa1] sm:$0xff]
      %v1611 = vld [vmem:[%s198 + $0xa9] sm:$0xff]
      %v1612 = vld [vmem:[%s198 + $0xb1] sm:$0xff]
      %v1613 = vld [vmem:[%s198 + $0xb9] sm:$0xff]
      %v1614 = vld [vmem:[%s198 + $0xc9] sm:$0xff]
      %v1615 = vld [vmem:[%s198 + $0xd1] sm:$0xff]
      %v1616 = vld [vmem:[%s198 + $0xd9] sm:$0xff]
      %v1617 = vld [vmem:[%s198 + $0xe1] sm:$0xff]
      %v1618 = vld [vmem:[%s198 + $0xf1] sm:$0xff]
      %v1619 = vld [vmem:[%s198 + $0xf9] sm:$0xff]
      %v1620 = vld [vmem:[%s198 + $0x101] sm:$0xff]
      %v1621 = vld [vmem:[%s198 + $0x109] sm:$0xff]
      %v1622 = vld [vmem:[%s198 + $0x119] sm:$0xff]
      %v1623 = vld [vmem:[%s198 + $0x121] sm:$0xff]
      %v1624 = vld [vmem:[%s198 + $0x129] sm:$0xff]
      %v1625 = vld [vmem:[%s198 + $0x131] sm:$0xff]
      %v1626 = vld [vmem:[%s198 + $0x141] sm:$0xff]
      %v1627 = vld [vmem:[%s198 + $0x149] sm:$0xff]
      %v1628 = vld [vmem:[%s198 + $0x151] sm:$0xff]
      %v1629 = vld [vmem:[%s198 + $0x159] sm:$0xff]
      %v1630 = vld [vmem:[%s198 + $0x169] sm:$0xff]
      %v1631 = vld [vmem:[%s198 + $0x171] sm:$0xff]
      %v1632 = vld [vmem:[%s198 + $0x179] sm:$0xff]
      %v1633 = vld [vmem:[%s198 + $0x181] sm:$0xff]
      %s1634 = scalar_lea.vmem %s1, 4
      %v1635 = vld [vmem:[%s1634] sm:$0xf]
      %v1637 = vsel %vm242, %v1594, 0
      %v1640 = vsel %vm242, %v1595, 0
      %v1643 = vsel %vm242, %v1596, 0
      %v1646 = vsel %vm242, %v1597, 0
      %v1649 = vsel %vm242, %v1598, 0
      %v1652 = vsel %vm242, %v1599, 0
      %v1655 = vsel %vm242, %v1600, 0
      %v1658 = vsel %vm242, %v1601, 0
      %v1661 = vsel %vm242, %v1602, 0
      %v1664 = vsel %vm242, %v1603, 0
      %v1667 = vsel %vm242, %v1604, 0
      %v1670 = vsel %vm242, %v1605, 0
      %v1673 = vsel %vm242, %v1606, 0
      %v1676 = vsel %vm242, %v1607, 0
      %v1679 = vsel %vm242, %v1608, 0
      %v1682 = vsel %vm242, %v1609, 0
      %v1685 = vsel %vm242, %v1610, 0
      %v1688 = vsel %vm242, %v1611, 0
      %v1691 = vsel %vm242, %v1612, 0
      %v1694 = vsel %vm242, %v1613, 0
      %v1697 = vsel %vm242, %v1614, 0
      %v1700 = vsel %vm242, %v1615, 0
      %v1703 = vsel %vm242, %v1616, 0
      %v1706 = vsel %vm242, %v1617, 0
      %v1709 = vsel %vm242, %v1618, 0
      %v1712 = vsel %vm242, %v1619, 0
      %v1715 = vsel %vm242, %v1620, 0
      %v1718 = vsel %vm242, %v1621, 0
      %v1721 = vsel %vm242, %v1622, 0
      %v1724 = vsel %vm242, %v1623, 0
      %v1727 = vsel %vm242, %v1624, 0
      %v1730 = vsel %vm242, %v1625, 0
      %v1733 = vsel %vm242, %v1626, 0
      %v1736 = vsel %vm242, %v1627, 0
      %v1739 = vsel %vm242, %v1628, 0
      %v1742 = vsel %vm242, %v1629, 0
      %v1745 = vsel %vm339, %v1635, 0
      %1747 = vmatprep.subr.mxu0 0.0
      %1748 = vmatpush1.msra.mxu0 %v1745
      %1749 = vmatprep.subr.mxu0 0.0
      %1750 = vmatpush1.msra.mxu0 0.0
      %1751 = vmatprep.subr.mxu0 0.0
      %1752 = vmatpush1.msra.mxu0 0.0
      %1753 = vmatprep.subr.mxu0 0.0
      %1754 = vmatpush1.msra.mxu0 0.0
      %1755 = vmatprep.subr.mxu0 0.0
      %1756 = vmatpush1.msra.mxu0 0.0
      %1757 = vmatprep.subr.mxu0 0.0
      %1758 = vmatpush1.msra.mxu0 0.0
      %1759 = vmatprep.subr.mxu0 0.0
      %1760 = vmatpush1.msra.mxu0 0.0
      %1761 = vmatprep.subr.mxu0 0.0
      %1762 = vmatpush1.msra.mxu0 0.0
      %1763 = vmatprep.subr.mxu0 0.0
      %1764 = vmatpush1.msra.mxu0 0.0
      %1765 = vmatprep.subr.mxu0 0.0
      %1766 = vmatpush1.msra.mxu0 0.0
      %1767 = vmatprep.subr.mxu0 0.0
      %1768 = vmatpush1.msra.mxu0 0.0
      %1769 = vmatprep.subr.mxu0 0.0
      %1770 = vmatpush1.msra.mxu0 0.0
      %1771 = vmatprep.subr.mxu0 0.0
      %1772 = vmatpush1.msra.mxu0 0.0
      %1773 = vmatprep.subr.mxu0 0.0
      %1774 = vmatpush1.msra.mxu0 0.0
      %1775 = vmatprep.subr.mxu0 0.0
      %1776 = vmatpush1.msra.mxu0 0.0
      %1777 = vmatprep.subr.mxu0 0.0
      %1778 = vmatpush1.msra.mxu0 0.0
      %1779 = vmatprep.subr.mxu0 0.0
      %1780 = vmatpush1.msra.mxu0 0.0
      %1781 = vmatprep.subr.mxu0 0.0
      %1782 = vmatpush1.msra.mxu0 0.0
      %1783 = vmatprep.subr.mxu0 0.0
      %1784 = vmatpush1.msra.mxu0 0.0
      %1785 = vmatprep.subr.mxu0 0.0
      %1786 = vmatpush1.msra.mxu0 0.0
      %1787 = vmatprep.subr.mxu0 0.0
      %1788 = vmatpush1.msra.mxu0 0.0
      %1789 = vmatprep.subr.mxu0 0.0
      %1790 = vmatpush1.msra.mxu0 0.0
      %1791 = vmatprep.subr.mxu0 0.0
      %1792 = vmatpush1.msra.mxu0 0.0
      %1793 = vmatprep.subr.mxu0 0.0
      %1794 = vmatpush1.msra.mxu0 0.0
      %1795 = vmatprep.subr.mxu0 0.0
      %1796 = vmatpush1.msra.mxu0 0.0
      %1797 = vmatprep.subr.mxu0 0.0
      %1798 = vmatpush1.msra.mxu0 0.0
      %1799 = vmatprep.subr.mxu0 0.0
      %1800 = vmatpush1.msra.mxu0 0.0
      %1801 = vmatprep.subr.mxu0 0.0
      %1802 = vmatpush1.msra.mxu0 0.0
      %1803 = vmatprep.subr.mxu0 0.0
      %1804 = vmatpush1.msra.mxu0 0.0
      %1805 = vmatprep.subr.mxu0 0.0
      %1806 = vmatpush1.msra.mxu0 0.0
      %1807 = vmatprep.subr.mxu0 0.0
      %1808 = vmatpush1.msra.mxu0 0.0
      %1809 = vmatprep.subr.mxu0 0.0
      %1810 = vmatpush1.msra.mxu0 0.0
      %1811 = vmatprep.mubr.f32.mxu0 0.0
      %1812 = vmatmul.mubr.f32.gmra.mrb[0].mxu0 %v1637
      %v1813 = vpop.f32.mrb[0].mxu0
      %v1814 = vadd.f32 0.0, %v1813
      %v1815 = vpop.f32.mrb[0].mxu0
      %1816 = vmatprep.mubr.f32.mxu0 0.0
      %1817 = vmatmul.mubr.f32.gmra.mrb[0].mxu0 %v1640
      %v1818 = vpop.f32.mrb[0].mxu0
      %v1819 = vadd.f32 0.0, %v1818
      %v1820 = vpop.f32.mrb[0].mxu0
      %1821 = vmatprep.mubr.f32.mxu0 0.0
      %1822 = vmatmul.mubr.f32.gmra.mrb[0].mxu0 %v1643
      %v1823 = vpop.f32.mrb[0].mxu0
      %v1824 = vadd.f32 0.0, %v1823
      %v1825 = vpop.f32.mrb[0].mxu0
      %1826 = vmatprep.mubr.f32.mxu0 0.0
      %1827 = vmatmul.mubr.f32.gmra.mrb[0].mxu0 %v1646
      %v1828 = vpop.f32.mrb[0].mxu0
      %v1829 = vadd.f32 0.0, %v1828
      %v1830 = vpop.f32.mrb[0].mxu0
      %1831 = vmatprep.mubr.f32.mxu0 0.0
      %1832 = vmatmul.mubr.f32.gmra.mrb[0].mxu0 %v1649
      %v1833 = vpop.f32.mrb[0].mxu0
      %v1834 = vadd.f32 0.0, %v1833
      %v1835 = vpop.f32.mrb[0].mxu0
      %1836 = vmatprep.mubr.f32.mxu0 0.0
      %1837 = vmatmul.mubr.f32.gmra.mrb[0].mxu0 %v1652
      %v1838 = vpop.f32.mrb[0].mxu0
      %v1839 = vadd.f32 0.0, %v1838
      %v1840 = vpop.f32.mrb[0].mxu0
      %1841 = vmatprep.mubr.f32.mxu0 0.0
      %1842 = vmatmul.mubr.f32.gmra.mrb[0].mxu0 %v1655
      %v1843 = vpop.f32.mrb[0].mxu0
      %v1844 = vadd.f32 0.0, %v1843
      %v1845 = vpop.f32.mrb[0].mxu0
      %1846 = vmatprep.mubr.f32.mxu0 0.0
      %1847 = vmatmul.mubr.f32.gmra.mrb[0].mxu0 %v1658
      %v1848 = vpop.f32.mrb[0].mxu0
      %v1849 = vadd.f32 0.0, %v1848
      %v1850 = vpop.f32.mrb[0].mxu0
      %1851 = vmatprep.mubr.f32.mxu0 0.0
      %1852 = vmatmul.mubr.f32.gmra.mrb[0].mxu0 %v1649
      %v1853 = vpop.f32.mrb[0].mxu0
      %v1854 = vadd.f32 0.0, %v1853
      %v1855 = vpop.f32.mrb[0].mxu0
      %1856 = vmatprep.mubr.f32.mxu0 0.0
      %1857 = vmatmul.mubr.f32.gmra.mrb[0].mxu0 %v1652
      %v1858 = vpop.f32.mrb[0].mxu0
      %v1859 = vadd.f32 0.0, %v1858
      %v1860 = vpop.f32.mrb[0].mxu0
      %1861 = vmatprep.mubr.f32.mxu0 0.0
      %1862 = vmatmul.mubr.f32.gmra.mrb[0].mxu0 %v1655
      %v1863 = vpop.f32.mrb[0].mxu0
      %v1864 = vadd.f32 0.0, %v1863
      %v1865 = vpop.f32.mrb[0].mxu0
      %1866 = vmatprep.mubr.f32.mxu0 0.0
      %1867 = vmatmul.mubr.f32.gmra.mrb[0].mxu0 %v1658
      %v1868 = vpop.f32.mrb[0].mxu0
      %v1869 = vadd.f32 0.0, %v1868
      %v1870 = vpop.f32.mrb[0].mxu0
      %1871 = vmatprep.mubr.f32.mxu0 0.0
      %1872 = vmatmul.mubr.f32.gmra.mrb[0].mxu0 %v1661
      %v1873 = vpop.f32.mrb[0].mxu0
      %v1874 = vadd.f32 0.0, %v1873
      %v1875 = vpop.f32.mrb[0].mxu0
      %1876 = vmatprep.mubr.f32.mxu0 0.0
      %1877 = vmatmul.mubr.f32.gmra.mrb[0].mxu0 %v1664
      %v1878 = vpop.f32.mrb[0].mxu0
      %v1879 = vadd.f32 0.0, %v1878
      %v1880 = vpop.f32.mrb[0].mxu0
      %1881 = vmatprep.mubr.f32.mxu0 0.0
      %1882 = vmatmul.mubr.f32.gmra.mrb[0].mxu0 %v1667
      %v1883 = vpop.f32.mrb[0].mxu0
      %v1884 = vadd.f32 0.0, %v1883
      %v1885 = vpop.f32.mrb[0].mxu0
      %1886 = vmatprep.mubr.f32.mxu0 0.0
      %1887 = vmatmul.mubr.f32.gmra.mrb[0].mxu0 %v1670
      %v1888 = vpop.f32.mrb[0].mxu0
      %v1889 = vadd.f32 0.0, %v1888
      %v1890 = vpop.f32.mrb[0].mxu0
      %1891 = vmatprep.mubr.f32.mxu0 0.0
      %1892 = vmatmul.mubr.f32.gmra.mrb[0].mxu0 %v1661
      %v1893 = vpop.f32.mrb[0].mxu0
      %v1894 = vadd.f32 0.0, %v1893
      %v1895 = vpop.f32.mrb[0].mxu0
      %1896 = vmatprep.mubr.f32.mxu0 0.0
      %1897 = vmatmul.mubr.f32.gmra.mrb[0].mxu0 %v1664
      %v1898 = vpop.f32.mrb[0].mxu0
      %v1899 = vadd.f32 0.0, %v1898
      %v1900 = vpop.f32.mrb[0].mxu0
      %1901 = vmatprep.mubr.f32.mxu0 0.0
      %1902 = vmatmul.mubr.f32.gmra.mrb[0].mxu0 %v1667
      %v1903 = vpop.f32.mrb[0].mxu0
      %v1904 = vadd.f32 0.0, %v1903
      %v1905 = vpop.f32.mrb[0].mxu0
      %1906 = vmatprep.mubr.f32.mxu0 0.0
      %1907 = vmatmul.mubr.f32.gmra.mrb[0].mxu0 %v1670
      %v1908 = vpop.f32.mrb[0].mxu0
      %v1909 = vadd.f32 0.0, %v1908
      %v1910 = vpop.f32.mrb[0].mxu0
      %1911 = vmatprep.mubr.f32.mxu0 0.0
      %1912 = vmatmul.mubr.f32.gmra.mrb[0].mxu0 %v1673
      %v1913 = vpop.f32.mrb[0].mxu0
      %v1914 = vadd.f32 0.0, %v1913
      %v1915 = vpop.f32.mrb[0].mxu0
      %1916 = vmatprep.mubr.f32.mxu0 0.0
      %1917 = vmatmul.mubr.f32.gmra.mrb[0].mxu0 %v1676
      %v1918 = vpop.f32.mrb[0].mxu0
      %v1919 = vadd.f32 0.0, %v1918
      %v1920 = vpop.f32.mrb[0].mxu0
      %1921 = vmatprep.mubr.f32.mxu0 0.0
      %1922 = vmatmul.mubr.f32.gmra.mrb[0].mxu0 %v1679
      %v1923 = vpop.f32.mrb[0].mxu0
      %v1924 = vadd.f32 0.0, %v1923
      %v1925 = vpop.f32.mrb[0].mxu0
      %1926 = vmatprep.mubr.f32.mxu0 0.0
      %1927 = vmatmul.mubr.f32.gmra.mrb[0].mxu0 %v1682
      %v1928 = vpop.f32.mrb[0].mxu0
      %v1929 = vadd.f32 0.0, %v1928
      %v1930 = vpop.f32.mrb[0].mxu0
      %1931 = vmatprep.mubr.f32.mxu0 0.0
      %1932 = vmatmul.mubr.f32.gmra.mrb[0].mxu0 %v1673
      %v1933 = vpop.f32.mrb[0].mxu0
      %v1934 = vadd.f32 0.0, %v1933
      %v1935 = vpop.f32.mrb[0].mxu0
      %1936 = vmatprep.mubr.f32.mxu0 0.0
      %1937 = vmatmul.mubr.f32.gmra.mrb[0].mxu0 %v1676
      %v1938 = vpop.f32.mrb[0].mxu0
      %v1939 = vadd.f32 0.0, %v1938
      %v1940 = vpop.f32.mrb[0].mxu0
      %1941 = vmatprep.mubr.f32.mxu0 0.0
      %1942 = vmatmul.mubr.f32.gmra.mrb[0].mxu0 %v1679
      %v1943 = vpop.f32.mrb[0].mxu0
      %v1944 = vadd.f32 0.0, %v1943
      %v1945 = vpop.f32.mrb[0].mxu0
      %1946 = vmatprep.mubr.f32.mxu0 0.0
      %1947 = vmatmul.mubr.f32.gmra.mrb[0].mxu0 %v1682
      %v1948 = vpop.f32.mrb[0].mxu0
      %v1949 = vadd.f32 0.0, %v1948
      %v1950 = vpop.f32.mrb[0].mxu0
      %1951 = vmatprep.mubr.f32.mxu0 0.0
      %1952 = vmatmul.mubr.f32.gmra.mrb[0].mxu0 %v1685
      %v1953 = vpop.f32.mrb[0].mxu0
      %v1954 = vadd.f32 0.0, %v1953
      %v1955 = vpop.f32.mrb[0].mxu0
      %1956 = vmatprep.mubr.f32.mxu0 0.0
      %1957 = vmatmul.mubr.f32.gmra.mrb[0].mxu0 %v1688
      %v1958 = vpop.f32.mrb[0].mxu0
      %v1959 = vadd.f32 0.0, %v1958
      %v1960 = vpop.f32.mrb[0].mxu0
      %1961 = vmatprep.mubr.f32.mxu0 0.0
      %1962 = vmatmul.mubr.f32.gmra.mrb[0].mxu0 %v1691
      %v1963 = vpop.f32.mrb[0].mxu0
      %v1964 = vadd.f32 0.0, %v1963
      %v1965 = vpop.f32.mrb[0].mxu0
      %1966 = vmatprep.mubr.f32.mxu0 0.0
      %1967 = vmatmul.mubr.f32.gmra.mrb[0].mxu0 %v1694
      %v1968 = vpop.f32.mrb[0].mxu0
      %v1969 = vadd.f32 0.0, %v1968
      %v1970 = vpop.f32.mrb[0].mxu0
      %1971 = vmatprep.mubr.f32.mxu0 0.0
      %1972 = vmatmul.mubr.f32.gmra.mrb[0].mxu0 %v1685
      %v1973 = vpop.f32.mrb[0].mxu0
      %v1974 = vadd.f32 0.0, %v1973
      %v1975 = vpop.f32.mrb[0].mxu0
      %1976 = vmatprep.mubr.f32.mxu0 0.0
      %1977 = vmatmul.mubr.f32.gmra.mrb[0].mxu0 %v1688
      %v1978 = vpop.f32.mrb[0].mxu0
      %v1979 = vadd.f32 0.0, %v1978
      %v1980 = vpop.f32.mrb[0].mxu0
      %1981 = vmatprep.mubr.f32.mxu0 0.0
      %1982 = vmatmul.mubr.f32.gmra.mrb[0].mxu0 %v1691
      %v1983 = vpop.f32.mrb[0].mxu0
      %v1984 = vadd.f32 0.0, %v1983
      %v1985 = vpop.f32.mrb[0].mxu0
      %1986 = vmatprep.mubr.f32.mxu0 0.0
      %1987 = vmatmul.mubr.f32.gmra.mrb[0].mxu0 %v1694
      %v1988 = vpop.f32.mrb[0].mxu0
      %v1989 = vadd.f32 0.0, %v1988
      %v1990 = vpop.f32.mrb[0].mxu0
      %1991 = vmatprep.mubr.f32.mxu0 0.0
      %1992 = vmatmul.mubr.f32.gmra.mrb[0].mxu0 %v1697
      %v1993 = vpop.f32.mrb[0].mxu0
      %v1994 = vadd.f32 0.0, %v1993
      %v1995 = vpop.f32.mrb[0].mxu0
      %1996 = vmatprep.mubr.f32.mxu0 0.0
      %1997 = vmatmul.mubr.f32.gmra.mrb[0].mxu0 %v1700
      %v1998 = vpop.f32.mrb[0].mxu0
      %v1999 = vadd.f32 0.0, %v1998
      %v2000 = vpop.f32.mrb[0].mxu0
      %2001 = vmatprep.mubr.f32.mxu0 0.0
      %2002 = vmatmul.mubr.f32.gmra.mrb[0].mxu0 %v1703
      %v2003 = vpop.f32.mrb[0].mxu0
      %v2004 = vadd.f32 0.0, %v2003
      %v2005 = vpop.f32.mrb[0].mxu0
      %2006 = vmatprep.mubr.f32.mxu0 0.0
      %2007 = vmatmul.mubr.f32.gmra.mrb[0].mxu0 %v1706
      %v2008 = vpop.f32.mrb[0].mxu0
      %v2009 = vadd.f32 0.0, %v2008
      %v2010 = vpop.f32.mrb[0].mxu0
      %2011 = vmatprep.mubr.f32.mxu0 0.0
      %2012 = vmatmul.mubr.f32.gmra.mrb[0].mxu0 %v1697
      %v2013 = vpop.f32.mrb[0].mxu0
      %v2014 = vadd.f32 0.0, %v2013
      %v2015 = vpop.f32.mrb[0].mxu0
      %2016 = vmatprep.mubr.f32.mxu0 0.0
      %2017 = vmatmul.mubr.f32.gmra.mrb[0].mxu0 %v1700
      %v2018 = vpop.f32.mrb[0].mxu0
      %v2019 = vadd.f32 0.0, %v2018
      %v2020 = vpop.f32.mrb[0].mxu0
      %2021 = vmatprep.mubr.f32.mxu0 0.0
      %2022 = vmatmul.mubr.f32.gmra.mrb[0].mxu0 %v1703
      %v2023 = vpop.f32.mrb[0].mxu0
      %v2024 = vadd.f32 0.0, %v2023
      %v2025 = vpop.f32.mrb[0].mxu0
      %2026 = vmatprep.mubr.f32.mxu0 0.0
      %2027 = vmatmul.mubr.f32.gmra.mrb[0].mxu0 %v1706
      %v2028 = vpop.f32.mrb[0].mxu0
      %v2029 = vadd.f32 0.0, %v2028
      %v2030 = vpop.f32.mrb[0].mxu0
      %2031 = vmatprep.mubr.f32.mxu0 0.0
      %2032 = vmatmul.mubr.f32.gmra.mrb[0].mxu0 %v1709
      %v2033 = vpop.f32.mrb[0].mxu0
      %v2034 = vadd.f32 0.0, %v2033
      %v2035 = vpop.f32.mrb[0].mxu0
      %2036 = vmatprep.mubr.f32.mxu0 0.0
      %2037 = vmatmul.mubr.f32.gmra.mrb[0].mxu0 %v1712
      %v2038 = vpop.f32.mrb[0].mxu0
      %v2039 = vadd.f32 0.0, %v2038
      %v2040 = vpop.f32.mrb[0].mxu0
      %2041 = vmatprep.mubr.f32.mxu0 0.0
      %2042 = vmatmul.mubr.f32.gmra.mrb[0].mxu0 %v1715
      %v2043 = vpop.f32.mrb[0].mxu0
      %v2044 = vadd.f32 0.0, %v2043
      %v2045 = vpop.f32.mrb[0].mxu0
      %2046 = vmatprep.mubr.f32.mxu0 0.0
      %2047 = vmatmul.mubr.f32.gmra.mrb[0].mxu0 %v1718
      %v2048 = vpop.f32.mrb[0].mxu0
      %v2049 = vadd.f32 0.0, %v2048
      %v2050 = vpop.f32.mrb[0].mxu0
      %2051 = vmatprep.mubr.f32.mxu0 0.0
      %2052 = vmatmul.mubr.f32.gmra.mrb[0].mxu0 %v1709
      %v2053 = vpop.f32.mrb[0].mxu0
      %v2054 = vadd.f32 0.0, %v2053
      %v2055 = vpop.f32.mrb[0].mxu0
      %2056 = vmatprep.mubr.f32.mxu0 0.0
      %2057 = vmatmul.mubr.f32.gmra.mrb[0].mxu0 %v1712
      %v2058 = vpop.f32.mrb[0].mxu0
      %v2059 = vadd.f32 0.0, %v2058
      %v2060 = vpop.f32.mrb[0].mxu0
      %2061 = vmatprep.mubr.f32.mxu0 0.0
      %2062 = vmatmul.mubr.f32.gmra.mrb[0].mxu0 %v1715
      %v2063 = vpop.f32.mrb[0].mxu0
      %v2064 = vadd.f32 0.0, %v2063
      %v2065 = vpop.f32.mrb[0].mxu0
      %2066 = vmatprep.mubr.f32.mxu0 0.0
      %2067 = vmatmul.mubr.f32.gmra.mrb[0].mxu0 %v1718
      %v2068 = vpop.f32.mrb[0].mxu0
      %v2069 = vadd.f32 0.0, %v2068
      %v2070 = vpop.f32.mrb[0].mxu0
      %2071 = vmatprep.mubr.f32.mxu0 0.0
      %2072 = vmatmul.mubr.f32.gmra.mrb[0].mxu0 %v1721
      %v2073 = vpop.f32.mrb[0].mxu0
      %v2074 = vadd.f32 0.0, %v2073
      %v2075 = vpop.f32.mrb[0].mxu0
      %2076 = vmatprep.mubr.f32.mxu0 0.0
      %2077 = vmatmul.mubr.f32.gmra.mrb[0].mxu0 %v1724
      %v2078 = vpop.f32.mrb[0].mxu0
      %v2079 = vadd.f32 0.0, %v2078
      %v2080 = vpop.f32.mrb[0].mxu0
      %2081 = vmatprep.mubr.f32.mxu0 0.0
      %2082 = vmatmul.mubr.f32.gmra.mrb[0].mxu0 %v1727
      %v2083 = vpop.f32.mrb[0].mxu0
      %v2084 = vadd.f32 0.0, %v2083
      %v2085 = vpop.f32.mrb[0].mxu0
      %2086 = vmatprep.mubr.f32.mxu0 0.0
      %2087 = vmatmul.mubr.f32.gmra.mrb[0].mxu0 %v1730
      %v2088 = vpop.f32.mrb[0].mxu0
      %v2089 = vadd.f32 0.0, %v2088
      %v2090 = vpop.f32.mrb[0].mxu0
      %2091 = vmatprep.mubr.f32.mxu0 0.0
      %2092 = vmatmul.mubr.f32.gmra.mrb[0].mxu0 %v1721
      %v2093 = vpop.f32.mrb[0].mxu0
      %v2094 = vadd.f32 0.0, %v2093
      %v2095 = vpop.f32.mrb[0].mxu0
      %2096 = vmatprep.mubr.f32.mxu0 0.0
      %2097 = vmatmul.mubr.f32.gmra.mrb[0].mxu0 %v1724
      %v2098 = vpop.f32.mrb[0].mxu0
      %v2099 = vadd.f32 0.0, %v2098
      %v2100 = vpop.f32.mrb[0].mxu0
      %2101 = vmatprep.mubr.f32.mxu0 0.0
      %2102 = vmatmul.mubr.f32.gmra.mrb[0].mxu0 %v1727
      %v2103 = vpop.f32.mrb[0].mxu0
      %v2104 = vadd.f32 0.0, %v2103
      %v2105 = vpop.f32.mrb[0].mxu0
      %2106 = vmatprep.mubr.f32.mxu0 0.0
      %2107 = vmatmul.mubr.f32.gmra.mrb[0].mxu0 %v1730
      %v2108 = vpop.f32.mrb[0].mxu0
      %v2109 = vadd.f32 0.0, %v2108
      %v2110 = vpop.f32.mrb[0].mxu0
      %2111 = vmatprep.mubr.f32.mxu0 0.0
      %2112 = vmatmul.mubr.f32.gmra.mrb[0].mxu0 %v1733
      %v2113 = vpop.f32.mrb[0].mxu0
      %v2114 = vadd.f32 0.0, %v2113
      %v2115 = vpop.f32.mrb[0].mxu0
      %2116 = vmatprep.mubr.f32.mxu0 0.0
      %2117 = vmatmul.mubr.f32.gmra.mrb[0].mxu0 %v1736
      %v2118 = vpop.f32.mrb[0].mxu0
      %v2119 = vadd.f32 0.0, %v2118
      %v2120 = vpop.f32.mrb[0].mxu0
      %2121 = vmatprep.mubr.f32.mxu0 0.0
      %2122 = vmatmul.mubr.f32.gmra.mrb[0].mxu0 %v1739
      %v2123 = vpop.f32.mrb[0].mxu0
      %v2124 = vadd.f32 0.0, %v2123
      %v2125 = vpop.f32.mrb[0].mxu0
      %2126 = vmatprep.mubr.f32.mxu0 0.0
      %2127 = vmatmul.mubr.f32.gmra.mrb[0].mxu0 %v1742
      %v2128 = vpop.f32.mrb[0].mxu0
      %v2129 = vadd.f32 0.0, %v2128
      %v2130 = vpop.f32.mrb[0].mxu0
      %2131 = vdwg.mxu0
      %v2132 = vadd.f32 %v1530, %v1814
      %v2133 = vadd.f32 %v1531, %v1819
      %v2134 = vadd.f32 %v1532, %v1824
      %v2135 = vadd.f32 %v1533, %v1829
      %v2136 = vadd.f32 %v1534, %v1834
      %v2137 = vadd.f32 %v1535, %v1839
      %v2138 = vadd.f32 %v1536, %v1844
      %v2139 = vadd.f32 %v1537, %v1849
      %v2140 = vadd.f32 %v1538, %v1854
      %v2141 = vadd.f32 %v1539, %v1859
      %v2142 = vadd.f32 %v1540, %v1864
      %v2143 = vadd.f32 %v1541, %v1869
      %v2144 = vadd.f32 %v1542, %v1874
      %v2145 = vadd.f32 %v1543, %v1879
      %v2146 = vadd.f32 %v1544, %v1884
      %v2147 = vadd.f32 %v1545, %v1889
      %v2148 = vadd.f32 %v1546, %v1894
      %v2149 = vadd.f32 %v1547, %v1899
      %v2150 = vadd.f32 %v1548, %v1904
      %v2151 = vadd.f32 %v1549, %v1909
      %v2152 = vadd.f32 %v1550, %v1914
      %v2153 = vadd.f32 %v1551, %v1919
      %v2154 = vadd.f32 %v1552, %v1924
      %v2155 = vadd.f32 %v1553, %v1929
      %v2156 = vadd.f32 %v1554, %v1934
      %v2157 = vadd.f32 %v1555, %v1939
      %v2158 = vadd.f32 %v1556, %v1944
      %v2159 = vadd.f32 %v1557, %v1949
      %v2160 = vadd.f32 %v1558, %v1954
      %v2161 = vadd.f32 %v1559, %v1959
      %v2162 = vadd.f32 %v1560, %v1964
      %v2163 = vadd.f32 %v1561, %v1969
      %v2164 = vadd.f32 %v1562, %v1974
      %v2165 = vadd.f32 %v1563, %v1979
      %v2166 = vadd.f32 %v1564, %v1984
      %v2167 = vadd.f32 %v1565, %v1989
      %v2168 = vadd.f32 %v1566, %v1994
      %v2169 = vadd.f32 %v1567, %v1999
      %v2170 = vadd.f32 %v1568, %v2004
      %v2171 = vadd.f32 %v1569, %v2009
      %v2172 = vadd.f32 %v1570, %v2014
      %v2173 = vadd.f32 %v1571, %v2019
      %v2174 = vadd.f32 %v1572, %v2024
      %v2175 = vadd.f32 %v1573, %v2029
      %v2176 = vadd.f32 %v1574, %v2034
      %v2177 = vadd.f32 %v1575, %v2039
      %v2178 = vadd.f32 %v1576, %v2044
      %v2179 = vadd.f32 %v1577, %v2049
      %v2180 = vadd.f32 %v1578, %v2054
      %v2181 = vadd.f32 %v1579, %v2059
      %v2182 = vadd.f32 %v1580, %v2064
      %v2183 = vadd.f32 %v1581, %v2069
      %v2184 = vadd.f32 %v1582, %v2074
      %v2185 = vadd.f32 %v1583, %v2079
      %v2186 = vadd.f32 %v1584, %v2084
      %v2187 = vadd.f32 %v1585, %v2089
      %v2188 = vadd.f32 %v1586, %v2094
      %v2189 = vadd.f32 %v1587, %v2099
      %v2190 = vadd.f32 %v1588, %v2104
      %v2191 = vadd.f32 %v1589, %v2109
      %v2192 = vadd.f32 %v1590, %v2114
      %v2193 = vadd.f32 %v1591, %v2119
      %v2194 = vadd.f32 %v1592, %v2124
      %v2195 = vadd.f32 %v1593, %v2129
      %s2196 = scalar_lea.vmem %s1, 16
      %v2197 = vld [vmem:[%s2196] sm:$0xf]
      %v2199 = vsel %vm339, %v2197, 0
      %2201 = vmatprep.subr.mxu0 0.0
      %2202 = vmatpush1.msra.mxu0 %v2199
      %2203 = vmatprep.subr.mxu0 0.0
      %2204 = vmatpush1.msra.mxu0 0.0
      %2205 = vmatprep.subr.mxu0 0.0
      %2206 = vmatpush1.msra.mxu0 0.0
      %2207 = vmatprep.subr.mxu0 0.0
      %2208 = vmatpush1.msra.mxu0 0.0
      %2209 = vmatprep.subr.mxu0 0.0
      %2210 = vmatpush1.msra.mxu0 0.0
      %2211 = vmatprep.subr.mxu0 0.0
      %2212 = vmatpush1.msra.mxu0 0.0
      %2213 = vmatprep.subr.mxu0 0.0
      %2214 = vmatpush1.msra.mxu0 0.0
      %2215 = vmatprep.subr.mxu0 0.0
      %2216 = vmatpush1.msra.mxu0 0.0
      %2217 = vmatprep.subr.mxu0 0.0
      %2218 = vmatpush1.msra.mxu0 0.0
      %2219 = vmatprep.subr.mxu0 0.0
      %2220 = vmatpush1.msra.mxu0 0.0
      %2221 = vmatprep.subr.mxu0 0.0
      %2222 = vmatpush1.msra.mxu0 0.0
      %2223 = vmatprep.subr.mxu0 0.0
      %2224 = vmatpush1.msra.mxu0 0.0
      %2225 = vmatprep.subr.mxu0 0.0
      %2226 = vmatpush1.msra.mxu0 0.0
      %2227 = vmatprep.subr.mxu0 0.0
      %2228 = vmatpush1.msra.mxu0 0.0
      %2229 = vmatprep.subr.mxu0 0.0
      %2230 = vmatpush1.msra.mxu0 0.0
      %2231 = vmatprep.subr.mxu0 0.0
      %2232 = vmatpush1.msra.mxu0 0.0
      %2233 = vmatprep.subr.mxu0 0.0
      %2234 = vmatpush1.msra.mxu0 0.0
      %2235 = vmatprep.subr.mxu0 0.0
      %2236 = vmatpush1.msra.mxu0 0.0
      %2237 = vmatprep.subr.mxu0 0.0
      %2238 = vmatpush1.msra.mxu0 0.0
      %2239 = vmatprep.subr.mxu0 0.0
      %2240 = vmatpush1.msra.mxu0 0.0
      %2241 = vmatprep.subr.mxu0 0.0
      %2242 = vmatpush1.msra.mxu0 0.0
      %2243 = vmatprep.subr.mxu0 0.0
      %2244 = vmatpush1.msra.mxu0 0.0
      %2245 = vmatprep.subr.mxu0 0.0
      %2246 = vmatpush1.msra.mxu0 0.0
      %2247 = vmatprep.subr.mxu0 0.0
      %2248 = vmatpush1.msra.mxu0 0.0
      %2249 = vmatprep.subr.mxu0 0.0
      %2250 = vmatpush1.msra.mxu0 0.0
      %2251 = vmatprep.subr.mxu0 0.0
      %2252 = vmatpush1.msra.mxu0 0.0
      %2253 = vmatprep.subr.mxu0 0.0
      %2254 = vmatpush1.msra.mxu0 0.0
      %2255 = vmatprep.subr.mxu0 0.0
      %2256 = vmatpush1.msra.mxu0 0.0
      %2257 = vmatprep.subr.mxu0 0.0
      %2258 = vmatpush1.msra.mxu0 0.0
      %2259 = vmatprep.subr.mxu0 0.0
      %2260 = vmatpush1.msra.mxu0 0.0
      %2261 = vmatprep.subr.mxu0 0.0
      %2262 = vmatpush1.msra.mxu0 0.0
      %2263 = vmatprep.subr.mxu0 0.0
      %2264 = vmatpush1.msra.mxu0 0.0
      %2265 = vmatprep.mubr.f32.mxu0 0.0
      %2266 = vmatmul.mubr.f32.gmra.mrb[0].mxu0 %v1649
      %v2267 = vpop.f32.mrb[0].mxu0
      %v2268 = vadd.f32 0.0, %v2267
      %v2269 = vpop.f32.mrb[0].mxu0
      %2270 = vmatprep.mubr.f32.mxu0 0.0
      %2271 = vmatmul.mubr.f32.gmra.mrb[0].mxu0 %v1652
      %v2272 = vpop.f32.mrb[0].mxu0
      %v2273 = vadd.f32 0.0, %v2272
      %v2274 = vpop.f32.mrb[0].mxu0
      %2275 = vmatprep.mubr.f32.mxu0 0.0
      %2276 = vmatmul.mubr.f32.gmra.mrb[0].mxu0 %v1655
      %v2277 = vpop.f32.mrb[0].mxu0
      %v2278 = vadd.f32 0.0, %v2277
      %v2279 = vpop.f32.mrb[0].mxu0
      %2280 = vmatprep.mubr.f32.mxu0 0.0
      %2281 = vmatmul.mubr.f32.gmra.mrb[0].mxu0 %v1658
      %v2282 = vpop.f32.mrb[0].mxu0
      %v2283 = vadd.f32 0.0, %v2282
      %v2284 = vpop.f32.mrb[0].mxu0
      %2285 = vmatprep.mubr.f32.mxu0 0.0
      %2286 = vmatmul.mubr.f32.gmra.mrb[0].mxu0 %v1649
      %v2287 = vpop.f32.mrb[0].mxu0
      %v2288 = vadd.f32 0.0, %v2287
      %v2289 = vpop.f32.mrb[0].mxu0
      %2290 = vmatprep.mubr.f32.mxu0 0.0
      %2291 = vmatmul.mubr.f32.gmra.mrb[0].mxu0 %v1652
      %v2292 = vpop.f32.mrb[0].mxu0
      %v2293 = vadd.f32 0.0, %v2292
      %v2294 = vpop.f32.mrb[0].mxu0
      %2295 = vmatprep.mubr.f32.mxu0 0.0
      %2296 = vmatmul.mubr.f32.gmra.mrb[0].mxu0 %v1655
      %v2297 = vpop.f32.mrb[0].mxu0
      %v2298 = vadd.f32 0.0, %v2297
      %v2299 = vpop.f32.mrb[0].mxu0
      %2300 = vmatprep.mubr.f32.mxu0 0.0
      %2301 = vmatmul.mubr.f32.gmra.mrb[0].mxu0 %v1658
      %v2302 = vpop.f32.mrb[0].mxu0
      %v2303 = vadd.f32 0.0, %v2302
      %v2304 = vpop.f32.mrb[0].mxu0
      %2305 = vmatprep.mubr.f32.mxu0 0.0
      %2306 = vmatmul.mubr.f32.gmra.mrb[0].mxu0 %v1661
      %v2307 = vpop.f32.mrb[0].mxu0
      %v2308 = vadd.f32 0.0, %v2307
      %v2309 = vpop.f32.mrb[0].mxu0
      %2310 = vmatprep.mubr.f32.mxu0 0.0
      %2311 = vmatmul.mubr.f32.gmra.mrb[0].mxu0 %v1664
      %v2312 = vpop.f32.mrb[0].mxu0
      %v2313 = vadd.f32 0.0, %v2312
      %v2314 = vpop.f32.mrb[0].mxu0
      %2315 = vmatprep.mubr.f32.mxu0 0.0
      %2316 = vmatmul.mubr.f32.gmra.mrb[0].mxu0 %v1667
      %v2317 = vpop.f32.mrb[0].mxu0
      %v2318 = vadd.f32 0.0, %v2317
      %v2319 = vpop.f32.mrb[0].mxu0
      %2320 = vmatprep.mubr.f32.mxu0 0.0
      %2321 = vmatmul.mubr.f32.gmra.mrb[0].mxu0 %v1670
      %v2322 = vpop.f32.mrb[0].mxu0
      %v2323 = vadd.f32 0.0, %v2322
      %v2324 = vpop.f32.mrb[0].mxu0
      %2325 = vmatprep.mubr.f32.mxu0 0.0
      %2326 = vmatmul.mubr.f32.gmra.mrb[0].mxu0 %v1661
      %v2327 = vpop.f32.mrb[0].mxu0
      %v2328 = vadd.f32 0.0, %v2327
      %v2329 = vpop.f32.mrb[0].mxu0
      %2330 = vmatprep.mubr.f32.mxu0 0.0
      %2331 = vmatmul.mubr.f32.gmra.mrb[0].mxu0 %v1664
      %v2332 = vpop.f32.mrb[0].mxu0
      %v2333 = vadd.f32 0.0, %v2332
      %v2334 = vpop.f32.mrb[0].mxu0
      %2335 = vmatprep.mubr.f32.mxu0 0.0
      %2336 = vmatmul.mubr.f32.gmra.mrb[0].mxu0 %v1667
      %v2337 = vpop.f32.mrb[0].mxu0
      %v2338 = vadd.f32 0.0, %v2337
      %v2339 = vpop.f32.mrb[0].mxu0
      %2340 = vmatprep.mubr.f32.mxu0 0.0
      %2341 = vmatmul.mubr.f32.gmra.mrb[0].mxu0 %v1670
      %v2342 = vpop.f32.mrb[0].mxu0
      %v2343 = vadd.f32 0.0, %v2342
      %v2344 = vpop.f32.mrb[0].mxu0
      %2345 = vmatprep.mubr.f32.mxu0 0.0
      %2346 = vmatmul.mubr.f32.gmra.mrb[0].mxu0 %v1673
      %v2347 = vpop.f32.mrb[0].mxu0
      %v2348 = vadd.f32 0.0, %v2347
      %v2349 = vpop.f32.mrb[0].mxu0
      %2350 = vmatprep.mubr.f32.mxu0 0.0
      %2351 = vmatmul.mubr.f32.gmra.mrb[0].mxu0 %v1676
      %v2352 = vpop.f32.mrb[0].mxu0
      %v2353 = vadd.f32 0.0, %v2352
      %v2354 = vpop.f32.mrb[0].mxu0
      %2355 = vmatprep.mubr.f32.mxu0 0.0
      %2356 = vmatmul.mubr.f32.gmra.mrb[0].mxu0 %v1679
      %v2357 = vpop.f32.mrb[0].mxu0
      %v2358 = vadd.f32 0.0, %v2357
      %v2359 = vpop.f32.mrb[0].mxu0
      %2360 = vmatprep.mubr.f32.mxu0 0.0
      %2361 = vmatmul.mubr.f32.gmra.mrb[0].mxu0 %v1682
      %v2362 = vpop.f32.mrb[0].mxu0
      %v2363 = vadd.f32 0.0, %v2362
      %v2364 = vpop.f32.mrb[0].mxu0
      %2365 = vmatprep.mubr.f32.mxu0 0.0
      %2366 = vmatmul.mubr.f32.gmra.mrb[0].mxu0 %v1673
      %v2367 = vpop.f32.mrb[0].mxu0
      %v2368 = vadd.f32 0.0, %v2367
      %v2369 = vpop.f32.mrb[0].mxu0
      %2370 = vmatprep.mubr.f32.mxu0 0.0
      %2371 = vmatmul.mubr.f32.gmra.mrb[0].mxu0 %v1676
      %v2372 = vpop.f32.mrb[0].mxu0
      %v2373 = vadd.f32 0.0, %v2372
      %v2374 = vpop.f32.mrb[0].mxu0
      %2375 = vmatprep.mubr.f32.mxu0 0.0
      %2376 = vmatmul.mubr.f32.gmra.mrb[0].mxu0 %v1679
      %v2377 = vpop.f32.mrb[0].mxu0
      %v2378 = vadd.f32 0.0, %v2377
      %v2379 = vpop.f32.mrb[0].mxu0
      %2380 = vmatprep.mubr.f32.mxu0 0.0
      %2381 = vmatmul.mubr.f32.gmra.mrb[0].mxu0 %v1682
      %v2382 = vpop.f32.mrb[0].mxu0
      %v2383 = vadd.f32 0.0, %v2382
      %v2384 = vpop.f32.mrb[0].mxu0
      %2385 = vmatprep.mubr.f32.mxu0 0.0
      %2386 = vmatmul.mubr.f32.gmra.mrb[0].mxu0 %v1685
      %v2387 = vpop.f32.mrb[0].mxu0
      %v2388 = vadd.f32 0.0, %v2387
      %v2389 = vpop.f32.mrb[0].mxu0
      %2390 = vmatprep.mubr.f32.mxu0 0.0
      %2391 = vmatmul.mubr.f32.gmra.mrb[0].mxu0 %v1688
      %v2392 = vpop.f32.mrb[0].mxu0
      %v2393 = vadd.f32 0.0, %v2392
      %v2394 = vpop.f32.mrb[0].mxu0
      %2395 = vmatprep.mubr.f32.mxu0 0.0
      %2396 = vmatmul.mubr.f32.gmra.mrb[0].mxu0 %v1691
      %v2397 = vpop.f32.mrb[0].mxu0
      %v2398 = vadd.f32 0.0, %v2397
      %v2399 = vpop.f32.mrb[0].mxu0
      %2400 = vmatprep.mubr.f32.mxu0 0.0
      %2401 = vmatmul.mubr.f32.gmra.mrb[0].mxu0 %v1694
      %v2402 = vpop.f32.mrb[0].mxu0
      %v2403 = vadd.f32 0.0, %v2402
      %v2404 = vpop.f32.mrb[0].mxu0
      %2405 = vmatprep.mubr.f32.mxu0 0.0
      %2406 = vmatmul.mubr.f32.gmra.mrb[0].mxu0 %v1685
      %v2407 = vpop.f32.mrb[0].mxu0
      %v2408 = vadd.f32 0.0, %v2407
      %v2409 = vpop.f32.mrb[0].mxu0
      %2410 = vmatprep.mubr.f32.mxu0 0.0
      %2411 = vmatmul.mubr.f32.gmra.mrb[0].mxu0 %v1688
      %v2412 = vpop.f32.mrb[0].mxu0
      %v2413 = vadd.f32 0.0, %v2412
      %v2414 = vpop.f32.mrb[0].mxu0
      %2415 = vmatprep.mubr.f32.mxu0 0.0
      %2416 = vmatmul.mubr.f32.gmra.mrb[0].mxu0 %v1691
      %v2417 = vpop.f32.mrb[0].mxu0
      %v2418 = vadd.f32 0.0, %v2417
      %v2419 = vpop.f32.mrb[0].mxu0
      %2420 = vmatprep.mubr.f32.mxu0 0.0
      %2421 = vmatmul.mubr.f32.gmra.mrb[0].mxu0 %v1694
      %v2422 = vpop.f32.mrb[0].mxu0
      %v2423 = vadd.f32 0.0, %v2422
      %v2424 = vpop.f32.mrb[0].mxu0
      %2425 = vmatprep.mubr.f32.mxu0 0.0
      %2426 = vmatmul.mubr.f32.gmra.mrb[0].mxu0 %v1697
      %v2427 = vpop.f32.mrb[0].mxu0
      %v2428 = vadd.f32 0.0, %v2427
      %v2429 = vpop.f32.mrb[0].mxu0
      %2430 = vmatprep.mubr.f32.mxu0 0.0
      %2431 = vmatmul.mubr.f32.gmra.mrb[0].mxu0 %v1700
      %v2432 = vpop.f32.mrb[0].mxu0
      %v2433 = vadd.f32 0.0, %v2432
      %v2434 = vpop.f32.mrb[0].mxu0
      %2435 = vmatprep.mubr.f32.mxu0 0.0
      %2436 = vmatmul.mubr.f32.gmra.mrb[0].mxu0 %v1703
      %v2437 = vpop.f32.mrb[0].mxu0
      %v2438 = vadd.f32 0.0, %v2437
      %v2439 = vpop.f32.mrb[0].mxu0
      %2440 = vmatprep.mubr.f32.mxu0 0.0
      %2441 = vmatmul.mubr.f32.gmra.mrb[0].mxu0 %v1706
      %v2442 = vpop.f32.mrb[0].mxu0
      %v2443 = vadd.f32 0.0, %v2442
      %v2444 = vpop.f32.mrb[0].mxu0
      %2445 = vmatprep.mubr.f32.mxu0 0.0
      %2446 = vmatmul.mubr.f32.gmra.mrb[0].mxu0 %v1697
      %v2447 = vpop.f32.mrb[0].mxu0
      %v2448 = vadd.f32 0.0, %v2447
      %v2449 = vpop.f32.mrb[0].mxu0
      %2450 = vmatprep.mubr.f32.mxu0 0.0
      %2451 = vmatmul.mubr.f32.gmra.mrb[0].mxu0 %v1700
      %v2452 = vpop.f32.mrb[0].mxu0
      %v2453 = vadd.f32 0.0, %v2452
      %v2454 = vpop.f32.mrb[0].mxu0
      %2455 = vmatprep.mubr.f32.mxu0 0.0
      %2456 = vmatmul.mubr.f32.gmra.mrb[0].mxu0 %v1703
      %v2457 = vpop.f32.mrb[0].mxu0
      %v2458 = vadd.f32 0.0, %v2457
      %v2459 = vpop.f32.mrb[0].mxu0
      %2460 = vmatprep.mubr.f32.mxu0 0.0
      %2461 = vmatmul.mubr.f32.gmra.mrb[0].mxu0 %v1706
      %v2462 = vpop.f32.mrb[0].mxu0
      %v2463 = vadd.f32 0.0, %v2462
      %v2464 = vpop.f32.mrb[0].mxu0
      %2465 = vmatprep.mubr.f32.mxu0 0.0
      %2466 = vmatmul.mubr.f32.gmra.mrb[0].mxu0 %v1709
      %v2467 = vpop.f32.mrb[0].mxu0
      %v2468 = vadd.f32 0.0, %v2467
      %v2469 = vpop.f32.mrb[0].mxu0
      %2470 = vmatprep.mubr.f32.mxu0 0.0
      %2471 = vmatmul.mubr.f32.gmra.mrb[0].mxu0 %v1712
      %v2472 = vpop.f32.mrb[0].mxu0
      %v2473 = vadd.f32 0.0, %v2472
      %v2474 = vpop.f32.mrb[0].mxu0
      %2475 = vmatprep.mubr.f32.mxu0 0.0
      %2476 = vmatmul.mubr.f32.gmra.mrb[0].mxu0 %v1715
      %v2477 = vpop.f32.mrb[0].mxu0
      %v2478 = vadd.f32 0.0, %v2477
      %v2479 = vpop.f32.mrb[0].mxu0
      %2480 = vmatprep.mubr.f32.mxu0 0.0
      %2481 = vmatmul.mubr.f32.gmra.mrb[0].mxu0 %v1718
      %v2482 = vpop.f32.mrb[0].mxu0
      %v2483 = vadd.f32 0.0, %v2482
      %v2484 = vpop.f32.mrb[0].mxu0
      %2485 = vmatprep.mubr.f32.mxu0 0.0
      %2486 = vmatmul.mubr.f32.gmra.mrb[0].mxu0 %v1709
      %v2487 = vpop.f32.mrb[0].mxu0
      %v2488 = vadd.f32 0.0, %v2487
      %v2489 = vpop.f32.mrb[0].mxu0
      %2490 = vmatprep.mubr.f32.mxu0 0.0
      %2491 = vmatmul.mubr.f32.gmra.mrb[0].mxu0 %v1712
      %v2492 = vpop.f32.mrb[0].mxu0
      %v2493 = vadd.f32 0.0, %v2492
      %v2494 = vpop.f32.mrb[0].mxu0
      %2495 = vmatprep.mubr.f32.mxu0 0.0
      %2496 = vmatmul.mubr.f32.gmra.mrb[0].mxu0 %v1715
      %v2497 = vpop.f32.mrb[0].mxu0
      %v2498 = vadd.f32 0.0, %v2497
      %v2499 = vpop.f32.mrb[0].mxu0
      %2500 = vmatprep.mubr.f32.mxu0 0.0
      %2501 = vmatmul.mubr.f32.gmra.mrb[0].mxu0 %v1718
      %v2502 = vpop.f32.mrb[0].mxu0
      %v2503 = vadd.f32 0.0, %v2502
      %v2504 = vpop.f32.mrb[0].mxu0
      %2505 = vmatprep.mubr.f32.mxu0 0.0
      %2506 = vmatmul.mubr.f32.gmra.mrb[0].mxu0 %v1721
      %v2507 = vpop.f32.mrb[0].mxu0
      %v2508 = vadd.f32 0.0, %v2507
      %v2509 = vpop.f32.mrb[0].mxu0
      %2510 = vmatprep.mubr.f32.mxu0 0.0
      %2511 = vmatmul.mubr.f32.gmra.mrb[0].mxu0 %v1724
      %v2512 = vpop.f32.mrb[0].mxu0
      %v2513 = vadd.f32 0.0, %v2512
      %v2514 = vpop.f32.mrb[0].mxu0
      %2515 = vmatprep.mubr.f32.mxu0 0.0
      %2516 = vmatmul.mubr.f32.gmra.mrb[0].mxu0 %v1727
      %v2517 = vpop.f32.mrb[0].mxu0
      %v2518 = vadd.f32 0.0, %v2517
      %v2519 = vpop.f32.mrb[0].mxu0
      %2520 = vmatprep.mubr.f32.mxu0 0.0
      %2521 = vmatmul.mubr.f32.gmra.mrb[0].mxu0 %v1730
      %v2522 = vpop.f32.mrb[0].mxu0
      %v2523 = vadd.f32 0.0, %v2522
      %v2524 = vpop.f32.mrb[0].mxu0
      %2525 = vmatprep.mubr.f32.mxu0 0.0
      %2526 = vmatmul.mubr.f32.gmra.mrb[0].mxu0 %v1721
      %v2527 = vpop.f32.mrb[0].mxu0
      %v2528 = vadd.f32 0.0, %v2527
      %v2529 = vpop.f32.mrb[0].mxu0
      %2530 = vmatprep.mubr.f32.mxu0 0.0
      %2531 = vmatmul.mubr.f32.gmra.mrb[0].mxu0 %v1724
      %v2532 = vpop.f32.mrb[0].mxu0
      %v2533 = vadd.f32 0.0, %v2532
      %v2534 = vpop.f32.mrb[0].mxu0
      %2535 = vmatprep.mubr.f32.mxu0 0.0
      %2536 = vmatmul.mubr.f32.gmra.mrb[0].mxu0 %v1727
      %v2537 = vpop.f32.mrb[0].mxu0
      %v2538 = vadd.f32 0.0, %v2537
      %v2539 = vpop.f32.mrb[0].mxu0
      %2540 = vmatprep.mubr.f32.mxu0 0.0
      %2541 = vmatmul.mubr.f32.gmra.mrb[0].mxu0 %v1730
      %v2542 = vpop.f32.mrb[0].mxu0
      %v2543 = vadd.f32 0.0, %v2542
      %v2544 = vpop.f32.mrb[0].mxu0
      %2545 = vmatprep.mubr.f32.mxu0 0.0
      %2546 = vmatmul.mubr.f32.gmra.mrb[0].mxu0 %v1733
      %v2547 = vpop.f32.mrb[0].mxu0
      %v2548 = vadd.f32 0.0, %v2547
      %v2549 = vpop.f32.mrb[0].mxu0
      %2550 = vmatprep.mubr.f32.mxu0 0.0
      %2551 = vmatmul.mubr.f32.gmra.mrb[0].mxu0 %v1736
      %v2552 = vpop.f32.mrb[0].mxu0
      %v2553 = vadd.f32 0.0, %v2552
      %v2554 = vpop.f32.mrb[0].mxu0
      %2555 = vmatprep.mubr.f32.mxu0 0.0
      %2556 = vmatmul.mubr.f32.gmra.mrb[0].mxu0 %v1739
      %v2557 = vpop.f32.mrb[0].mxu0
      %v2558 = vadd.f32 0.0, %v2557
      %v2559 = vpop.f32.mrb[0].mxu0
      %2560 = vmatprep.mubr.f32.mxu0 0.0
      %2561 = vmatmul.mubr.f32.gmra.mrb[0].mxu0 %v1742
      %v2562 = vpop.f32.mrb[0].mxu0
      %v2563 = vadd.f32 0.0, %v2562
      %v2564 = vpop.f32.mrb[0].mxu0
      %2565 = vmatprep.mubr.f32.mxu0 0.0
      %2566 = vmatmul.mubr.f32.gmra.mrb[0].mxu0 %v1733
      %v2567 = vpop.f32.mrb[0].mxu0
      %v2568 = vadd.f32 0.0, %v2567
      %v2569 = vpop.f32.mrb[0].mxu0
      %2570 = vmatprep.mubr.f32.mxu0 0.0
      %2571 = vmatmul.mubr.f32.gmra.mrb[0].mxu0 %v1736
      %v2572 = vpop.f32.mrb[0].mxu0
      %v2573 = vadd.f32 0.0, %v2572
      %v2574 = vpop.f32.mrb[0].mxu0
      %2575 = vmatprep.mubr.f32.mxu0 0.0
      %2576 = vmatmul.mubr.f32.gmra.mrb[0].mxu0 %v1739
      %v2577 = vpop.f32.mrb[0].mxu0
      %v2578 = vadd.f32 0.0, %v2577
      %v2579 = vpop.f32.mrb[0].mxu0
      %2580 = vmatprep.mubr.f32.mxu0 0.0
      %2581 = vmatmul.mubr.f32.gmra.mrb[0].mxu0 %v1742
      %v2582 = vpop.f32.mrb[0].mxu0
      %v2583 = vadd.f32 0.0, %v2582
      %v2584 = vpop.f32.mrb[0].mxu0
      %2585 = vdwg.mxu0
      %v2586 = vadd.f32 %v2132, %v2268
      %v2587 = vadd.f32 %v2133, %v2273
      %v2588 = vadd.f32 %v2134, %v2278
      %v2589 = vadd.f32 %v2135, %v2283
      %v2590 = vadd.f32 %v2136, %v2288
      %v2591 = vadd.f32 %v2137, %v2293
      %v2592 = vadd.f32 %v2138, %v2298
      %v2593 = vadd.f32 %v2139, %v2303
      %v2594 = vadd.f32 %v2140, %v2308
      %v2595 = vadd.f32 %v2141, %v2313
      %v2596 = vadd.f32 %v2142, %v2318
      %v2597 = vadd.f32 %v2143, %v2323
      %v2598 = vadd.f32 %v2144, %v2328
      %v2599 = vadd.f32 %v2145, %v2333
      %v2600 = vadd.f32 %v2146, %v2338
      %v2601 = vadd.f32 %v2147, %v2343
      %v2602 = vadd.f32 %v2148, %v2348
      %v2603 = vadd.f32 %v2149, %v2353
      %v2604 = vadd.f32 %v2150, %v2358
      %v2605 = vadd.f32 %v2151, %v2363
      %v2606 = vadd.f32 %v2152, %v2368
      %v2607 = vadd.f32 %v2153, %v2373
      %v2608 = vadd.f32 %v2154, %v2378
      %v2609 = vadd.f32 %v2155, %v2383
      %v2610 = vadd.f32 %v2156, %v2388
      %v2611 = vadd.f32 %v2157, %v2393
      %v2612 = vadd.f32 %v2158, %v2398
      %v2613 = vadd.f32 %v2159, %v2403
      %v2614 = vadd.f32 %v2160, %v2408
      %v2615 = vadd.f32 %v2161, %v2413
      %v2616 = vadd.f32 %v2162, %v2418
      %v2617 = vadd.f32 %v2163, %v2423
      %v2618 = vadd.f32 %v2164, %v2428
      %v2619 = vadd.f32 %v2165, %v2433
      %v2620 = vadd.f32 %v2166, %v2438
      %v2621 = vadd.f32 %v2167, %v2443
      %v2622 = vadd.f32 %v2168, %v2448
      %v2623 = vadd.f32 %v2169, %v2453
      %v2624 = vadd.f32 %v2170, %v2458
      %v2625 = vadd.f32 %v2171, %v2463
      %v2626 = vadd.f32 %v2172, %v2468
      %v2627 = vadd.f32 %v2173, %v2473
      %v2628 = vadd.f32 %v2174, %v2478
      %v2629 = vadd.f32 %v2175, %v2483
      %v2630 = vadd.f32 %v2176, %v2488
      %v2631 = vadd.f32 %v2177, %v2493
      %v2632 = vadd.f32 %v2178, %v2498
      %v2633 = vadd.f32 %v2179, %v2503
      %v2634 = vadd.f32 %v2180, %v2508
      %v2635 = vadd.f32 %v2181, %v2513
      %v2636 = vadd.f32 %v2182, %v2518
      %v2637 = vadd.f32 %v2183, %v2523
      %v2638 = vadd.f32 %v2184, %v2528
      %v2639 = vadd.f32 %v2185, %v2533
      %v2640 = vadd.f32 %v2186, %v2538
      %v2641 = vadd.f32 %v2187, %v2543
      %v2642 = vadd.f32 %v2188, %v2548
      %v2643 = vadd.f32 %v2189, %v2553
      %v2644 = vadd.f32 %v2190, %v2558
      %v2645 = vadd.f32 %v2191, %v2563
      %v2646 = vadd.f32 %v2192, %v2568
      %v2647 = vadd.f32 %v2193, %v2573
      %v2648 = vadd.f32 %v2194, %v2578
      %v2649 = vadd.f32 %v2195, %v2583
      %s2650 = scalar_lea.vmem %s1, 28
      %v2651 = vld [vmem:[%s2650] sm:$0xf]
      %v2653 = vsel %vm242, %v1630, 0
      %v2656 = vsel %vm242, %v1631, 0
      %v2659 = vsel %vm242, %v1632, 0
      %v2662 = vsel %vm242, %v1633, 0
      %v2665 = vsel %vm339, %v2651, 0
      %2667 = vmatprep.subr.mxu0 0.0
      %2668 = vmatpush1.msra.mxu0 %v2665
      %2669 = vmatprep.subr.mxu0 0.0
      %2670 = vmatpush1.msra.mxu0 0.0
      %2671 = vmatprep.subr.mxu0 0.0
      %2672 = vmatpush1.msra.mxu0 0.0
      %2673 = vmatprep.subr.mxu0 0.0
      %2674 = vmatpush1.msra.mxu0 0.0
      %2675 = vmatprep.subr.mxu0 0.0
      %2676 = vmatpush1.msra.mxu0 0.0
      %2677 = vmatprep.subr.mxu0 0.0
      %2678 = vmatpush1.msra.mxu0 0.0
      %2679 = vmatprep.subr.mxu0 0.0
      %2680 = vmatpush1.msra.mxu0 0.0
      %2681 = vmatprep.subr.mxu0 0.0
      %2682 = vmatpush1.msra.mxu0 0.0
      %2683 = vmatprep.subr.mxu0 0.0
      %2684 = vmatpush1.msra.mxu0 0.0
      %2685 = vmatprep.subr.mxu0 0.0
      %2686 = vmatpush1.msra.mxu0 0.0
      %2687 = vmatprep.subr.mxu0 0.0
      %2688 = vmatpush1.msra.mxu0 0.0
      %2689 = vmatprep.subr.mxu0 0.0
      %2690 = vmatpush1.msra.mxu0 0.0
      %2691 = vmatprep.subr.mxu0 0.0
      %2692 = vmatpush1.msra.mxu0 0.0
      %2693 = vmatprep.subr.mxu0 0.0
      %2694 = vmatpush1.msra.mxu0 0.0
      %2695 = vmatprep.subr.mxu0 0.0
      %2696 = vmatpush1.msra.mxu0 0.0
      %2697 = vmatprep.subr.mxu0 0.0
      %2698 = vmatpush1.msra.mxu0 0.0
      %2699 = vmatprep.subr.mxu0 0.0
      %2700 = vmatpush1.msra.mxu0 0.0
      %2701 = vmatprep.subr.mxu0 0.0
      %2702 = vmatpush1.msra.mxu0 0.0
      %2703 = vmatprep.subr.mxu0 0.0
      %2704 = vmatpush1.msra.mxu0 0.0
      %2705 = vmatprep.subr.mxu0 0.0
      %2706 = vmatpush1.msra.mxu0 0.0
      %2707 = vmatprep.subr.mxu0 0.0
      %2708 = vmatpush1.msra.mxu0 0.0
      %2709 = vmatprep.subr.mxu0 0.0
      %2710 = vmatpush1.msra.mxu0 0.0
      %2711 = vmatprep.subr.mxu0 0.0
      %2712 = vmatpush1.msra.mxu0 0.0
      %2713 = vmatprep.subr.mxu0 0.0
      %2714 = vmatpush1.msra.mxu0 0.0
      %2715 = vmatprep.subr.mxu0 0.0
      %2716 = vmatpush1.msra.mxu0 0.0
      %2717 = vmatprep.subr.mxu0 0.0
      %2718 = vmatpush1.msra.mxu0 0.0
      %2719 = vmatprep.subr.mxu0 0.0
      %2720 = vmatpush1.msra.mxu0 0.0
      %2721 = vmatprep.subr.mxu0 0.0
      %2722 = vmatpush1.msra.mxu0 0.0
      %2723 = vmatprep.subr.mxu0 0.0
      %2724 = vmatpush1.msra.mxu0 0.0
      %2725 = vmatprep.subr.mxu0 0.0
      %2726 = vmatpush1.msra.mxu0 0.0
      %2727 = vmatprep.subr.mxu0 0.0
      %2728 = vmatpush1.msra.mxu0 0.0
      %2729 = vmatprep.subr.mxu0 0.0
      %2730 = vmatpush1.msra.mxu0 0.0
      %2731 = vmatprep.mubr.f32.mxu0 0.0
      %2732 = vmatmul.mubr.f32.gmra.mrb[0].mxu0 %v1649
      %v2733 = vpop.f32.mrb[0].mxu0
      %v2734 = vadd.f32 0.0, %v2733
      %v2735 = vpop.f32.mrb[0].mxu0
      %2736 = vmatprep.mubr.f32.mxu0 0.0
      %2737 = vmatmul.mubr.f32.gmra.mrb[0].mxu0 %v1652
      %v2738 = vpop.f32.mrb[0].mxu0
      %v2739 = vadd.f32 0.0, %v2738
      %v2740 = vpop.f32.mrb[0].mxu0
      %2741 = vmatprep.mubr.f32.mxu0 0.0
      %2742 = vmatmul.mubr.f32.gmra.mrb[0].mxu0 %v1655
      %v2743 = vpop.f32.mrb[0].mxu0
      %v2744 = vadd.f32 0.0, %v2743
      %v2745 = vpop.f32.mrb[0].mxu0
      %2746 = vmatprep.mubr.f32.mxu0 0.0
      %2747 = vmatmul.mubr.f32.gmra.mrb[0].mxu0 %v1658
      %v2748 = vpop.f32.mrb[0].mxu0
      %v2749 = vadd.f32 0.0, %v2748
      %v2750 = vpop.f32.mrb[0].mxu0
      %2751 = vmatprep.mubr.f32.mxu0 0.0
      %2752 = vmatmul.mubr.f32.gmra.mrb[0].mxu0 %v1661
      %v2753 = vpop.f32.mrb[0].mxu0
      %v2754 = vadd.f32 0.0, %v2753
      %v2755 = vpop.f32.mrb[0].mxu0
      %2756 = vmatprep.mubr.f32.mxu0 0.0
      %2757 = vmatmul.mubr.f32.gmra.mrb[0].mxu0 %v1664
      %v2758 = vpop.f32.mrb[0].mxu0
      %v2759 = vadd.f32 0.0, %v2758
      %v2760 = vpop.f32.mrb[0].mxu0
      %2761 = vmatprep.mubr.f32.mxu0 0.0
      %2762 = vmatmul.mubr.f32.gmra.mrb[0].mxu0 %v1667
      %v2763 = vpop.f32.mrb[0].mxu0
      %v2764 = vadd.f32 0.0, %v2763
      %v2765 = vpop.f32.mrb[0].mxu0
      %2766 = vmatprep.mubr.f32.mxu0 0.0
      %2767 = vmatmul.mubr.f32.gmra.mrb[0].mxu0 %v1670
      %v2768 = vpop.f32.mrb[0].mxu0
      %v2769 = vadd.f32 0.0, %v2768
      %v2770 = vpop.f32.mrb[0].mxu0
      %2771 = vmatprep.mubr.f32.mxu0 0.0
      %2772 = vmatmul.mubr.f32.gmra.mrb[0].mxu0 %v1661
      %v2773 = vpop.f32.mrb[0].mxu0
      %v2774 = vadd.f32 0.0, %v2773
      %v2775 = vpop.f32.mrb[0].mxu0
      %2776 = vmatprep.mubr.f32.mxu0 0.0
      %2777 = vmatmul.mubr.f32.gmra.mrb[0].mxu0 %v1664
      %v2778 = vpop.f32.mrb[0].mxu0
      %v2779 = vadd.f32 0.0, %v2778
      %v2780 = vpop.f32.mrb[0].mxu0
      %2781 = vmatprep.mubr.f32.mxu0 0.0
      %2782 = vmatmul.mubr.f32.gmra.mrb[0].mxu0 %v1667
      %v2783 = vpop.f32.mrb[0].mxu0
      %v2784 = vadd.f32 0.0, %v2783
      %v2785 = vpop.f32.mrb[0].mxu0
      %2786 = vmatprep.mubr.f32.mxu0 0.0
      %2787 = vmatmul.mubr.f32.gmra.mrb[0].mxu0 %v1670
      %v2788 = vpop.f32.mrb[0].mxu0
      %v2789 = vadd.f32 0.0, %v2788
      %v2790 = vpop.f32.mrb[0].mxu0
      %2791 = vmatprep.mubr.f32.mxu0 0.0
      %2792 = vmatmul.mubr.f32.gmra.mrb[0].mxu0 %v1673
      %v2793 = vpop.f32.mrb[0].mxu0
      %v2794 = vadd.f32 0.0, %v2793
      %v2795 = vpop.f32.mrb[0].mxu0
      %2796 = vmatprep.mubr.f32.mxu0 0.0
      %2797 = vmatmul.mubr.f32.gmra.mrb[0].mxu0 %v1676
      %v2798 = vpop.f32.mrb[0].mxu0
      %v2799 = vadd.f32 0.0, %v2798
      %v2800 = vpop.f32.mrb[0].mxu0
      %2801 = vmatprep.mubr.f32.mxu0 0.0
      %2802 = vmatmul.mubr.f32.gmra.mrb[0].mxu0 %v1679
      %v2803 = vpop.f32.mrb[0].mxu0
      %v2804 = vadd.f32 0.0, %v2803
      %v2805 = vpop.f32.mrb[0].mxu0
      %2806 = vmatprep.mubr.f32.mxu0 0.0
      %2807 = vmatmul.mubr.f32.gmra.mrb[0].mxu0 %v1682
      %v2808 = vpop.f32.mrb[0].mxu0
      %v2809 = vadd.f32 0.0, %v2808
      %v2810 = vpop.f32.mrb[0].mxu0
      %2811 = vmatprep.mubr.f32.mxu0 0.0
      %2812 = vmatmul.mubr.f32.gmra.mrb[0].mxu0 %v1673
      %v2813 = vpop.f32.mrb[0].mxu0
      %v2814 = vadd.f32 0.0, %v2813
      %v2815 = vpop.f32.mrb[0].mxu0
      %2816 = vmatprep.mubr.f32.mxu0 0.0
      %2817 = vmatmul.mubr.f32.gmra.mrb[0].mxu0 %v1676
      %v2818 = vpop.f32.mrb[0].mxu0
      %v2819 = vadd.f32 0.0, %v2818
      %v2820 = vpop.f32.mrb[0].mxu0
      %2821 = vmatprep.mubr.f32.mxu0 0.0
      %2822 = vmatmul.mubr.f32.gmra.mrb[0].mxu0 %v1679
      %v2823 = vpop.f32.mrb[0].mxu0
      %v2824 = vadd.f32 0.0, %v2823
      %v2825 = vpop.f32.mrb[0].mxu0
      %2826 = vmatprep.mubr.f32.mxu0 0.0
      %2827 = vmatmul.mubr.f32.gmra.mrb[0].mxu0 %v1682
      %v2828 = vpop.f32.mrb[0].mxu0
      %v2829 = vadd.f32 0.0, %v2828
      %v2830 = vpop.f32.mrb[0].mxu0
      %2831 = vmatprep.mubr.f32.mxu0 0.0
      %2832 = vmatmul.mubr.f32.gmra.mrb[0].mxu0 %v1685
      %v2833 = vpop.f32.mrb[0].mxu0
      %v2834 = vadd.f32 0.0, %v2833
      %v2835 = vpop.f32.mrb[0].mxu0
      %2836 = vmatprep.mubr.f32.mxu0 0.0
      %2837 = vmatmul.mubr.f32.gmra.mrb[0].mxu0 %v1688
      %v2838 = vpop.f32.mrb[0].mxu0
      %v2839 = vadd.f32 0.0, %v2838
      %v2840 = vpop.f32.mrb[0].mxu0
      %2841 = vmatprep.mubr.f32.mxu0 0.0
      %2842 = vmatmul.mubr.f32.gmra.mrb[0].mxu0 %v1691
      %v2843 = vpop.f32.mrb[0].mxu0
      %v2844 = vadd.f32 0.0, %v2843
      %v2845 = vpop.f32.mrb[0].mxu0
      %2846 = vmatprep.mubr.f32.mxu0 0.0
      %2847 = vmatmul.mubr.f32.gmra.mrb[0].mxu0 %v1694
      %v2848 = vpop.f32.mrb[0].mxu0
      %v2849 = vadd.f32 0.0, %v2848
      %v2850 = vpop.f32.mrb[0].mxu0
      %2851 = vmatprep.mubr.f32.mxu0 0.0
      %2852 = vmatmul.mubr.f32.gmra.mrb[0].mxu0 %v1685
      %v2853 = vpop.f32.mrb[0].mxu0
      %v2854 = vadd.f32 0.0, %v2853
      %v2855 = vpop.f32.mrb[0].mxu0
      %2856 = vmatprep.mubr.f32.mxu0 0.0
      %2857 = vmatmul.mubr.f32.gmra.mrb[0].mxu0 %v1688
      %v2858 = vpop.f32.mrb[0].mxu0
      %v2859 = vadd.f32 0.0, %v2858
      %v2860 = vpop.f32.mrb[0].mxu0
      %2861 = vmatprep.mubr.f32.mxu0 0.0
      %2862 = vmatmul.mubr.f32.gmra.mrb[0].mxu0 %v1691
      %v2863 = vpop.f32.mrb[0].mxu0
      %v2864 = vadd.f32 0.0, %v2863
      %v2865 = vpop.f32.mrb[0].mxu0
      %2866 = vmatprep.mubr.f32.mxu0 0.0
      %2867 = vmatmul.mubr.f32.gmra.mrb[0].mxu0 %v1694
      %v2868 = vpop.f32.mrb[0].mxu0
      %v2869 = vadd.f32 0.0, %v2868
      %v2870 = vpop.f32.mrb[0].mxu0
      %2871 = vmatprep.mubr.f32.mxu0 0.0
      %2872 = vmatmul.mubr.f32.gmra.mrb[0].mxu0 %v1697
      %v2873 = vpop.f32.mrb[0].mxu0
      %v2874 = vadd.f32 0.0, %v2873
      %v2875 = vpop.f32.mrb[0].mxu0
      %2876 = vmatprep.mubr.f32.mxu0 0.0
      %2877 = vmatmul.mubr.f32.gmra.mrb[0].mxu0 %v1700
      %v2878 = vpop.f32.mrb[0].mxu0
      %v2879 = vadd.f32 0.0, %v2878
      %v2880 = vpop.f32.mrb[0].mxu0
      %2881 = vmatprep.mubr.f32.mxu0 0.0
      %2882 = vmatmul.mubr.f32.gmra.mrb[0].mxu0 %v1703
      %v2883 = vpop.f32.mrb[0].mxu0
      %v2884 = vadd.f32 0.0, %v2883
      %v2885 = vpop.f32.mrb[0].mxu0
      %2886 = vmatprep.mubr.f32.mxu0 0.0
      %2887 = vmatmul.mubr.f32.gmra.mrb[0].mxu0 %v1706
      %v2888 = vpop.f32.mrb[0].mxu0
      %v2889 = vadd.f32 0.0, %v2888
      %v2890 = vpop.f32.mrb[0].mxu0
      %2891 = vmatprep.mubr.f32.mxu0 0.0
      %2892 = vmatmul.mubr.f32.gmra.mrb[0].mxu0 %v1697
      %v2893 = vpop.f32.mrb[0].mxu0
      %v2894 = vadd.f32 0.0, %v2893
      %v2895 = vpop.f32.mrb[0].mxu0
      %2896 = vmatprep.mubr.f32.mxu0 0.0
      %2897 = vmatmul.mubr.f32.gmra.mrb[0].mxu0 %v1700
      %v2898 = vpop.f32.mrb[0].mxu0
      %v2899 = vadd.f32 0.0, %v2898
      %v2900 = vpop.f32.mrb[0].mxu0
      %2901 = vmatprep.mubr.f32.mxu0 0.0
      %2902 = vmatmul.mubr.f32.gmra.mrb[0].mxu0 %v1703
      %v2903 = vpop.f32.mrb[0].mxu0
      %v2904 = vadd.f32 0.0, %v2903
      %v2905 = vpop.f32.mrb[0].mxu0
      %2906 = vmatprep.mubr.f32.mxu0 0.0
      %2907 = vmatmul.mubr.f32.gmra.mrb[0].mxu0 %v1706
      %v2908 = vpop.f32.mrb[0].mxu0
      %v2909 = vadd.f32 0.0, %v2908
      %v2910 = vpop.f32.mrb[0].mxu0
      %2911 = vmatprep.mubr.f32.mxu0 0.0
      %2912 = vmatmul.mubr.f32.gmra.mrb[0].mxu0 %v1709
      %v2913 = vpop.f32.mrb[0].mxu0
      %v2914 = vadd.f32 0.0, %v2913
      %v2915 = vpop.f32.mrb[0].mxu0
      %2916 = vmatprep.mubr.f32.mxu0 0.0
      %2917 = vmatmul.mubr.f32.gmra.mrb[0].mxu0 %v1712
      %v2918 = vpop.f32.mrb[0].mxu0
      %v2919 = vadd.f32 0.0, %v2918
      %v2920 = vpop.f32.mrb[0].mxu0
      %2921 = vmatprep.mubr.f32.mxu0 0.0
      %2922 = vmatmul.mubr.f32.gmra.mrb[0].mxu0 %v1715
      %v2923 = vpop.f32.mrb[0].mxu0
      %v2924 = vadd.f32 0.0, %v2923
      %v2925 = vpop.f32.mrb[0].mxu0
      %2926 = vmatprep.mubr.f32.mxu0 0.0
      %2927 = vmatmul.mubr.f32.gmra.mrb[0].mxu0 %v1718
      %v2928 = vpop.f32.mrb[0].mxu0
      %v2929 = vadd.f32 0.0, %v2928
      %v2930 = vpop.f32.mrb[0].mxu0
      %2931 = vmatprep.mubr.f32.mxu0 0.0
      %2932 = vmatmul.mubr.f32.gmra.mrb[0].mxu0 %v1709
      %v2933 = vpop.f32.mrb[0].mxu0
      %v2934 = vadd.f32 0.0, %v2933
      %v2935 = vpop.f32.mrb[0].mxu0
      %2936 = vmatprep.mubr.f32.mxu0 0.0
      %2937 = vmatmul.mubr.f32.gmra.mrb[0].mxu0 %v1712
      %v2938 = vpop.f32.mrb[0].mxu0
      %v2939 = vadd.f32 0.0, %v2938
      %v2940 = vpop.f32.mrb[0].mxu0
      %2941 = vmatprep.mubr.f32.mxu0 0.0
      %2942 = vmatmul.mubr.f32.gmra.mrb[0].mxu0 %v1715
      %v2943 = vpop.f32.mrb[0].mxu0
      %v2944 = vadd.f32 0.0, %v2943
      %v2945 = vpop.f32.mrb[0].mxu0
      %2946 = vmatprep.mubr.f32.mxu0 0.0
      %2947 = vmatmul.mubr.f32.gmra.mrb[0].mxu0 %v1718
      %v2948 = vpop.f32.mrb[0].mxu0
      %v2949 = vadd.f32 0.0, %v2948
      %v2950 = vpop.f32.mrb[0].mxu0
      %2951 = vmatprep.mubr.f32.mxu0 0.0
      %2952 = vmatmul.mubr.f32.gmra.mrb[0].mxu0 %v1721
      %v2953 = vpop.f32.mrb[0].mxu0
      %v2954 = vadd.f32 0.0, %v2953
      %v2955 = vpop.f32.mrb[0].mxu0
      %2956 = vmatprep.mubr.f32.mxu0 0.0
      %2957 = vmatmul.mubr.f32.gmra.mrb[0].mxu0 %v1724
      %v2958 = vpop.f32.mrb[0].mxu0
      %v2959 = vadd.f32 0.0, %v2958
      %v2960 = vpop.f32.mrb[0].mxu0
      %2961 = vmatprep.mubr.f32.mxu0 0.0
      %2962 = vmatmul.mubr.f32.gmra.mrb[0].mxu0 %v1727
      %v2963 = vpop.f32.mrb[0].mxu0
      %v2964 = vadd.f32 0.0, %v2963
      %v2965 = vpop.f32.mrb[0].mxu0
      %2966 = vmatprep.mubr.f32.mxu0 0.0
      %2967 = vmatmul.mubr.f32.gmra.mrb[0].mxu0 %v1730
      %v2968 = vpop.f32.mrb[0].mxu0
      %v2969 = vadd.f32 0.0, %v2968
      %v2970 = vpop.f32.mrb[0].mxu0
      %2971 = vmatprep.mubr.f32.mxu0 0.0
      %2972 = vmatmul.mubr.f32.gmra.mrb[0].mxu0 %v1721
      %v2973 = vpop.f32.mrb[0].mxu0
      %v2974 = vadd.f32 0.0, %v2973
      %v2975 = vpop.f32.mrb[0].mxu0
      %2976 = vmatprep.mubr.f32.mxu0 0.0
      %2977 = vmatmul.mubr.f32.gmra.mrb[0].mxu0 %v1724
      %v2978 = vpop.f32.mrb[0].mxu0
      %v2979 = vadd.f32 0.0, %v2978
      %v2980 = vpop.f32.mrb[0].mxu0
      %2981 = vmatprep.mubr.f32.mxu0 0.0
      %2982 = vmatmul.mubr.f32.gmra.mrb[0].mxu0 %v1727
      %v2983 = vpop.f32.mrb[0].mxu0
      %v2984 = vadd.f32 0.0, %v2983
      %v2985 = vpop.f32.mrb[0].mxu0
      %2986 = vmatprep.mubr.f32.mxu0 0.0
      %2987 = vmatmul.mubr.f32.gmra.mrb[0].mxu0 %v1730
      %v2988 = vpop.f32.mrb[0].mxu0
      %v2989 = vadd.f32 0.0, %v2988
      %v2990 = vpop.f32.mrb[0].mxu0
      %2991 = vmatprep.mubr.f32.mxu0 0.0
      %2992 = vmatmul.mubr.f32.gmra.mrb[0].mxu0 %v1733
      %v2993 = vpop.f32.mrb[0].mxu0
      %v2994 = vadd.f32 0.0, %v2993
      %v2995 = vpop.f32.mrb[0].mxu0
      %2996 = vmatprep.mubr.f32.mxu0 0.0
      %2997 = vmatmul.mubr.f32.gmra.mrb[0].mxu0 %v1736
      %v2998 = vpop.f32.mrb[0].mxu0
      %v2999 = vadd.f32 0.0, %v2998
      %v3000 = vpop.f32.mrb[0].mxu0
      %3001 = vmatprep.mubr.f32.mxu0 0.0
      %3002 = vmatmul.mubr.f32.gmra.mrb[0].mxu0 %v1739
      %v3003 = vpop.f32.mrb[0].mxu0
      %v3004 = vadd.f32 0.0, %v3003
      %v3005 = vpop.f32.mrb[0].mxu0
      %3006 = vmatprep.mubr.f32.mxu0 0.0
      %3007 = vmatmul.mubr.f32.gmra.mrb[0].mxu0 %v1742
      %v3008 = vpop.f32.mrb[0].mxu0
      %v3009 = vadd.f32 0.0, %v3008
      %v3010 = vpop.f32.mrb[0].mxu0
      %3011 = vmatprep.mubr.f32.mxu0 0.0
      %3012 = vmatmul.mubr.f32.gmra.mrb[0].mxu0 %v1733
      %v3013 = vpop.f32.mrb[0].mxu0
      %v3014 = vadd.f32 0.0, %v3013
      %v3015 = vpop.f32.mrb[0].mxu0
      %3016 = vmatprep.mubr.f32.mxu0 0.0
      %3017 = vmatmul.mubr.f32.gmra.mrb[0].mxu0 %v1736
      %v3018 = vpop.f32.mrb[0].mxu0
      %v3019 = vadd.f32 0.0, %v3018
      %v3020 = vpop.f32.mrb[0].mxu0
      %3021 = vmatprep.mubr.f32.mxu0 0.0
      %3022 = vmatmul.mubr.f32.gmra.mrb[0].mxu0 %v1739
      %v3023 = vpop.f32.mrb[0].mxu0
      %v3024 = vadd.f32 0.0, %v3023
      %v3025 = vpop.f32.mrb[0].mxu0
      %3026 = vmatprep.mubr.f32.mxu0 0.0
      %3027 = vmatmul.mubr.f32.gmra.mrb[0].mxu0 %v1742
      %v3028 = vpop.f32.mrb[0].mxu0
      %v3029 = vadd.f32 0.0, %v3028
      %v3030 = vpop.f32.mrb[0].mxu0
      %3031 = vmatprep.mubr.f32.mxu0 0.0
      %3032 = vmatmul.mubr.f32.gmra.mrb[0].mxu0 %v2653
      %v3033 = vpop.f32.mrb[0].mxu0
      %v3034 = vadd.f32 0.0, %v3033
      %v3035 = vpop.f32.mrb[0].mxu0
      %3036 = vmatprep.mubr.f32.mxu0 0.0
      %3037 = vmatmul.mubr.f32.gmra.mrb[0].mxu0 %v2656
      %v3038 = vpop.f32.mrb[0].mxu0
      %v3039 = vadd.f32 0.0, %v3038
      %v3040 = vpop.f32.mrb[0].mxu0
      %3041 = vmatprep.mubr.f32.mxu0 0.0
      %3042 = vmatmul.mubr.f32.gmra.mrb[0].mxu0 %v2659
      %v3043 = vpop.f32.mrb[0].mxu0
      %v3044 = vadd.f32 0.0, %v3043
      %v3045 = vpop.f32.mrb[0].mxu0
      %3046 = vmatprep.mubr.f32.mxu0 0.0
      %3047 = vmatmul.mubr.f32.gmra.mrb[0].mxu0 %v2662
      %v3048 = vpop.f32.mrb[0].mxu0
      %v3049 = vadd.f32 0.0, %v3048
      %v3050 = vpop.f32.mrb[0].mxu0
      %3051 = vdwg.mxu0
      %v3052 = vadd.f32 %v2586, %v2734
      %v3053 = vadd.f32 %v2587, %v2739
      %v3054 = vadd.f32 %v2588, %v2744
      %v3055 = vadd.f32 %v2589, %v2749
      %v3056 = vadd.f32 %v2590, %v2754
      %v3057 = vadd.f32 %v2591, %v2759
      %v3058 = vadd.f32 %v2592, %v2764
      %v3059 = vadd.f32 %v2593, %v2769
      %v3060 = vadd.f32 %v2594, %v2774
      %v3061 = vadd.f32 %v2595, %v2779
      %v3062 = vadd.f32 %v2596, %v2784
      %v3063 = vadd.f32 %v2597, %v2789
      %v3064 = vadd.f32 %v2598, %v2794
      %v3065 = vadd.f32 %v2599, %v2799
      %v3066 = vadd.f32 %v2600, %v2804
      %v3067 = vadd.f32 %v2601, %v2809
      %v3068 = vadd.f32 %v2602, %v2814
      %v3069 = vadd.f32 %v2603, %v2819
      %v3070 = vadd.f32 %v2604, %v2824
      %v3071 = vadd.f32 %v2605, %v2829
      %v3072 = vadd.f32 %v2606, %v2834
      %v3073 = vadd.f32 %v2607, %v2839
      %v3074 = vadd.f32 %v2608, %v2844
      %v3075 = vadd.f32 %v2609, %v2849
      %v3076 = vadd.f32 %v2610, %v2854
      %v3077 = vadd.f32 %v2611, %v2859
      %v3078 = vadd.f32 %v2612, %v2864
      %v3079 = vadd.f32 %v2613, %v2869
      %v3080 = vadd.f32 %v2614, %v2874
      %v3081 = vadd.f32 %v2615, %v2879
      %v3082 = vadd.f32 %v2616, %v2884
      %v3083 = vadd.f32 %v2617, %v2889
      %v3084 = vadd.f32 %v2618, %v2894
      %v3085 = vadd.f32 %v2619, %v2899
      %v3086 = vadd.f32 %v2620, %v2904
      %v3087 = vadd.f32 %v2621, %v2909
      %v3088 = vadd.f32 %v2622, %v2914
      %v3089 = vadd.f32 %v2623, %v2919
      %v3090 = vadd.f32 %v2624, %v2924
      %v3091 = vadd.f32 %v2625, %v2929
      %v3092 = vadd.f32 %v2626, %v2934
      %v3093 = vadd.f32 %v2627, %v2939
      %v3094 = vadd.f32 %v2628, %v2944
      %v3095 = vadd.f32 %v2629, %v2949
      %v3096 = vadd.f32 %v2630, %v2954
      %v3097 = vadd.f32 %v2631, %v2959
      %v3098 = vadd.f32 %v2632, %v2964
      %v3099 = vadd.f32 %v2633, %v2969
      %v3100 = vadd.f32 %v2634, %v2974
      %v3101 = vadd.f32 %v2635, %v2979
      %v3102 = vadd.f32 %v2636, %v2984
      %v3103 = vadd.f32 %v2637, %v2989
      %v3104 = vadd.f32 %v2638, %v2994
      %v3105 = vadd.f32 %v2639, %v2999
      %v3106 = vadd.f32 %v2640, %v3004
      %v3107 = vadd.f32 %v2641, %v3009
      %v3108 = vadd.f32 %v2642, %v3014
      %v3109 = vadd.f32 %v2643, %v3019
      %v3110 = vadd.f32 %v2644, %v3024
      %v3111 = vadd.f32 %v2645, %v3029
      %v3112 = vadd.f32 %v2646, %v3034
      %v3113 = vadd.f32 %v2647, %v3039
      %v3114 = vadd.f32 %v2648, %v3044
      %v3115 = vadd.f32 %v2649, %v3049
      %v3116 = vld [vmem:[%s198 + $0x2] sm:$0xff]
      %v3117 = vld [vmem:[%s198 + $0xa] sm:$0xff]
      %v3118 = vld [vmem:[%s198 + $0x12] sm:$0xff]
      %v3119 = vld [vmem:[%s198 + $0x1a] sm:$0xff]
      %v3120 = vld [vmem:[%s198 + $0x2a] sm:$0xff]
      %v3121 = vld [vmem:[%s198 + $0x32] sm:$0xff]
      %v3122 = vld [vmem:[%s198 + $0x3a] sm:$0xff]
      %v3123 = vld [vmem:[%s198 + $0x42] sm:$0xff]
      %v3124 = vld [vmem:[%s198 + $0x52] sm:$0xff]
      %v3125 = vld [vmem:[%s198 + $0x5a] sm:$0xff]
      %v3126 = vld [vmem:[%s198 + $0x62] sm:$0xff]
      %v3127 = vld [vmem:[%s198 + $0x6a] sm:$0xff]
      %v3128 = vld [vmem:[%s198 + $0x7a] sm:$0xff]
      %v3129 = vld [vmem:[%s198 + $0x82] sm:$0xff]
      %v3130 = vld [vmem:[%s198 + $0x8a] sm:$0xff]
      %v3131 = vld [vmem:[%s198 + $0x92] sm:$0xff]
      %v3132 = vld [vmem:[%s198 + $0xa2] sm:$0xff]
      %v3133 = vld [vmem:[%s198 + $0xaa] sm:$0xff]
      %v3134 = vld [vmem:[%s198 + $0xb2] sm:$0xff]
      %v3135 = vld [vmem:[%s198 + $0xba] sm:$0xff]
      %v3136 = vld [vmem:[%s198 + $0xca] sm:$0xff]
      %v3137 = vld [vmem:[%s198 + $0xd2] sm:$0xff]
      %v3138 = vld [vmem:[%s198 + $0xda] sm:$0xff]
      %v3139 = vld [vmem:[%s198 + $0xe2] sm:$0xff]
      %v3140 = vld [vmem:[%s198 + $0xf2] sm:$0xff]
      %v3141 = vld [vmem:[%s198 + $0xfa] sm:$0xff]
      %v3142 = vld [vmem:[%s198 + $0x102] sm:$0xff]
      %v3143 = vld [vmem:[%s198 + $0x10a] sm:$0xff]
      %v3144 = vld [vmem:[%s198 + $0x11a] sm:$0xff]
      %v3145 = vld [vmem:[%s198 + $0x122] sm:$0xff]
      %v3146 = vld [vmem:[%s198 + $0x12a] sm:$0xff]
      %v3147 = vld [vmem:[%s198 + $0x132] sm:$0xff]
      %v3148 = vld [vmem:[%s198 + $0x142] sm:$0xff]
      %v3149 = vld [vmem:[%s198 + $0x14a] sm:$0xff]
      %v3150 = vld [vmem:[%s198 + $0x152] sm:$0xff]
      %v3151 = vld [vmem:[%s198 + $0x15a] sm:$0xff]
      %v3152 = vld [vmem:[%s198 + $0x16a] sm:$0xff]
      %v3153 = vld [vmem:[%s198 + $0x172] sm:$0xff]
      %v3154 = vld [vmem:[%s198 + $0x17a] sm:$0xff]
      %v3155 = vld [vmem:[%s198 + $0x182] sm:$0xff]
      %s3156 = scalar_lea.vmem %s1, 8
      %v3157 = vld [vmem:[%s3156] sm:$0xf]
      %v3159 = vsel %vm242, %v3116, 0
      %v3162 = vsel %vm242, %v3117, 0
      %v3165 = vsel %vm242, %v3118, 0
      %v3168 = vsel %vm242, %v3119, 0
      %v3171 = vsel %vm242, %v3120, 0
      %v3174 = vsel %vm242, %v3121, 0
      %v3177 = vsel %vm242, %v3122, 0
      %v3180 = vsel %vm242, %v3123, 0
      %v3183 = vsel %vm242, %v3124, 0
      %v3186 = vsel %vm242, %v3125, 0
      %v3189 = vsel %vm242, %v3126, 0
      %v3192 = vsel %vm242, %v3127, 0
      %v3195 = vsel %vm242, %v3128, 0
      %v3198 = vsel %vm242, %v3129, 0
      %v3201 = vsel %vm242, %v3130, 0
      %v3204 = vsel %vm242, %v3131, 0
      %v3207 = vsel %vm242, %v3132, 0
      %v3210 = vsel %vm242, %v3133, 0
      %v3213 = vsel %vm242, %v3134, 0
      %v3216 = vsel %vm242, %v3135, 0
      %v3219 = vsel %vm242, %v3136, 0
      %v3222 = vsel %vm242, %v3137, 0
      %v3225 = vsel %vm242, %v3138, 0
      %v3228 = vsel %vm242, %v3139, 0
      %v3231 = vsel %vm242, %v3140, 0
      %v3234 = vsel %vm242, %v3141, 0
      %v3237 = vsel %vm242, %v3142, 0
      %v3240 = vsel %vm242, %v3143, 0
      %v3243 = vsel %vm242, %v3144, 0
      %v3246 = vsel %vm242, %v3145, 0
      %v3249 = vsel %vm242, %v3146, 0
      %v3252 = vsel %vm242, %v3147, 0
      %v3255 = vsel %vm242, %v3148, 0
      %v3258 = vsel %vm242, %v3149, 0
      %v3261 = vsel %vm242, %v3150, 0
      %v3264 = vsel %vm242, %v3151, 0
      %v3267 = vsel %vm339, %v3157, 0
      %3269 = vmatprep.subr.mxu0 0.0
      %3270 = vmatpush1.msra.mxu0 %v3267
      %3271 = vmatprep.subr.mxu0 0.0
      %3272 = vmatpush1.msra.mxu0 0.0
      %3273 = vmatprep.subr.mxu0 0.0
      %3274 = vmatpush1.msra.mxu0 0.0
      %3275 = vmatprep.subr.mxu0 0.0
      %3276 = vmatpush1.msra.mxu0 0.0
      %3277 = vmatprep.subr.mxu0 0.0
      %3278 = vmatpush1.msra.mxu0 0.0
      %3279 = vmatprep.subr.mxu0 0.0
      %3280 = vmatpush1.msra.mxu0 0.0
      %3281 = vmatprep.subr.mxu0 0.0
      %3282 = vmatpush1.msra.mxu0 0.0
      %3283 = vmatprep.subr.mxu0 0.0
      %3284 = vmatpush1.msra.mxu0 0.0
      %3285 = vmatprep.subr.mxu0 0.0
      %3286 = vmatpush1.msra.mxu0 0.0
      %3287 = vmatprep.subr.mxu0 0.0
      %3288 = vmatpush1.msra.mxu0 0.0
      %3289 = vmatprep.subr.mxu0 0.0
      %3290 = vmatpush1.msra.mxu0 0.0
      %3291 = vmatprep.subr.mxu0 0.0
      %3292 = vmatpush1.msra.mxu0 0.0
      %3293 = vmatprep.subr.mxu0 0.0
      %3294 = vmatpush1.msra.mxu0 0.0
      %3295 = vmatprep.subr.mxu0 0.0
      %3296 = vmatpush1.msra.mxu0 0.0
      %3297 = vmatprep.subr.mxu0 0.0
      %3298 = vmatpush1.msra.mxu0 0.0
      %3299 = vmatprep.subr.mxu0 0.0
      %3300 = vmatpush1.msra.mxu0 0.0
      %3301 = vmatprep.subr.mxu0 0.0
      %3302 = vmatpush1.msra.mxu0 0.0
      %3303 = vmatprep.subr.mxu0 0.0
      %3304 = vmatpush1.msra.mxu0 0.0
      %3305 = vmatprep.subr.mxu0 0.0
      %3306 = vmatpush1.msra.mxu0 0.0
      %3307 = vmatprep.subr.mxu0 0.0
      %3308 = vmatpush1.msra.mxu0 0.0
      %3309 = vmatprep.subr.mxu0 0.0
      %3310 = vmatpush1.msra.mxu0 0.0
      %3311 = vmatprep.subr.mxu0 0.0
      %3312 = vmatpush1.msra.mxu0 0.0
      %3313 = vmatprep.subr.mxu0 0.0
      %3314 = vmatpush1.msra.mxu0 0.0
      %3315 = vmatprep.subr.mxu0 0.0
      %3316 = vmatpush1.msra.mxu0 0.0
      %3317 = vmatprep.subr.mxu0 0.0
      %3318 = vmatpush1.msra.mxu0 0.0
      %3319 = vmatprep.subr.mxu0 0.0
      %3320 = vmatpush1.msra.mxu0 0.0
      %3321 = vmatprep.subr.mxu0 0.0
      %3322 = vmatpush1.msra.mxu0 0.0
      %3323 = vmatprep.subr.mxu0 0.0
      %3324 = vmatpush1.msra.mxu0 0.0
      %3325 = vmatprep.subr.mxu0 0.0
      %3326 = vmatpush1.msra.mxu0 0.0
      %3327 = vmatprep.subr.mxu0 0.0
      %3328 = vmatpush1.msra.mxu0 0.0
      %3329 = vmatprep.subr.mxu0 0.0
      %3330 = vmatpush1.msra.mxu0 0.0
      %3331 = vmatprep.subr.mxu0 0.0
      %3332 = vmatpush1.msra.mxu0 0.0
      %3333 = vmatprep.mubr.f32.mxu0 0.0
      %3334 = vmatmul.mubr.f32.gmra.mrb[0].mxu0 %v3159
      %v3335 = vpop.f32.mrb[0].mxu0
      %v3336 = vadd.f32 0.0, %v3335
      %v3337 = vpop.f32.mrb[0].mxu0
      %3338 = vmatprep.mubr.f32.mxu0 0.0
      %3339 = vmatmul.mubr.f32.gmra.mrb[0].mxu0 %v3162
      %v3340 = vpop.f32.mrb[0].mxu0
      %v3341 = vadd.f32 0.0, %v3340
      %v3342 = vpop.f32.mrb[0].mxu0
      %3343 = vmatprep.mubr.f32.mxu0 0.0
      %3344 = vmatmul.mubr.f32.gmra.mrb[0].mxu0 %v3165
      %v3345 = vpop.f32.mrb[0].mxu0
      %v3346 = vadd.f32 0.0, %v3345
      %v3347 = vpop.f32.mrb[0].mxu0
      %3348 = vmatprep.mubr.f32.mxu0 0.0
      %3349 = vmatmul.mubr.f32.gmra.mrb[0].mxu0 %v3168
      %v3350 = vpop.f32.mrb[0].mxu0
      %v3351 = vadd.f32 0.0, %v3350
      %v3352 = vpop.f32.mrb[0].mxu0
      %3353 = vmatprep.mubr.f32.mxu0 0.0
      %3354 = vmatmul.mubr.f32.gmra.mrb[0].mxu0 %v3171
      %v3355 = vpop.f32.mrb[0].mxu0
      %v3356 = vadd.f32 0.0, %v3355
      %v3357 = vpop.f32.mrb[0].mxu0
      %3358 = vmatprep.mubr.f32.mxu0 0.0
      %3359 = vmatmul.mubr.f32.gmra.mrb[0].mxu0 %v3174
      %v3360 = vpop.f32.mrb[0].mxu0
      %v3361 = vadd.f32 0.0, %v3360
      %v3362 = vpop.f32.mrb[0].mxu0
      %3363 = vmatprep.mubr.f32.mxu0 0.0
      %3364 = vmatmul.mubr.f32.gmra.mrb[0].mxu0 %v3177
      %v3365 = vpop.f32.mrb[0].mxu0
      %v3366 = vadd.f32 0.0, %v3365
      %v3367 = vpop.f32.mrb[0].mxu0
      %3368 = vmatprep.mubr.f32.mxu0 0.0
      %3369 = vmatmul.mubr.f32.gmra.mrb[0].mxu0 %v3180
      %v3370 = vpop.f32.mrb[0].mxu0
      %v3371 = vadd.f32 0.0, %v3370
      %v3372 = vpop.f32.mrb[0].mxu0
      %3373 = vmatprep.mubr.f32.mxu0 0.0
      %3374 = vmatmul.mubr.f32.gmra.mrb[0].mxu0 %v3171
      %v3375 = vpop.f32.mrb[0].mxu0
      %v3376 = vadd.f32 0.0, %v3375
      %v3377 = vpop.f32.mrb[0].mxu0
      %3378 = vmatprep.mubr.f32.mxu0 0.0
      %3379 = vmatmul.mubr.f32.gmra.mrb[0].mxu0 %v3174
      %v3380 = vpop.f32.mrb[0].mxu0
      %v3381 = vadd.f32 0.0, %v3380
      %v3382 = vpop.f32.mrb[0].mxu0
      %3383 = vmatprep.mubr.f32.mxu0 0.0
      %3384 = vmatmul.mubr.f32.gmra.mrb[0].mxu0 %v3177
      %v3385 = vpop.f32.mrb[0].mxu0
      %v3386 = vadd.f32 0.0, %v3385
      %v3387 = vpop.f32.mrb[0].mxu0
      %3388 = vmatprep.mubr.f32.mxu0 0.0
      %3389 = vmatmul.mubr.f32.gmra.mrb[0].mxu0 %v3180
      %v3390 = vpop.f32.mrb[0].mxu0
      %v3391 = vadd.f32 0.0, %v3390
      %v3392 = vpop.f32.mrb[0].mxu0
      %3393 = vmatprep.mubr.f32.mxu0 0.0
      %3394 = vmatmul.mubr.f32.gmra.mrb[0].mxu0 %v3183
      %v3395 = vpop.f32.mrb[0].mxu0
      %v3396 = vadd.f32 0.0, %v3395
      %v3397 = vpop.f32.mrb[0].mxu0
      %3398 = vmatprep.mubr.f32.mxu0 0.0
      %3399 = vmatmul.mubr.f32.gmra.mrb[0].mxu0 %v3186
      %v3400 = vpop.f32.mrb[0].mxu0
      %v3401 = vadd.f32 0.0, %v3400
      %v3402 = vpop.f32.mrb[0].mxu0
      %3403 = vmatprep.mubr.f32.mxu0 0.0
      %3404 = vmatmul.mubr.f32.gmra.mrb[0].mxu0 %v3189
      %v3405 = vpop.f32.mrb[0].mxu0
      %v3406 = vadd.f32 0.0, %v3405
      %v3407 = vpop.f32.mrb[0].mxu0
      %3408 = vmatprep.mubr.f32.mxu0 0.0
      %3409 = vmatmul.mubr.f32.gmra.mrb[0].mxu0 %v3192
      %v3410 = vpop.f32.mrb[0].mxu0
      %v3411 = vadd.f32 0.0, %v3410
      %v3412 = vpop.f32.mrb[0].mxu0
      %3413 = vmatprep.mubr.f32.mxu0 0.0
      %3414 = vmatmul.mubr.f32.gmra.mrb[0].mxu0 %v3183
      %v3415 = vpop.f32.mrb[0].mxu0
      %v3416 = vadd.f32 0.0, %v3415
      %v3417 = vpop.f32.mrb[0].mxu0
      %3418 = vmatprep.mubr.f32.mxu0 0.0
      %3419 = vmatmul.mubr.f32.gmra.mrb[0].mxu0 %v3186
      %v3420 = vpop.f32.mrb[0].mxu0
      %v3421 = vadd.f32 0.0, %v3420
      %v3422 = vpop.f32.mrb[0].mxu0
      %3423 = vmatprep.mubr.f32.mxu0 0.0
      %3424 = vmatmul.mubr.f32.gmra.mrb[0].mxu0 %v3189
      %v3425 = vpop.f32.mrb[0].mxu0
      %v3426 = vadd.f32 0.0, %v3425
      %v3427 = vpop.f32.mrb[0].mxu0
      %3428 = vmatprep.mubr.f32.mxu0 0.0
      %3429 = vmatmul.mubr.f32.gmra.mrb[0].mxu0 %v3192
      %v3430 = vpop.f32.mrb[0].mxu0
      %v3431 = vadd.f32 0.0, %v3430
      %v3432 = vpop.f32.mrb[0].mxu0
      %3433 = vmatprep.mubr.f32.mxu0 0.0
      %3434 = vmatmul.mubr.f32.gmra.mrb[0].mxu0 %v3195
      %v3435 = vpop.f32.mrb[0].mxu0
      %v3436 = vadd.f32 0.0, %v3435
      %v3437 = vpop.f32.mrb[0].mxu0
      %3438 = vmatprep.mubr.f32.mxu0 0.0
      %3439 = vmatmul.mubr.f32.gmra.mrb[0].mxu0 %v3198
      %v3440 = vpop.f32.mrb[0].mxu0
      %v3441 = vadd.f32 0.0, %v3440
      %v3442 = vpop.f32.mrb[0].mxu0
      %3443 = vmatprep.mubr.f32.mxu0 0.0
      %3444 = vmatmul.mubr.f32.gmra.mrb[0].mxu0 %v3201
      %v3445 = vpop.f32.mrb[0].mxu0
      %v3446 = vadd.f32 0.0, %v3445
      %v3447 = vpop.f32.mrb[0].mxu0
      %3448 = vmatprep.mubr.f32.mxu0 0.0
      %3449 = vmatmul.mubr.f32.gmra.mrb[0].mxu0 %v3204
      %v3450 = vpop.f32.mrb[0].mxu0
      %v3451 = vadd.f32 0.0, %v3450
      %v3452 = vpop.f32.mrb[0].mxu0
      %3453 = vmatprep.mubr.f32.mxu0 0.0
      %3454 = vmatmul.mubr.f32.gmra.mrb[0].mxu0 %v3195
      %v3455 = vpop.f32.mrb[0].mxu0
      %v3456 = vadd.f32 0.0, %v3455
      %v3457 = vpop.f32.mrb[0].mxu0
      %3458 = vmatprep.mubr.f32.mxu0 0.0
      %3459 = vmatmul.mubr.f32.gmra.mrb[0].mxu0 %v3198
      %v3460 = vpop.f32.mrb[0].mxu0
      %v3461 = vadd.f32 0.0, %v3460
      %v3462 = vpop.f32.mrb[0].mxu0
      %3463 = vmatprep.mubr.f32.mxu0 0.0
      %3464 = vmatmul.mubr.f32.gmra.mrb[0].mxu0 %v3201
      %v3465 = vpop.f32.mrb[0].mxu0
      %v3466 = vadd.f32 0.0, %v3465
      %v3467 = vpop.f32.mrb[0].mxu0
      %3468 = vmatprep.mubr.f32.mxu0 0.0
      %3469 = vmatmul.mubr.f32.gmra.mrb[0].mxu0 %v3204
      %v3470 = vpop.f32.mrb[0].mxu0
      %v3471 = vadd.f32 0.0, %v3470
      %v3472 = vpop.f32.mrb[0].mxu0
      %3473 = vmatprep.mubr.f32.mxu0 0.0
      %3474 = vmatmul.mubr.f32.gmra.mrb[0].mxu0 %v3207
      %v3475 = vpop.f32.mrb[0].mxu0
      %v3476 = vadd.f32 0.0, %v3475
      %v3477 = vpop.f32.mrb[0].mxu0
      %3478 = vmatprep.mubr.f32.mxu0 0.0
      %3479 = vmatmul.mubr.f32.gmra.mrb[0].mxu0 %v3210
      %v3480 = vpop.f32.mrb[0].mxu0
      %v3481 = vadd.f32 0.0, %v3480
      %v3482 = vpop.f32.mrb[0].mxu0
      %3483 = vmatprep.mubr.f32.mxu0 0.0
      %3484 = vmatmul.mubr.f32.gmra.mrb[0].mxu0 %v3213
      %v3485 = vpop.f32.mrb[0].mxu0
      %v3486 = vadd.f32 0.0, %v3485
      %v3487 = vpop.f32.mrb[0].mxu0
      %3488 = vmatprep.mubr.f32.mxu0 0.0
      %3489 = vmatmul.mubr.f32.gmra.mrb[0].mxu0 %v3216
      %v3490 = vpop.f32.mrb[0].mxu0
      %v3491 = vadd.f32 0.0, %v3490
      %v3492 = vpop.f32.mrb[0].mxu0
      %3493 = vmatprep.mubr.f32.mxu0 0.0
      %3494 = vmatmul.mubr.f32.gmra.mrb[0].mxu0 %v3207
      %v3495 = vpop.f32.mrb[0].mxu0
      %v3496 = vadd.f32 0.0, %v3495
      %v3497 = vpop.f32.mrb[0].mxu0
      %3498 = vmatprep.mubr.f32.mxu0 0.0
      %3499 = vmatmul.mubr.f32.gmra.mrb[0].mxu0 %v3210
      %v3500 = vpop.f32.mrb[0].mxu0
      %v3501 = vadd.f32 0.0, %v3500
      %v3502 = vpop.f32.mrb[0].mxu0
      %3503 = vmatprep.mubr.f32.mxu0 0.0
      %3504 = vmatmul.mubr.f32.gmra.mrb[0].mxu0 %v3213
      %v3505 = vpop.f32.mrb[0].mxu0
      %v3506 = vadd.f32 0.0, %v3505
      %v3507 = vpop.f32.mrb[0].mxu0
      %3508 = vmatprep.mubr.f32.mxu0 0.0
      %3509 = vmatmul.mubr.f32.gmra.mrb[0].mxu0 %v3216
      %v3510 = vpop.f32.mrb[0].mxu0
      %v3511 = vadd.f32 0.0, %v3510
      %v3512 = vpop.f32.mrb[0].mxu0
      %3513 = vmatprep.mubr.f32.mxu0 0.0
      %3514 = vmatmul.mubr.f32.gmra.mrb[0].mxu0 %v3219
      %v3515 = vpop.f32.mrb[0].mxu0
      %v3516 = vadd.f32 0.0, %v3515
      %v3517 = vpop.f32.mrb[0].mxu0
      %3518 = vmatprep.mubr.f32.mxu0 0.0
      %3519 = vmatmul.mubr.f32.gmra.mrb[0].mxu0 %v3222
      %v3520 = vpop.f32.mrb[0].mxu0
      %v3521 = vadd.f32 0.0, %v3520
      %v3522 = vpop.f32.mrb[0].mxu0
      %3523 = vmatprep.mubr.f32.mxu0 0.0
      %3524 = vmatmul.mubr.f32.gmra.mrb[0].mxu0 %v3225
      %v3525 = vpop.f32.mrb[0].mxu0
      %v3526 = vadd.f32 0.0, %v3525
      %v3527 = vpop.f32.mrb[0].mxu0
      %3528 = vmatprep.mubr.f32.mxu0 0.0
      %3529 = vmatmul.mubr.f32.gmra.mrb[0].mxu0 %v3228
      %v3530 = vpop.f32.mrb[0].mxu0
      %v3531 = vadd.f32 0.0, %v3530
      %v3532 = vpop.f32.mrb[0].mxu0
      %3533 = vmatprep.mubr.f32.mxu0 0.0
      %3534 = vmatmul.mubr.f32.gmra.mrb[0].mxu0 %v3219
      %v3535 = vpop.f32.mrb[0].mxu0
      %v3536 = vadd.f32 0.0, %v3535
      %v3537 = vpop.f32.mrb[0].mxu0
      %3538 = vmatprep.mubr.f32.mxu0 0.0
      %3539 = vmatmul.mubr.f32.gmra.mrb[0].mxu0 %v3222
      %v3540 = vpop.f32.mrb[0].mxu0
      %v3541 = vadd.f32 0.0, %v3540
      %v3542 = vpop.f32.mrb[0].mxu0
      %3543 = vmatprep.mubr.f32.mxu0 0.0
      %3544 = vmatmul.mubr.f32.gmra.mrb[0].mxu0 %v3225
      %v3545 = vpop.f32.mrb[0].mxu0
      %v3546 = vadd.f32 0.0, %v3545
      %v3547 = vpop.f32.mrb[0].mxu0
      %3548 = vmatprep.mubr.f32.mxu0 0.0
      %3549 = vmatmul.mubr.f32.gmra.mrb[0].mxu0 %v3228
      %v3550 = vpop.f32.mrb[0].mxu0
      %v3551 = vadd.f32 0.0, %v3550
      %v3552 = vpop.f32.mrb[0].mxu0
      %3553 = vmatprep.mubr.f32.mxu0 0.0
      %3554 = vmatmul.mubr.f32.gmra.mrb[0].mxu0 %v3231
      %v3555 = vpop.f32.mrb[0].mxu0
      %v3556 = vadd.f32 0.0, %v3555
      %v3557 = vpop.f32.mrb[0].mxu0
      %3558 = vmatprep.mubr.f32.mxu0 0.0
      %3559 = vmatmul.mubr.f32.gmra.mrb[0].mxu0 %v3234
      %v3560 = vpop.f32.mrb[0].mxu0
      %v3561 = vadd.f32 0.0, %v3560
      %v3562 = vpop.f32.mrb[0].mxu0
      %3563 = vmatprep.mubr.f32.mxu0 0.0
      %3564 = vmatmul.mubr.f32.gmra.mrb[0].mxu0 %v3237
      %v3565 = vpop.f32.mrb[0].mxu0
      %v3566 = vadd.f32 0.0, %v3565
      %v3567 = vpop.f32.mrb[0].mxu0
      %3568 = vmatprep.mubr.f32.mxu0 0.0
      %3569 = vmatmul.mubr.f32.gmra.mrb[0].mxu0 %v3240
      %v3570 = vpop.f32.mrb[0].mxu0
      %v3571 = vadd.f32 0.0, %v3570
      %v3572 = vpop.f32.mrb[0].mxu0
      %3573 = vmatprep.mubr.f32.mxu0 0.0
      %3574 = vmatmul.mubr.f32.gmra.mrb[0].mxu0 %v3231
      %v3575 = vpop.f32.mrb[0].mxu0
      %v3576 = vadd.f32 0.0, %v3575
      %v3577 = vpop.f32.mrb[0].mxu0
      %3578 = vmatprep.mubr.f32.mxu0 0.0
      %3579 = vmatmul.mubr.f32.gmra.mrb[0].mxu0 %v3234
      %v3580 = vpop.f32.mrb[0].mxu0
      %v3581 = vadd.f32 0.0, %v3580
      %v3582 = vpop.f32.mrb[0].mxu0
      %3583 = vmatprep.mubr.f32.mxu0 0.0
      %3584 = vmatmul.mubr.f32.gmra.mrb[0].mxu0 %v3237
      %v3585 = vpop.f32.mrb[0].mxu0
      %v3586 = vadd.f32 0.0, %v3585
      %v3587 = vpop.f32.mrb[0].mxu0
      %3588 = vmatprep.mubr.f32.mxu0 0.0
      %3589 = vmatmul.mubr.f32.gmra.mrb[0].mxu0 %v3240
      %v3590 = vpop.f32.mrb[0].mxu0
      %v3591 = vadd.f32 0.0, %v3590
      %v3592 = vpop.f32.mrb[0].mxu0
      %3593 = vmatprep.mubr.f32.mxu0 0.0
      %3594 = vmatmul.mubr.f32.gmra.mrb[0].mxu0 %v3243
      %v3595 = vpop.f32.mrb[0].mxu0
      %v3596 = vadd.f32 0.0, %v3595
      %v3597 = vpop.f32.mrb[0].mxu0
      %3598 = vmatprep.mubr.f32.mxu0 0.0
      %3599 = vmatmul.mubr.f32.gmra.mrb[0].mxu0 %v3246
      %v3600 = vpop.f32.mrb[0].mxu0
      %v3601 = vadd.f32 0.0, %v3600
      %v3602 = vpop.f32.mrb[0].mxu0
      %3603 = vmatprep.mubr.f32.mxu0 0.0
      %3604 = vmatmul.mubr.f32.gmra.mrb[0].mxu0 %v3249
      %v3605 = vpop.f32.mrb[0].mxu0
      %v3606 = vadd.f32 0.0, %v3605
      %v3607 = vpop.f32.mrb[0].mxu0
      %3608 = vmatprep.mubr.f32.mxu0 0.0
      %3609 = vmatmul.mubr.f32.gmra.mrb[0].mxu0 %v3252
      %v3610 = vpop.f32.mrb[0].mxu0
      %v3611 = vadd.f32 0.0, %v3610
      %v3612 = vpop.f32.mrb[0].mxu0
      %3613 = vmatprep.mubr.f32.mxu0 0.0
      %3614 = vmatmul.mubr.f32.gmra.mrb[0].mxu0 %v3243
      %v3615 = vpop.f32.mrb[0].mxu0
      %v3616 = vadd.f32 0.0, %v3615
      %v3617 = vpop.f32.mrb[0].mxu0
      %3618 = vmatprep.mubr.f32.mxu0 0.0
      %3619 = vmatmul.mubr.f32.gmra.mrb[0].mxu0 %v3246
      %v3620 = vpop.f32.mrb[0].mxu0
      %v3621 = vadd.f32 0.0, %v3620
      %v3622 = vpop.f32.mrb[0].mxu0
      %3623 = vmatprep.mubr.f32.mxu0 0.0
      %3624 = vmatmul.mubr.f32.gmra.mrb[0].mxu0 %v3249
      %v3625 = vpop.f32.mrb[0].mxu0
      %v3626 = vadd.f32 0.0, %v3625
      %v3627 = vpop.f32.mrb[0].mxu0
      %3628 = vmatprep.mubr.f32.mxu0 0.0
      %3629 = vmatmul.mubr.f32.gmra.mrb[0].mxu0 %v3252
      %v3630 = vpop.f32.mrb[0].mxu0
      %v3631 = vadd.f32 0.0, %v3630
      %v3632 = vpop.f32.mrb[0].mxu0
      %3633 = vmatprep.mubr.f32.mxu0 0.0
      %3634 = vmatmul.mubr.f32.gmra.mrb[0].mxu0 %v3255
      %v3635 = vpop.f32.mrb[0].mxu0
      %v3636 = vadd.f32 0.0, %v3635
      %v3637 = vpop.f32.mrb[0].mxu0
      %3638 = vmatprep.mubr.f32.mxu0 0.0
      %3639 = vmatmul.mubr.f32.gmra.mrb[0].mxu0 %v3258
      %v3640 = vpop.f32.mrb[0].mxu0
      %v3641 = vadd.f32 0.0, %v3640
      %v3642 = vpop.f32.mrb[0].mxu0
      %3643 = vmatprep.mubr.f32.mxu0 0.0
      %3644 = vmatmul.mubr.f32.gmra.mrb[0].mxu0 %v3261
      %v3645 = vpop.f32.mrb[0].mxu0
      %v3646 = vadd.f32 0.0, %v3645
      %v3647 = vpop.f32.mrb[0].mxu0
      %3648 = vmatprep.mubr.f32.mxu0 0.0
      %3649 = vmatmul.mubr.f32.gmra.mrb[0].mxu0 %v3264
      %v3650 = vpop.f32.mrb[0].mxu0
      %v3651 = vadd.f32 0.0, %v3650
      %v3652 = vpop.f32.mrb[0].mxu0
      %3653 = vdwg.mxu0
      %v3654 = vadd.f32 %v3052, %v3336
      %v3655 = vadd.f32 %v3053, %v3341
      %v3656 = vadd.f32 %v3054, %v3346
      %v3657 = vadd.f32 %v3055, %v3351
      %v3658 = vadd.f32 %v3056, %v3356
      %v3659 = vadd.f32 %v3057, %v3361
      %v3660 = vadd.f32 %v3058, %v3366
      %v3661 = vadd.f32 %v3059, %v3371
      %v3662 = vadd.f32 %v3060, %v3376
      %v3663 = vadd.f32 %v3061, %v3381
      %v3664 = vadd.f32 %v3062, %v3386
      %v3665 = vadd.f32 %v3063, %v3391
      %v3666 = vadd.f32 %v3064, %v3396
      %v3667 = vadd.f32 %v3065, %v3401
      %v3668 = vadd.f32 %v3066, %v3406
      %v3669 = vadd.f32 %v3067, %v3411
      %v3670 = vadd.f32 %v3068, %v3416
      %v3671 = vadd.f32 %v3069, %v3421
      %v3672 = vadd.f32 %v3070, %v3426
      %v3673 = vadd.f32 %v3071, %v3431
      %v3674 = vadd.f32 %v3072, %v3436
      %v3675 = vadd.f32 %v3073, %v3441
      %v3676 = vadd.f32 %v3074, %v3446
      %v3677 = vadd.f32 %v3075, %v3451
      %v3678 = vadd.f32 %v3076, %v3456
      %v3679 = vadd.f32 %v3077, %v3461
      %v3680 = vadd.f32 %v3078, %v3466
      %v3681 = vadd.f32 %v3079, %v3471
      %v3682 = vadd.f32 %v3080, %v3476
      %v3683 = vadd.f32 %v3081, %v3481
      %v3684 = vadd.f32 %v3082, %v3486
      %v3685 = vadd.f32 %v3083, %v3491
      %v3686 = vadd.f32 %v3084, %v3496
      %v3687 = vadd.f32 %v3085, %v3501
      %v3688 = vadd.f32 %v3086, %v3506
      %v3689 = vadd.f32 %v3087, %v3511
      %v3690 = vadd.f32 %v3088, %v3516
      %v3691 = vadd.f32 %v3089, %v3521
      %v3692 = vadd.f32 %v3090, %v3526
      %v3693 = vadd.f32 %v3091, %v3531
      %v3694 = vadd.f32 %v3092, %v3536
      %v3695 = vadd.f32 %v3093, %v3541
      %v3696 = vadd.f32 %v3094, %v3546
      %v3697 = vadd.f32 %v3095, %v3551
      %v3698 = vadd.f32 %v3096, %v3556
      %v3699 = vadd.f32 %v3097, %v3561
      %v3700 = vadd.f32 %v3098, %v3566
      %v3701 = vadd.f32 %v3099, %v3571
      %v3702 = vadd.f32 %v3100, %v3576
      %v3703 = vadd.f32 %v3101, %v3581
      %v3704 = vadd.f32 %v3102, %v3586
      %v3705 = vadd.f32 %v3103, %v3591
      %v3706 = vadd.f32 %v3104, %v3596
      %v3707 = vadd.f32 %v3105, %v3601
      %v3708 = vadd.f32 %v3106, %v3606
      %v3709 = vadd.f32 %v3107, %v3611
      %v3710 = vadd.f32 %v3108, %v3616
      %v3711 = vadd.f32 %v3109, %v3621
      %v3712 = vadd.f32 %v3110, %v3626
      %v3713 = vadd.f32 %v3111, %v3631
      %v3714 = vadd.f32 %v3112, %v3636
      %v3715 = vadd.f32 %v3113, %v3641
      %v3716 = vadd.f32 %v3114, %v3646
      %v3717 = vadd.f32 %v3115, %v3651
      %s3718 = scalar_lea.vmem %s1, 20
      %v3719 = vld [vmem:[%s3718] sm:$0xf]
      %v3721 = vsel %vm339, %v3719, 0
      %3723 = vmatprep.subr.mxu0 0.0
      %3724 = vmatpush1.msra.mxu0 %v3721
      %3725 = vmatprep.subr.mxu0 0.0
      %3726 = vmatpush1.msra.mxu0 0.0
      %3727 = vmatprep.subr.mxu0 0.0
      %3728 = vmatpush1.msra.mxu0 0.0
      %3729 = vmatprep.subr.mxu0 0.0
      %3730 = vmatpush1.msra.mxu0 0.0
      %3731 = vmatprep.subr.mxu0 0.0
      %3732 = vmatpush1.msra.mxu0 0.0
      %3733 = vmatprep.subr.mxu0 0.0
      %3734 = vmatpush1.msra.mxu0 0.0
      %3735 = vmatprep.subr.mxu0 0.0
      %3736 = vmatpush1.msra.mxu0 0.0
      %3737 = vmatprep.subr.mxu0 0.0
      %3738 = vmatpush1.msra.mxu0 0.0
      %3739 = vmatprep.subr.mxu0 0.0
      %3740 = vmatpush1.msra.mxu0 0.0
      %3741 = vmatprep.subr.mxu0 0.0
      %3742 = vmatpush1.msra.mxu0 0.0
      %3743 = vmatprep.subr.mxu0 0.0
      %3744 = vmatpush1.msra.mxu0 0.0
      %3745 = vmatprep.subr.mxu0 0.0
      %3746 = vmatpush1.msra.mxu0 0.0
      %3747 = vmatprep.subr.mxu0 0.0
      %3748 = vmatpush1.msra.mxu0 0.0
      %3749 = vmatprep.subr.mxu0 0.0
      %3750 = vmatpush1.msra.mxu0 0.0
      %3751 = vmatprep.subr.mxu0 0.0
      %3752 = vmatpush1.msra.mxu0 0.0
      %3753 = vmatprep.subr.mxu0 0.0
      %3754 = vmatpush1.msra.mxu0 0.0
      %3755 = vmatprep.subr.mxu0 0.0
      %3756 = vmatpush1.msra.mxu0 0.0
      %3757 = vmatprep.subr.mxu0 0.0
      %3758 = vmatpush1.msra.mxu0 0.0
      %3759 = vmatprep.subr.mxu0 0.0
      %3760 = vmatpush1.msra.mxu0 0.0
      %3761 = vmatprep.subr.mxu0 0.0
      %3762 = vmatpush1.msra.mxu0 0.0
      %3763 = vmatprep.subr.mxu0 0.0
      %3764 = vmatpush1.msra.mxu0 0.0
      %3765 = vmatprep.subr.mxu0 0.0
      %3766 = vmatpush1.msra.mxu0 0.0
      %3767 = vmatprep.subr.mxu0 0.0
      %3768 = vmatpush1.msra.mxu0 0.0
      %3769 = vmatprep.subr.mxu0 0.0
      %3770 = vmatpush1.msra.mxu0 0.0
      %3771 = vmatprep.subr.mxu0 0.0
      %3772 = vmatpush1.msra.mxu0 0.0
      %3773 = vmatprep.subr.mxu0 0.0
      %3774 = vmatpush1.msra.mxu0 0.0
      %3775 = vmatprep.subr.mxu0 0.0
      %3776 = vmatpush1.msra.mxu0 0.0
      %3777 = vmatprep.subr.mxu0 0.0
      %3778 = vmatpush1.msra.mxu0 0.0
      %3779 = vmatprep.subr.mxu0 0.0
      %3780 = vmatpush1.msra.mxu0 0.0
      %3781 = vmatprep.subr.mxu0 0.0
      %3782 = vmatpush1.msra.mxu0 0.0
      %3783 = vmatprep.subr.mxu0 0.0
      %3784 = vmatpush1.msra.mxu0 0.0
      %3785 = vmatprep.subr.mxu0 0.0
      %3786 = vmatpush1.msra.mxu0 0.0
      %3787 = vmatprep.mubr.f32.mxu0 0.0
      %3788 = vmatmul.mubr.f32.gmra.mrb[0].mxu0 %v3171
      %v3789 = vpop.f32.mrb[0].mxu0
      %v3790 = vadd.f32 0.0, %v3789
      %v3791 = vpop.f32.mrb[0].mxu0
      %3792 = vmatprep.mubr.f32.mxu0 0.0
      %3793 = vmatmul.mubr.f32.gmra.mrb[0].mxu0 %v3174
      %v3794 = vpop.f32.mrb[0].mxu0
      %v3795 = vadd.f32 0.0, %v3794
      %v3796 = vpop.f32.mrb[0].mxu0
      %3797 = vmatprep.mubr.f32.mxu0 0.0
      %3798 = vmatmul.mubr.f32.gmra.mrb[0].mxu0 %v3177
      %v3799 = vpop.f32.mrb[0].mxu0
      %v3800 = vadd.f32 0.0, %v3799
      %v3801 = vpop.f32.mrb[0].mxu0
      %3802 = vmatprep.mubr.f32.mxu0 0.0
      %3803 = vmatmul.mubr.f32.gmra.mrb[0].mxu0 %v3180
      %v3804 = vpop.f32.mrb[0].mxu0
      %v3805 = vadd.f32 0.0, %v3804
      %v3806 = vpop.f32.mrb[0].mxu0
      %3807 = vmatprep.mubr.f32.mxu0 0.0
      %3808 = vmatmul.mubr.f32.gmra.mrb[0].mxu0 %v3171
      %v3809 = vpop.f32.mrb[0].mxu0
      %v3810 = vadd.f32 0.0, %v3809
      %v3811 = vpop.f32.mrb[0].mxu0
      %3812 = vmatprep.mubr.f32.mxu0 0.0
      %3813 = vmatmul.mubr.f32.gmra.mrb[0].mxu0 %v3174
      %v3814 = vpop.f32.mrb[0].mxu0
      %v3815 = vadd.f32 0.0, %v3814
      %v3816 = vpop.f32.mrb[0].mxu0
      %3817 = vmatprep.mubr.f32.mxu0 0.0
      %3818 = vmatmul.mubr.f32.gmra.mrb[0].mxu0 %v3177
      %v3819 = vpop.f32.mrb[0].mxu0
      %v3820 = vadd.f32 0.0, %v3819
      %v3821 = vpop.f32.mrb[0].mxu0
      %3822 = vmatprep.mubr.f32.mxu0 0.0
      %3823 = vmatmul.mubr.f32.gmra.mrb[0].mxu0 %v3180
      %v3824 = vpop.f32.mrb[0].mxu0
      %v3825 = vadd.f32 0.0, %v3824
      %v3826 = vpop.f32.mrb[0].mxu0
      %3827 = vmatprep.mubr.f32.mxu0 0.0
      %3828 = vmatmul.mubr.f32.gmra.mrb[0].mxu0 %v3183
      %v3829 = vpop.f32.mrb[0].mxu0
      %v3830 = vadd.f32 0.0, %v3829
      %v3831 = vpop.f32.mrb[0].mxu0
      %3832 = vmatprep.mubr.f32.mxu0 0.0
      %3833 = vmatmul.mubr.f32.gmra.mrb[0].mxu0 %v3186
      %v3834 = vpop.f32.mrb[0].mxu0
      %v3835 = vadd.f32 0.0, %v3834
      %v3836 = vpop.f32.mrb[0].mxu0
      %3837 = vmatprep.mubr.f32.mxu0 0.0
      %3838 = vmatmul.mubr.f32.gmra.mrb[0].mxu0 %v3189
      %v3839 = vpop.f32.mrb[0].mxu0
      %v3840 = vadd.f32 0.0, %v3839
      %v3841 = vpop.f32.mrb[0].mxu0
      %3842 = vmatprep.mubr.f32.mxu0 0.0
      %3843 = vmatmul.mubr.f32.gmra.mrb[0].mxu0 %v3192
      %v3844 = vpop.f32.mrb[0].mxu0
      %v3845 = vadd.f32 0.0, %v3844
      %v3846 = vpop.f32.mrb[0].mxu0
      %3847 = vmatprep.mubr.f32.mxu0 0.0
      %3848 = vmatmul.mubr.f32.gmra.mrb[0].mxu0 %v3183
      %v3849 = vpop.f32.mrb[0].mxu0
      %v3850 = vadd.f32 0.0, %v3849
      %v3851 = vpop.f32.mrb[0].mxu0
      %3852 = vmatprep.mubr.f32.mxu0 0.0
      %3853 = vmatmul.mubr.f32.gmra.mrb[0].mxu0 %v3186
      %v3854 = vpop.f32.mrb[0].mxu0
      %v3855 = vadd.f32 0.0, %v3854
      %v3856 = vpop.f32.mrb[0].mxu0
      %3857 = vmatprep.mubr.f32.mxu0 0.0
      %3858 = vmatmul.mubr.f32.gmra.mrb[0].mxu0 %v3189
      %v3859 = vpop.f32.mrb[0].mxu0
      %v3860 = vadd.f32 0.0, %v3859
      %v3861 = vpop.f32.mrb[0].mxu0
      %3862 = vmatprep.mubr.f32.mxu0 0.0
      %3863 = vmatmul.mubr.f32.gmra.mrb[0].mxu0 %v3192
      %v3864 = vpop.f32.mrb[0].mxu0
      %v3865 = vadd.f32 0.0, %v3864
      %v3866 = vpop.f32.mrb[0].mxu0
      %3867 = vmatprep.mubr.f32.mxu0 0.0
      %3868 = vmatmul.mubr.f32.gmra.mrb[0].mxu0 %v3195
      %v3869 = vpop.f32.mrb[0].mxu0
      %v3870 = vadd.f32 0.0, %v3869
      %v3871 = vpop.f32.mrb[0].mxu0
      %3872 = vmatprep.mubr.f32.mxu0 0.0
      %3873 = vmatmul.mubr.f32.gmra.mrb[0].mxu0 %v3198
      %v3874 = vpop.f32.mrb[0].mxu0
      %v3875 = vadd.f32 0.0, %v3874
      %v3876 = vpop.f32.mrb[0].mxu0
      %3877 = vmatprep.mubr.f32.mxu0 0.0
      %3878 = vmatmul.mubr.f32.gmra.mrb[0].mxu0 %v3201
      %v3879 = vpop.f32.mrb[0].mxu0
      %v3880 = vadd.f32 0.0, %v3879
      %v3881 = vpop.f32.mrb[0].mxu0
      %3882 = vmatprep.mubr.f32.mxu0 0.0
      %3883 = vmatmul.mubr.f32.gmra.mrb[0].mxu0 %v3204
      %v3884 = vpop.f32.mrb[0].mxu0
      %v3885 = vadd.f32 0.0, %v3884
      %v3886 = vpop.f32.mrb[0].mxu0
      %3887 = vmatprep.mubr.f32.mxu0 0.0
      %3888 = vmatmul.mubr.f32.gmra.mrb[0].mxu0 %v3195
      %v3889 = vpop.f32.mrb[0].mxu0
      %v3890 = vadd.f32 0.0, %v3889
      %v3891 = vpop.f32.mrb[0].mxu0
      %3892 = vmatprep.mubr.f32.mxu0 0.0
      %3893 = vmatmul.mubr.f32.gmra.mrb[0].mxu0 %v3198
      %v3894 = vpop.f32.mrb[0].mxu0
      %v3895 = vadd.f32 0.0, %v3894
      %v3896 = vpop.f32.mrb[0].mxu0
      %3897 = vmatprep.mubr.f32.mxu0 0.0
      %3898 = vmatmul.mubr.f32.gmra.mrb[0].mxu0 %v3201
      %v3899 = vpop.f32.mrb[0].mxu0
      %v3900 = vadd.f32 0.0, %v3899
      %v3901 = vpop.f32.mrb[0].mxu0
      %3902 = vmatprep.mubr.f32.mxu0 0.0
      %3903 = vmatmul.mubr.f32.gmra.mrb[0].mxu0 %v3204
      %v3904 = vpop.f32.mrb[0].mxu0
      %v3905 = vadd.f32 0.0, %v3904
      %v3906 = vpop.f32.mrb[0].mxu0
      %3907 = vmatprep.mubr.f32.mxu0 0.0
      %3908 = vmatmul.mubr.f32.gmra.mrb[0].mxu0 %v3207
      %v3909 = vpop.f32.mrb[0].mxu0
      %v3910 = vadd.f32 0.0, %v3909
      %v3911 = vpop.f32.mrb[0].mxu0
      %3912 = vmatprep.mubr.f32.mxu0 0.0
      %3913 = vmatmul.mubr.f32.gmra.mrb[0].mxu0 %v3210
      %v3914 = vpop.f32.mrb[0].mxu0
      %v3915 = vadd.f32 0.0, %v3914
      %v3916 = vpop.f32.mrb[0].mxu0
      %3917 = vmatprep.mubr.f32.mxu0 0.0
      %3918 = vmatmul.mubr.f32.gmra.mrb[0].mxu0 %v3213
      %v3919 = vpop.f32.mrb[0].mxu0
      %v3920 = vadd.f32 0.0, %v3919
      %v3921 = vpop.f32.mrb[0].mxu0
      %3922 = vmatprep.mubr.f32.mxu0 0.0
      %3923 = vmatmul.mubr.f32.gmra.mrb[0].mxu0 %v3216
      %v3924 = vpop.f32.mrb[0].mxu0
      %v3925 = vadd.f32 0.0, %v3924
      %v3926 = vpop.f32.mrb[0].mxu0
      %3927 = vmatprep.mubr.f32.mxu0 0.0
      %3928 = vmatmul.mubr.f32.gmra.mrb[0].mxu0 %v3207
      %v3929 = vpop.f32.mrb[0].mxu0
      %v3930 = vadd.f32 0.0, %v3929
      %v3931 = vpop.f32.mrb[0].mxu0
      %3932 = vmatprep.mubr.f32.mxu0 0.0
      %3933 = vmatmul.mubr.f32.gmra.mrb[0].mxu0 %v3210
      %v3934 = vpop.f32.mrb[0].mxu0
      %v3935 = vadd.f32 0.0, %v3934
      %v3936 = vpop.f32.mrb[0].mxu0
      %3937 = vmatprep.mubr.f32.mxu0 0.0
      %3938 = vmatmul.mubr.f32.gmra.mrb[0].mxu0 %v3213
      %v3939 = vpop.f32.mrb[0].mxu0
      %v3940 = vadd.f32 0.0, %v3939
      %v3941 = vpop.f32.mrb[0].mxu0
      %3942 = vmatprep.mubr.f32.mxu0 0.0
      %3943 = vmatmul.mubr.f32.gmra.mrb[0].mxu0 %v3216
      %v3944 = vpop.f32.mrb[0].mxu0
      %v3945 = vadd.f32 0.0, %v3944
      %v3946 = vpop.f32.mrb[0].mxu0
      %3947 = vmatprep.mubr.f32.mxu0 0.0
      %3948 = vmatmul.mubr.f32.gmra.mrb[0].mxu0 %v3219
      %v3949 = vpop.f32.mrb[0].mxu0
      %v3950 = vadd.f32 0.0, %v3949
      %v3951 = vpop.f32.mrb[0].mxu0
      %3952 = vmatprep.mubr.f32.mxu0 0.0
      %3953 = vmatmul.mubr.f32.gmra.mrb[0].mxu0 %v3222
      %v3954 = vpop.f32.mrb[0].mxu0
      %v3955 = vadd.f32 0.0, %v3954
      %v3956 = vpop.f32.mrb[0].mxu0
      %3957 = vmatprep.mubr.f32.mxu0 0.0
      %3958 = vmatmul.mubr.f32.gmra.mrb[0].mxu0 %v3225
      %v3959 = vpop.f32.mrb[0].mxu0
      %v3960 = vadd.f32 0.0, %v3959
      %v3961 = vpop.f32.mrb[0].mxu0
      %3962 = vmatprep.mubr.f32.mxu0 0.0
      %3963 = vmatmul.mubr.f32.gmra.mrb[0].mxu0 %v3228
      %v3964 = vpop.f32.mrb[0].mxu0
      %v3965 = vadd.f32 0.0, %v3964
      %v3966 = vpop.f32.mrb[0].mxu0
      %3967 = vmatprep.mubr.f32.mxu0 0.0
      %3968 = vmatmul.mubr.f32.gmra.mrb[0].mxu0 %v3219
      %v3969 = vpop.f32.mrb[0].mxu0
      %v3970 = vadd.f32 0.0, %v3969
      %v3971 = vpop.f32.mrb[0].mxu0
      %3972 = vmatprep.mubr.f32.mxu0 0.0
      %3973 = vmatmul.mubr.f32.gmra.mrb[0].mxu0 %v3222
      %v3974 = vpop.f32.mrb[0].mxu0
      %v3975 = vadd.f32 0.0, %v3974
      %v3976 = vpop.f32.mrb[0].mxu0
      %3977 = vmatprep.mubr.f32.mxu0 0.0
      %3978 = vmatmul.mubr.f32.gmra.mrb[0].mxu0 %v3225
      %v3979 = vpop.f32.mrb[0].mxu0
      %v3980 = vadd.f32 0.0, %v3979
      %v3981 = vpop.f32.mrb[0].mxu0
      %3982 = vmatprep.mubr.f32.mxu0 0.0
      %3983 = vmatmul.mubr.f32.gmra.mrb[0].mxu0 %v3228
      %v3984 = vpop.f32.mrb[0].mxu0
      %v3985 = vadd.f32 0.0, %v3984
      %v3986 = vpop.f32.mrb[0].mxu0
      %3987 = vmatprep.mubr.f32.mxu0 0.0
      %3988 = vmatmul.mubr.f32.gmra.mrb[0].mxu0 %v3231
      %v3989 = vpop.f32.mrb[0].mxu0
      %v3990 = vadd.f32 0.0, %v3989
      %v3991 = vpop.f32.mrb[0].mxu0
      %3992 = vmatprep.mubr.f32.mxu0 0.0
      %3993 = vmatmul.mubr.f32.gmra.mrb[0].mxu0 %v3234
      %v3994 = vpop.f32.mrb[0].mxu0
      %v3995 = vadd.f32 0.0, %v3994
      %v3996 = vpop.f32.mrb[0].mxu0
      %3997 = vmatprep.mubr.f32.mxu0 0.0
      %3998 = vmatmul.mubr.f32.gmra.mrb[0].mxu0 %v3237
      %v3999 = vpop.f32.mrb[0].mxu0
      %v4000 = vadd.f32 0.0, %v3999
      %v4001 = vpop.f32.mrb[0].mxu0
      %4002 = vmatprep.mubr.f32.mxu0 0.0
      %4003 = vmatmul.mubr.f32.gmra.mrb[0].mxu0 %v3240
      %v4004 = vpop.f32.mrb[0].mxu0
      %v4005 = vadd.f32 0.0, %v4004
      %v4006 = vpop.f32.mrb[0].mxu0
      %4007 = vmatprep.mubr.f32.mxu0 0.0
      %4008 = vmatmul.mubr.f32.gmra.mrb[0].mxu0 %v3231
      %v4009 = vpop.f32.mrb[0].mxu0
      %v4010 = vadd.f32 0.0, %v4009
      %v4011 = vpop.f32.mrb[0].mxu0
      %4012 = vmatprep.mubr.f32.mxu0 0.0
      %4013 = vmatmul.mubr.f32.gmra.mrb[0].mxu0 %v3234
      %v4014 = vpop.f32.mrb[0].mxu0
      %v4015 = vadd.f32 0.0, %v4014
      %v4016 = vpop.f32.mrb[0].mxu0
      %4017 = vmatprep.mubr.f32.mxu0 0.0
      %4018 = vmatmul.mubr.f32.gmra.mrb[0].mxu0 %v3237
      %v4019 = vpop.f32.mrb[0].mxu0
      %v4020 = vadd.f32 0.0, %v4019
      %v4021 = vpop.f32.mrb[0].mxu0
      %4022 = vmatprep.mubr.f32.mxu0 0.0
      %4023 = vmatmul.mubr.f32.gmra.mrb[0].mxu0 %v3240
      %v4024 = vpop.f32.mrb[0].mxu0
      %v4025 = vadd.f32 0.0, %v4024
      %v4026 = vpop.f32.mrb[0].mxu0
      %4027 = vmatprep.mubr.f32.mxu0 0.0
      %4028 = vmatmul.mubr.f32.gmra.mrb[0].mxu0 %v3243
      %v4029 = vpop.f32.mrb[0].mxu0
      %v4030 = vadd.f32 0.0, %v4029
      %v4031 = vpop.f32.mrb[0].mxu0
      %4032 = vmatprep.mubr.f32.mxu0 0.0
      %4033 = vmatmul.mubr.f32.gmra.mrb[0].mxu0 %v3246
      %v4034 = vpop.f32.mrb[0].mxu0
      %v4035 = vadd.f32 0.0, %v4034
      %v4036 = vpop.f32.mrb[0].mxu0
      %4037 = vmatprep.mubr.f32.mxu0 0.0
      %4038 = vmatmul.mubr.f32.gmra.mrb[0].mxu0 %v3249
      %v4039 = vpop.f32.mrb[0].mxu0
      %v4040 = vadd.f32 0.0, %v4039
      %v4041 = vpop.f32.mrb[0].mxu0
      %4042 = vmatprep.mubr.f32.mxu0 0.0
      %4043 = vmatmul.mubr.f32.gmra.mrb[0].mxu0 %v3252
      %v4044 = vpop.f32.mrb[0].mxu0
      %v4045 = vadd.f32 0.0, %v4044
      %v4046 = vpop.f32.mrb[0].mxu0
      %4047 = vmatprep.mubr.f32.mxu0 0.0
      %4048 = vmatmul.mubr.f32.gmra.mrb[0].mxu0 %v3243
      %v4049 = vpop.f32.mrb[0].mxu0
      %v4050 = vadd.f32 0.0, %v4049
      %v4051 = vpop.f32.mrb[0].mxu0
      %4052 = vmatprep.mubr.f32.mxu0 0.0
      %4053 = vmatmul.mubr.f32.gmra.mrb[0].mxu0 %v3246
      %v4054 = vpop.f32.mrb[0].mxu0
      %v4055 = vadd.f32 0.0, %v4054
      %v4056 = vpop.f32.mrb[0].mxu0
      %4057 = vmatprep.mubr.f32.mxu0 0.0
      %4058 = vmatmul.mubr.f32.gmra.mrb[0].mxu0 %v3249
      %v4059 = vpop.f32.mrb[0].mxu0
      %v4060 = vadd.f32 0.0, %v4059
      %v4061 = vpop.f32.mrb[0].mxu0
      %4062 = vmatprep.mubr.f32.mxu0 0.0
      %4063 = vmatmul.mubr.f32.gmra.mrb[0].mxu0 %v3252
      %v4064 = vpop.f32.mrb[0].mxu0
      %v4065 = vadd.f32 0.0, %v4064
      %v4066 = vpop.f32.mrb[0].mxu0
      %4067 = vmatprep.mubr.f32.mxu0 0.0
      %4068 = vmatmul.mubr.f32.gmra.mrb[0].mxu0 %v3255
      %v4069 = vpop.f32.mrb[0].mxu0
      %v4070 = vadd.f32 0.0, %v4069
      %v4071 = vpop.f32.mrb[0].mxu0
      %4072 = vmatprep.mubr.f32.mxu0 0.0
      %4073 = vmatmul.mubr.f32.gmra.mrb[0].mxu0 %v3258
      %v4074 = vpop.f32.mrb[0].mxu0
      %v4075 = vadd.f32 0.0, %v4074
      %v4076 = vpop.f32.mrb[0].mxu0
      %4077 = vmatprep.mubr.f32.mxu0 0.0
      %4078 = vmatmul.mubr.f32.gmra.mrb[0].mxu0 %v3261
      %v4079 = vpop.f32.mrb[0].mxu0
      %v4080 = vadd.f32 0.0, %v4079
      %v4081 = vpop.f32.mrb[0].mxu0
      %4082 = vmatprep.mubr.f32.mxu0 0.0
      %4083 = vmatmul.mubr.f32.gmra.mrb[0].mxu0 %v3264
      %v4084 = vpop.f32.mrb[0].mxu0
      %v4085 = vadd.f32 0.0, %v4084
      %v4086 = vpop.f32.mrb[0].mxu0
      %4087 = vmatprep.mubr.f32.mxu0 0.0
      %4088 = vmatmul.mubr.f32.gmra.mrb[0].mxu0 %v3255
      %v4089 = vpop.f32.mrb[0].mxu0
      %v4090 = vadd.f32 0.0, %v4089
      %v4091 = vpop.f32.mrb[0].mxu0
      %4092 = vmatprep.mubr.f32.mxu0 0.0
      %4093 = vmatmul.mubr.f32.gmra.mrb[0].mxu0 %v3258
      %v4094 = vpop.f32.mrb[0].mxu0
      %v4095 = vadd.f32 0.0, %v4094
      %v4096 = vpop.f32.mrb[0].mxu0
      %4097 = vmatprep.mubr.f32.mxu0 0.0
      %4098 = vmatmul.mubr.f32.gmra.mrb[0].mxu0 %v3261
      %v4099 = vpop.f32.mrb[0].mxu0
      %v4100 = vadd.f32 0.0, %v4099
      %v4101 = vpop.f32.mrb[0].mxu0
      %4102 = vmatprep.mubr.f32.mxu0 0.0
      %4103 = vmatmul.mubr.f32.gmra.mrb[0].mxu0 %v3264
      %v4104 = vpop.f32.mrb[0].mxu0
      %v4105 = vadd.f32 0.0, %v4104
      %v4106 = vpop.f32.mrb[0].mxu0
      %4107 = vdwg.mxu0
      %v4108 = vadd.f32 %v3654, %v3790
      %v4109 = vadd.f32 %v3655, %v3795
      %v4110 = vadd.f32 %v3656, %v3800
      %v4111 = vadd.f32 %v3657, %v3805
      %v4112 = vadd.f32 %v3658, %v3810
      %v4113 = vadd.f32 %v3659, %v3815
      %v4114 = vadd.f32 %v3660, %v3820
      %v4115 = vadd.f32 %v3661, %v3825
      %v4116 = vadd.f32 %v3662, %v3830
      %v4117 = vadd.f32 %v3663, %v3835
      %v4118 = vadd.f32 %v3664, %v3840
      %v4119 = vadd.f32 %v3665, %v3845
      %v4120 = vadd.f32 %v3666, %v3850
      %v4121 = vadd.f32 %v3667, %v3855
      %v4122 = vadd.f32 %v3668, %v3860
      %v4123 = vadd.f32 %v3669, %v3865
      %v4124 = vadd.f32 %v3670, %v3870
      %v4125 = vadd.f32 %v3671, %v3875
      %v4126 = vadd.f32 %v3672, %v3880
      %v4127 = vadd.f32 %v3673, %v3885
      %v4128 = vadd.f32 %v3674, %v3890
      %v4129 = vadd.f32 %v3675, %v3895
      %v4130 = vadd.f32 %v3676, %v3900
      %v4131 = vadd.f32 %v3677, %v3905
      %v4132 = vadd.f32 %v3678, %v3910
      %v4133 = vadd.f32 %v3679, %v3915
      %v4134 = vadd.f32 %v3680, %v3920
      %v4135 = vadd.f32 %v3681, %v3925
      %v4136 = vadd.f32 %v3682, %v3930
      %v4137 = vadd.f32 %v3683, %v3935
      %v4138 = vadd.f32 %v3684, %v3940
      %v4139 = vadd.f32 %v3685, %v3945
      %v4140 = vadd.f32 %v3686, %v3950
      %v4141 = vadd.f32 %v3687, %v3955
      %v4142 = vadd.f32 %v3688, %v3960
      %v4143 = vadd.f32 %v3689, %v3965
      %v4144 = vadd.f32 %v3690, %v3970
      %v4145 = vadd.f32 %v3691, %v3975
      %v4146 = vadd.f32 %v3692, %v3980
      %v4147 = vadd.f32 %v3693, %v3985
      %v4148 = vadd.f32 %v3694, %v3990
      %v4149 = vadd.f32 %v3695, %v3995
      %v4150 = vadd.f32 %v3696, %v4000
      %v4151 = vadd.f32 %v3697, %v4005
      %v4152 = vadd.f32 %v3698, %v4010
      %v4153 = vadd.f32 %v3699, %v4015
      %v4154 = vadd.f32 %v3700, %v4020
      %v4155 = vadd.f32 %v3701, %v4025
      %v4156 = vadd.f32 %v3702, %v4030
      %v4157 = vadd.f32 %v3703, %v4035
      %v4158 = vadd.f32 %v3704, %v4040
      %v4159 = vadd.f32 %v3705, %v4045
      %v4160 = vadd.f32 %v3706, %v4050
      %v4161 = vadd.f32 %v3707, %v4055
      %v4162 = vadd.f32 %v3708, %v4060
      %v4163 = vadd.f32 %v3709, %v4065
      %v4164 = vadd.f32 %v3710, %v4070
      %v4165 = vadd.f32 %v3711, %v4075
      %v4166 = vadd.f32 %v3712, %v4080
      %v4167 = vadd.f32 %v3713, %v4085
      %v4168 = vadd.f32 %v3714, %v4090
      %v4169 = vadd.f32 %v3715, %v4095
      %v4170 = vadd.f32 %v3716, %v4100
      %v4171 = vadd.f32 %v3717, %v4105
      %s4172 = scalar_lea.vmem %s1, 32
      %v4173 = vld [vmem:[%s4172] sm:$0xf]
      %v4175 = vsel %vm242, %v3152, 0
      %v4178 = vsel %vm242, %v3153, 0
      %v4181 = vsel %vm242, %v3154, 0
      %v4184 = vsel %vm242, %v3155, 0
      %v4187 = vsel %vm339, %v4173, 0
      %4189 = vmatprep.subr.mxu0 0.0
      %4190 = vmatpush1.msra.mxu0 %v4187
      %4191 = vmatprep.subr.mxu0 0.0
      %4192 = vmatpush1.msra.mxu0 0.0
      %4193 = vmatprep.subr.mxu0 0.0
      %4194 = vmatpush1.msra.mxu0 0.0
      %4195 = vmatprep.subr.mxu0 0.0
      %4196 = vmatpush1.msra.mxu0 0.0
      %4197 = vmatprep.subr.mxu0 0.0
      %4198 = vmatpush1.msra.mxu0 0.0
      %4199 = vmatprep.subr.mxu0 0.0
      %4200 = vmatpush1.msra.mxu0 0.0
      %4201 = vmatprep.subr.mxu0 0.0
      %4202 = vmatpush1.msra.mxu0 0.0
      %4203 = vmatprep.subr.mxu0 0.0
      %4204 = vmatpush1.msra.mxu0 0.0
      %4205 = vmatprep.subr.mxu0 0.0
      %4206 = vmatpush1.msra.mxu0 0.0
      %4207 = vmatprep.subr.mxu0 0.0
      %4208 = vmatpush1.msra.mxu0 0.0
      %4209 = vmatprep.subr.mxu0 0.0
      %4210 = vmatpush1.msra.mxu0 0.0
      %4211 = vmatprep.subr.mxu0 0.0
      %4212 = vmatpush1.msra.mxu0 0.0
      %4213 = vmatprep.subr.mxu0 0.0
      %4214 = vmatpush1.msra.mxu0 0.0
      %4215 = vmatprep.subr.mxu0 0.0
      %4216 = vmatpush1.msra.mxu0 0.0
      %4217 = vmatprep.subr.mxu0 0.0
      %4218 = vmatpush1.msra.mxu0 0.0
      %4219 = vmatprep.subr.mxu0 0.0
      %4220 = vmatpush1.msra.mxu0 0.0
      %4221 = vmatprep.subr.mxu0 0.0
      %4222 = vmatpush1.msra.mxu0 0.0
      %4223 = vmatprep.subr.mxu0 0.0
      %4224 = vmatpush1.msra.mxu0 0.0
      %4225 = vmatprep.subr.mxu0 0.0
      %4226 = vmatpush1.msra.mxu0 0.0
      %4227 = vmatprep.subr.mxu0 0.0
      %4228 = vmatpush1.msra.mxu0 0.0
      %4229 = vmatprep.subr.mxu0 0.0
      %4230 = vmatpush1.msra.mxu0 0.0
      %4231 = vmatprep.subr.mxu0 0.0
      %4232 = vmatpush1.msra.mxu0 0.0
      %4233 = vmatprep.subr.mxu0 0.0
      %4234 = vmatpush1.msra.mxu0 0.0
      %4235 = vmatprep.subr.mxu0 0.0
      %4236 = vmatpush1.msra.mxu0 0.0
      %4237 = vmatprep.subr.mxu0 0.0
      %4238 = vmatpush1.msra.mxu0 0.0
      %4239 = vmatprep.subr.mxu0 0.0
      %4240 = vmatpush1.msra.mxu0 0.0
      %4241 = vmatprep.subr.mxu0 0.0
      %4242 = vmatpush1.msra.mxu0 0.0
      %4243 = vmatprep.subr.mxu0 0.0
      %4244 = vmatpush1.msra.mxu0 0.0
      %4245 = vmatprep.subr.mxu0 0.0
      %4246 = vmatpush1.msra.mxu0 0.0
      %4247 = vmatprep.subr.mxu0 0.0
      %4248 = vmatpush1.msra.mxu0 0.0
      %4249 = vmatprep.subr.mxu0 0.0
      %4250 = vmatpush1.msra.mxu0 0.0
      %4251 = vmatprep.subr.mxu0 0.0
      %4252 = vmatpush1.msra.mxu0 0.0
      %4253 = vmatprep.mubr.f32.mxu0 0.0
      %4254 = vmatmul.mubr.f32.gmra.mrb[0].mxu0 %v3171
      %v4255 = vpop.f32.mrb[0].mxu0
      %v4256 = vadd.f32 0.0, %v4255
      %v4257 = vpop.f32.mrb[0].mxu0
      %4258 = vmatprep.mubr.f32.mxu0 0.0
      %4259 = vmatmul.mubr.f32.gmra.mrb[0].mxu0 %v3174
      %v4260 = vpop.f32.mrb[0].mxu0
      %v4261 = vadd.f32 0.0, %v4260
      %v4262 = vpop.f32.mrb[0].mxu0
      %4263 = vmatprep.mubr.f32.mxu0 0.0
      %4264 = vmatmul.mubr.f32.gmra.mrb[0].mxu0 %v3177
      %v4265 = vpop.f32.mrb[0].mxu0
      %v4266 = vadd.f32 0.0, %v4265
      %v4267 = vpop.f32.mrb[0].mxu0
      %4268 = vmatprep.mubr.f32.mxu0 0.0
      %4269 = vmatmul.mubr.f32.gmra.mrb[0].mxu0 %v3180
      %v4270 = vpop.f32.mrb[0].mxu0
      %v4271 = vadd.f32 0.0, %v4270
      %v4272 = vpop.f32.mrb[0].mxu0
      %4273 = vmatprep.mubr.f32.mxu0 0.0
      %4274 = vmatmul.mubr.f32.gmra.mrb[0].mxu0 %v3183
      %v4275 = vpop.f32.mrb[0].mxu0
      %v4276 = vadd.f32 0.0, %v4275
      %v4277 = vpop.f32.mrb[0].mxu0
      %4278 = vmatprep.mubr.f32.mxu0 0.0
      %4279 = vmatmul.mubr.f32.gmra.mrb[0].mxu0 %v3186
      %v4280 = vpop.f32.mrb[0].mxu0
      %v4281 = vadd.f32 0.0, %v4280
      %v4282 = vpop.f32.mrb[0].mxu0
      %4283 = vmatprep.mubr.f32.mxu0 0.0
      %4284 = vmatmul.mubr.f32.gmra.mrb[0].mxu0 %v3189
      %v4285 = vpop.f32.mrb[0].mxu0
      %v4286 = vadd.f32 0.0, %v4285
      %v4287 = vpop.f32.mrb[0].mxu0
      %4288 = vmatprep.mubr.f32.mxu0 0.0
      %4289 = vmatmul.mubr.f32.gmra.mrb[0].mxu0 %v3192
      %v4290 = vpop.f32.mrb[0].mxu0
      %v4291 = vadd.f32 0.0, %v4290
      %v4292 = vpop.f32.mrb[0].mxu0
      %4293 = vmatprep.mubr.f32.mxu0 0.0
      %4294 = vmatmul.mubr.f32.gmra.mrb[0].mxu0 %v3183
      %v4295 = vpop.f32.mrb[0].mxu0
      %v4296 = vadd.f32 0.0, %v4295
      %v4297 = vpop.f32.mrb[0].mxu0
      %4298 = vmatprep.mubr.f32.mxu0 0.0
      %4299 = vmatmul.mubr.f32.gmra.mrb[0].mxu0 %v3186
      %v4300 = vpop.f32.mrb[0].mxu0
      %v4301 = vadd.f32 0.0, %v4300
      %v4302 = vpop.f32.mrb[0].mxu0
      %4303 = vmatprep.mubr.f32.mxu0 0.0
      %4304 = vmatmul.mubr.f32.gmra.mrb[0].mxu0 %v3189
      %v4305 = vpop.f32.mrb[0].mxu0
      %v4306 = vadd.f32 0.0, %v4305
      %v4307 = vpop.f32.mrb[0].mxu0
      %4308 = vmatprep.mubr.f32.mxu0 0.0
      %4309 = vmatmul.mubr.f32.gmra.mrb[0].mxu0 %v3192
      %v4310 = vpop.f32.mrb[0].mxu0
      %v4311 = vadd.f32 0.0, %v4310
      %v4312 = vpop.f32.mrb[0].mxu0
      %4313 = vmatprep.mubr.f32.mxu0 0.0
      %4314 = vmatmul.mubr.f32.gmra.mrb[0].mxu0 %v3195
      %v4315 = vpop.f32.mrb[0].mxu0
      %v4316 = vadd.f32 0.0, %v4315
      %v4317 = vpop.f32.mrb[0].mxu0
      %4318 = vmatprep.mubr.f32.mxu0 0.0
      %4319 = vmatmul.mubr.f32.gmra.mrb[0].mxu0 %v3198
      %v4320 = vpop.f32.mrb[0].mxu0
      %v4321 = vadd.f32 0.0, %v4320
      %v4322 = vpop.f32.mrb[0].mxu0
      %4323 = vmatprep.mubr.f32.mxu0 0.0
      %4324 = vmatmul.mubr.f32.gmra.mrb[0].mxu0 %v3201
      %v4325 = vpop.f32.mrb[0].mxu0
      %v4326 = vadd.f32 0.0, %v4325
      %v4327 = vpop.f32.mrb[0].mxu0
      %4328 = vmatprep.mubr.f32.mxu0 0.0
      %4329 = vmatmul.mubr.f32.gmra.mrb[0].mxu0 %v3204
      %v4330 = vpop.f32.mrb[0].mxu0
      %v4331 = vadd.f32 0.0, %v4330
      %v4332 = vpop.f32.mrb[0].mxu0
      %4333 = vmatprep.mubr.f32.mxu0 0.0
      %4334 = vmatmul.mubr.f32.gmra.mrb[0].mxu0 %v3195
      %v4335 = vpop.f32.mrb[0].mxu0
      %v4336 = vadd.f32 0.0, %v4335
      %v4337 = vpop.f32.mrb[0].mxu0
      %4338 = vmatprep.mubr.f32.mxu0 0.0
      %4339 = vmatmul.mubr.f32.gmra.mrb[0].mxu0 %v3198
      %v4340 = vpop.f32.mrb[0].mxu0
      %v4341 = vadd.f32 0.0, %v4340
      %v4342 = vpop.f32.mrb[0].mxu0
      %4343 = vmatprep.mubr.f32.mxu0 0.0
      %4344 = vmatmul.mubr.f32.gmra.mrb[0].mxu0 %v3201
      %v4345 = vpop.f32.mrb[0].mxu0
      %v4346 = vadd.f32 0.0, %v4345
      %v4347 = vpop.f32.mrb[0].mxu0
      %4348 = vmatprep.mubr.f32.mxu0 0.0
      %4349 = vmatmul.mubr.f32.gmra.mrb[0].mxu0 %v3204
      %v4350 = vpop.f32.mrb[0].mxu0
      %v4351 = vadd.f32 0.0, %v4350
      %v4352 = vpop.f32.mrb[0].mxu0
      %4353 = vmatprep.mubr.f32.mxu0 0.0
      %4354 = vmatmul.mubr.f32.gmra.mrb[0].mxu0 %v3207
      %v4355 = vpop.f32.mrb[0].mxu0
      %v4356 = vadd.f32 0.0, %v4355
      %v4357 = vpop.f32.mrb[0].mxu0
      %4358 = vmatprep.mubr.f32.mxu0 0.0
      %4359 = vmatmul.mubr.f32.gmra.mrb[0].mxu0 %v3210
      %v4360 = vpop.f32.mrb[0].mxu0
      %v4361 = vadd.f32 0.0, %v4360
      %v4362 = vpop.f32.mrb[0].mxu0
      %4363 = vmatprep.mubr.f32.mxu0 0.0
      %4364 = vmatmul.mubr.f32.gmra.mrb[0].mxu0 %v3213
      %v4365 = vpop.f32.mrb[0].mxu0
      %v4366 = vadd.f32 0.0, %v4365
      %v4367 = vpop.f32.mrb[0].mxu0
      %4368 = vmatprep.mubr.f32.mxu0 0.0
      %4369 = vmatmul.mubr.f32.gmra.mrb[0].mxu0 %v3216
      %v4370 = vpop.f32.mrb[0].mxu0
      %v4371 = vadd.f32 0.0, %v4370
      %v4372 = vpop.f32.mrb[0].mxu0
      %4373 = vmatprep.mubr.f32.mxu0 0.0
      %4374 = vmatmul.mubr.f32.gmra.mrb[0].mxu0 %v3207
      %v4375 = vpop.f32.mrb[0].mxu0
      %v4376 = vadd.f32 0.0, %v4375
      %v4377 = vpop.f32.mrb[0].mxu0
      %4378 = vmatprep.mubr.f32.mxu0 0.0
      %4379 = vmatmul.mubr.f32.gmra.mrb[0].mxu0 %v3210
      %v4380 = vpop.f32.mrb[0].mxu0
      %v4381 = vadd.f32 0.0, %v4380
      %v4382 = vpop.f32.mrb[0].mxu0
      %4383 = vmatprep.mubr.f32.mxu0 0.0
      %4384 = vmatmul.mubr.f32.gmra.mrb[0].mxu0 %v3213
      %v4385 = vpop.f32.mrb[0].mxu0
      %v4386 = vadd.f32 0.0, %v4385
      %v4387 = vpop.f32.mrb[0].mxu0
      %4388 = vmatprep.mubr.f32.mxu0 0.0
      %4389 = vmatmul.mubr.f32.gmra.mrb[0].mxu0 %v3216
      %v4390 = vpop.f32.mrb[0].mxu0
      %v4391 = vadd.f32 0.0, %v4390
      %v4392 = vpop.f32.mrb[0].mxu0
      %4393 = vmatprep.mubr.f32.mxu0 0.0
      %4394 = vmatmul.mubr.f32.gmra.mrb[0].mxu0 %v3219
      %v4395 = vpop.f32.mrb[0].mxu0
      %v4396 = vadd.f32 0.0, %v4395
      %v4397 = vpop.f32.mrb[0].mxu0
      %4398 = vmatprep.mubr.f32.mxu0 0.0
      %4399 = vmatmul.mubr.f32.gmra.mrb[0].mxu0 %v3222
      %v4400 = vpop.f32.mrb[0].mxu0
      %v4401 = vadd.f32 0.0, %v4400
      %v4402 = vpop.f32.mrb[0].mxu0
      %4403 = vmatprep.mubr.f32.mxu0 0.0
      %4404 = vmatmul.mubr.f32.gmra.mrb[0].mxu0 %v3225
      %v4405 = vpop.f32.mrb[0].mxu0
      %v4406 = vadd.f32 0.0, %v4405
      %v4407 = vpop.f32.mrb[0].mxu0
      %4408 = vmatprep.mubr.f32.mxu0 0.0
      %4409 = vmatmul.mubr.f32.gmra.mrb[0].mxu0 %v3228
      %v4410 = vpop.f32.mrb[0].mxu0
      %v4411 = vadd.f32 0.0, %v4410
      %v4412 = vpop.f32.mrb[0].mxu0
      %4413 = vmatprep.mubr.f32.mxu0 0.0
      %4414 = vmatmul.mubr.f32.gmra.mrb[0].mxu0 %v3219
      %v4415 = vpop.f32.mrb[0].mxu0
      %v4416 = vadd.f32 0.0, %v4415
      %v4417 = vpop.f32.mrb[0].mxu0
      %4418 = vmatprep.mubr.f32.mxu0 0.0
      %4419 = vmatmul.mubr.f32.gmra.mrb[0].mxu0 %v3222
      %v4420 = vpop.f32.mrb[0].mxu0
      %v4421 = vadd.f32 0.0, %v4420
      %v4422 = vpop.f32.mrb[0].mxu0
      %4423 = vmatprep.mubr.f32.mxu0 0.0
      %4424 = vmatmul.mubr.f32.gmra.mrb[0].mxu0 %v3225
      %v4425 = vpop.f32.mrb[0].mxu0
      %v4426 = vadd.f32 0.0, %v4425
      %v4427 = vpop.f32.mrb[0].mxu0
      %4428 = vmatprep.mubr.f32.mxu0 0.0
      %4429 = vmatmul.mubr.f32.gmra.mrb[0].mxu0 %v3228
      %v4430 = vpop.f32.mrb[0].mxu0
      %v4431 = vadd.f32 0.0, %v4430
      %v4432 = vpop.f32.mrb[0].mxu0
      %4433 = vmatprep.mubr.f32.mxu0 0.0
      %4434 = vmatmul.mubr.f32.gmra.mrb[0].mxu0 %v3231
      %v4435 = vpop.f32.mrb[0].mxu0
      %v4436 = vadd.f32 0.0, %v4435
      %v4437 = vpop.f32.mrb[0].mxu0
      %4438 = vmatprep.mubr.f32.mxu0 0.0
      %4439 = vmatmul.mubr.f32.gmra.mrb[0].mxu0 %v3234
      %v4440 = vpop.f32.mrb[0].mxu0
      %v4441 = vadd.f32 0.0, %v4440
      %v4442 = vpop.f32.mrb[0].mxu0
      %4443 = vmatprep.mubr.f32.mxu0 0.0
      %4444 = vmatmul.mubr.f32.gmra.mrb[0].mxu0 %v3237
      %v4445 = vpop.f32.mrb[0].mxu0
      %v4446 = vadd.f32 0.0, %v4445
      %v4447 = vpop.f32.mrb[0].mxu0
      %4448 = vmatprep.mubr.f32.mxu0 0.0
      %4449 = vmatmul.mubr.f32.gmra.mrb[0].mxu0 %v3240
      %v4450 = vpop.f32.mrb[0].mxu0
      %v4451 = vadd.f32 0.0, %v4450
      %v4452 = vpop.f32.mrb[0].mxu0
      %4453 = vmatprep.mubr.f32.mxu0 0.0
      %4454 = vmatmul.mubr.f32.gmra.mrb[0].mxu0 %v3231
      %v4455 = vpop.f32.mrb[0].mxu0
      %v4456 = vadd.f32 0.0, %v4455
      %v4457 = vpop.f32.mrb[0].mxu0
      %4458 = vmatprep.mubr.f32.mxu0 0.0
      %4459 = vmatmul.mubr.f32.gmra.mrb[0].mxu0 %v3234
      %v4460 = vpop.f32.mrb[0].mxu0
      %v4461 = vadd.f32 0.0, %v4460
      %v4462 = vpop.f32.mrb[0].mxu0
      %4463 = vmatprep.mubr.f32.mxu0 0.0
      %4464 = vmatmul.mubr.f32.gmra.mrb[0].mxu0 %v3237
      %v4465 = vpop.f32.mrb[0].mxu0
      %v4466 = vadd.f32 0.0, %v4465
      %v4467 = vpop.f32.mrb[0].mxu0
      %4468 = vmatprep.mubr.f32.mxu0 0.0
      %4469 = vmatmul.mubr.f32.gmra.mrb[0].mxu0 %v3240
      %v4470 = vpop.f32.mrb[0].mxu0
      %v4471 = vadd.f32 0.0, %v4470
      %v4472 = vpop.f32.mrb[0].mxu0
      %4473 = vmatprep.mubr.f32.mxu0 0.0
      %4474 = vmatmul.mubr.f32.gmra.mrb[0].mxu0 %v3243
      %v4475 = vpop.f32.mrb[0].mxu0
      %v4476 = vadd.f32 0.0, %v4475
      %v4477 = vpop.f32.mrb[0].mxu0
      %4478 = vmatprep.mubr.f32.mxu0 0.0
      %4479 = vmatmul.mubr.f32.gmra.mrb[0].mxu0 %v3246
      %v4480 = vpop.f32.mrb[0].mxu0
      %v4481 = vadd.f32 0.0, %v4480
      %v4482 = vpop.f32.mrb[0].mxu0
      %4483 = vmatprep.mubr.f32.mxu0 0.0
      %4484 = vmatmul.mubr.f32.gmra.mrb[0].mxu0 %v3249
      %v4485 = vpop.f32.mrb[0].mxu0
      %v4486 = vadd.f32 0.0, %v4485
      %v4487 = vpop.f32.mrb[0].mxu0
      %4488 = vmatprep.mubr.f32.mxu0 0.0
      %4489 = vmatmul.mubr.f32.gmra.mrb[0].mxu0 %v3252
      %v4490 = vpop.f32.mrb[0].mxu0
      %v4491 = vadd.f32 0.0, %v4490
      %v4492 = vpop.f32.mrb[0].mxu0
      %4493 = vmatprep.mubr.f32.mxu0 0.0
      %4494 = vmatmul.mubr.f32.gmra.mrb[0].mxu0 %v3243
      %v4495 = vpop.f32.mrb[0].mxu0
      %v4496 = vadd.f32 0.0, %v4495
      %v4497 = vpop.f32.mrb[0].mxu0
      %4498 = vmatprep.mubr.f32.mxu0 0.0
      %4499 = vmatmul.mubr.f32.gmra.mrb[0].mxu0 %v3246
      %v4500 = vpop.f32.mrb[0].mxu0
      %v4501 = vadd.f32 0.0, %v4500
      %v4502 = vpop.f32.mrb[0].mxu0
      %4503 = vmatprep.mubr.f32.mxu0 0.0
      %4504 = vmatmul.mubr.f32.gmra.mrb[0].mxu0 %v3249
      %v4505 = vpop.f32.mrb[0].mxu0
      %v4506 = vadd.f32 0.0, %v4505
      %v4507 = vpop.f32.mrb[0].mxu0
      %4508 = vmatprep.mubr.f32.mxu0 0.0
      %4509 = vmatmul.mubr.f32.gmra.mrb[0].mxu0 %v3252
      %v4510 = vpop.f32.mrb[0].mxu0
      %v4511 = vadd.f32 0.0, %v4510
      %v4512 = vpop.f32.mrb[0].mxu0
      %4513 = vmatprep.mubr.f32.mxu0 0.0
      %4514 = vmatmul.mubr.f32.gmra.mrb[0].mxu0 %v3255
      %v4515 = vpop.f32.mrb[0].mxu0
      %v4516 = vadd.f32 0.0, %v4515
      %v4517 = vpop.f32.mrb[0].mxu0
      %4518 = vmatprep.mubr.f32.mxu0 0.0
      %4519 = vmatmul.mubr.f32.gmra.mrb[0].mxu0 %v3258
      %v4520 = vpop.f32.mrb[0].mxu0
      %v4521 = vadd.f32 0.0, %v4520
      %v4522 = vpop.f32.mrb[0].mxu0
      %4523 = vmatprep.mubr.f32.mxu0 0.0
      %4524 = vmatmul.mubr.f32.gmra.mrb[0].mxu0 %v3261
      %v4525 = vpop.f32.mrb[0].mxu0
      %v4526 = vadd.f32 0.0, %v4525
      %v4527 = vpop.f32.mrb[0].mxu0
      %4528 = vmatprep.mubr.f32.mxu0 0.0
      %4529 = vmatmul.mubr.f32.gmra.mrb[0].mxu0 %v3264
      %v4530 = vpop.f32.mrb[0].mxu0
      %v4531 = vadd.f32 0.0, %v4530
      %v4532 = vpop.f32.mrb[0].mxu0
      %4533 = vmatprep.mubr.f32.mxu0 0.0
      %4534 = vmatmul.mubr.f32.gmra.mrb[0].mxu0 %v3255
      %v4535 = vpop.f32.mrb[0].mxu0
      %v4536 = vadd.f32 0.0, %v4535
      %v4537 = vpop.f32.mrb[0].mxu0
      %4538 = vmatprep.mubr.f32.mxu0 0.0
      %4539 = vmatmul.mubr.f32.gmra.mrb[0].mxu0 %v3258
      %v4540 = vpop.f32.mrb[0].mxu0
      %v4541 = vadd.f32 0.0, %v4540
      %v4542 = vpop.f32.mrb[0].mxu0
      %4543 = vmatprep.mubr.f32.mxu0 0.0
      %4544 = vmatmul.mubr.f32.gmra.mrb[0].mxu0 %v3261
      %v4545 = vpop.f32.mrb[0].mxu0
      %v4546 = vadd.f32 0.0, %v4545
      %v4547 = vpop.f32.mrb[0].mxu0
      %4548 = vmatprep.mubr.f32.mxu0 0.0
      %4549 = vmatmul.mubr.f32.gmra.mrb[0].mxu0 %v3264
      %v4550 = vpop.f32.mrb[0].mxu0
      %v4551 = vadd.f32 0.0, %v4550
      %v4552 = vpop.f32.mrb[0].mxu0
      %4553 = vmatprep.mubr.f32.mxu0 0.0
      %4554 = vmatmul.mubr.f32.gmra.mrb[0].mxu0 %v4175
      %v4555 = vpop.f32.mrb[0].mxu0
      %v4556 = vadd.f32 0.0, %v4555
      %v4557 = vpop.f32.mrb[0].mxu0
      %4558 = vmatprep.mubr.f32.mxu0 0.0
      %4559 = vmatmul.mubr.f32.gmra.mrb[0].mxu0 %v4178
      %v4560 = vpop.f32.mrb[0].mxu0
      %v4561 = vadd.f32 0.0, %v4560
      %v4562 = vpop.f32.mrb[0].mxu0
      %4563 = vmatprep.mubr.f32.mxu0 0.0
      %4564 = vmatmul.mubr.f32.gmra.mrb[0].mxu0 %v4181
      %v4565 = vpop.f32.mrb[0].mxu0
      %v4566 = vadd.f32 0.0, %v4565
      %v4567 = vpop.f32.mrb[0].mxu0
      %4568 = vmatprep.mubr.f32.mxu0 0.0
      %4569 = vmatmul.mubr.f32.gmra.mrb[0].mxu0 %v4184
      %v4570 = vpop.f32.mrb[0].mxu0
      %v4571 = vadd.f32 0.0, %v4570
      %v4572 = vpop.f32.mrb[0].mxu0
      %4573 = vdwg.mxu0
      %v4574 = vadd.f32 %v4108, %v4256
      %v4575 = vadd.f32 %v4109, %v4261
      %v4576 = vadd.f32 %v4110, %v4266
      %v4577 = vadd.f32 %v4111, %v4271
      %v4578 = vadd.f32 %v4112, %v4276
      %v4579 = vadd.f32 %v4113, %v4281
      %v4580 = vadd.f32 %v4114, %v4286
      %v4581 = vadd.f32 %v4115, %v4291
      %v4582 = vadd.f32 %v4116, %v4296
      %v4583 = vadd.f32 %v4117, %v4301
      %v4584 = vadd.f32 %v4118, %v4306
      %v4585 = vadd.f32 %v4119, %v4311
      %v4586 = vadd.f32 %v4120, %v4316
      %v4587 = vadd.f32 %v4121, %v4321
      %v4588 = vadd.f32 %v4122, %v4326
      %v4589 = vadd.f32 %v4123, %v4331
      %v4590 = vadd.f32 %v4124, %v4336
      %v4591 = vadd.f32 %v4125, %v4341
      %v4592 = vadd.f32 %v4126, %v4346
      %v4593 = vadd.f32 %v4127, %v4351
      %v4594 = vadd.f32 %v4128, %v4356
      %v4595 = vadd.f32 %v4129, %v4361
      %v4596 = vadd.f32 %v4130, %v4366
      %v4597 = vadd.f32 %v4131, %v4371
      %v4598 = vadd.f32 %v4132, %v4376
      %v4599 = vadd.f32 %v4133, %v4381
      %v4600 = vadd.f32 %v4134, %v4386
      %v4601 = vadd.f32 %v4135, %v4391
      %v4602 = vadd.f32 %v4136, %v4396
      %v4603 = vadd.f32 %v4137, %v4401
      %v4604 = vadd.f32 %v4138, %v4406
      %v4605 = vadd.f32 %v4139, %v4411
      %v4606 = vadd.f32 %v4140, %v4416
      %v4607 = vadd.f32 %v4141, %v4421
      %v4608 = vadd.f32 %v4142, %v4426
      %v4609 = vadd.f32 %v4143, %v4431
      %v4610 = vadd.f32 %v4144, %v4436
      %v4611 = vadd.f32 %v4145, %v4441
      %v4612 = vadd.f32 %v4146, %v4446
      %v4613 = vadd.f32 %v4147, %v4451
      %v4614 = vadd.f32 %v4148, %v4456
      %v4615 = vadd.f32 %v4149, %v4461
      %v4616 = vadd.f32 %v4150, %v4466
      %v4617 = vadd.f32 %v4151, %v4471
      %v4618 = vadd.f32 %v4152, %v4476
      %v4619 = vadd.f32 %v4153, %v4481
      %v4620 = vadd.f32 %v4154, %v4486
      %v4621 = vadd.f32 %v4155, %v4491
      %v4622 = vadd.f32 %v4156, %v4496
      %v4623 = vadd.f32 %v4157, %v4501
      %v4624 = vadd.f32 %v4158, %v4506
      %v4625 = vadd.f32 %v4159, %v4511
      %v4626 = vadd.f32 %v4160, %v4516
      %v4627 = vadd.f32 %v4161, %v4521
      %v4628 = vadd.f32 %v4162, %v4526
      %v4629 = vadd.f32 %v4163, %v4531
      %v4630 = vadd.f32 %v4164, %v4536
      %v4631 = vadd.f32 %v4165, %v4541
      %v4632 = vadd.f32 %v4166, %v4546
      %v4633 = vadd.f32 %v4167, %v4551
      %v4634 = vadd.f32 %v4168, %v4556
      %v4635 = vadd.f32 %v4169, %v4561
      %v4636 = vadd.f32 %v4170, %v4566
      %v4637 = vadd.f32 %v4171, %v4571
      %v4638 = vld [vmem:[%s2] sm:$0x1]
      %v4640 = vlaneseq
      %v4641 = vshrl.u32 %v4640, 7
      %v4642 = vsub.s32 0, %v4641
      %v4643 = vrot.slane %v4638, %v4642
      %v4645 = vadd.f32 %v4574, %v4643
      %v4646 = vadd.f32 %v4575, %v4643
      %v4647 = vadd.f32 %v4576, %v4643
      %v4648 = vadd.f32 %v4577, %v4643
      %v4649 = vadd.f32 %v4578, %v4643
      %v4650 = vadd.f32 %v4579, %v4643
      %v4651 = vadd.f32 %v4580, %v4643
      %v4652 = vadd.f32 %v4581, %v4643
      %v4653 = vadd.f32 %v4582, %v4643
      %v4654 = vadd.f32 %v4583, %v4643
      %v4655 = vadd.f32 %v4584, %v4643
      %v4656 = vadd.f32 %v4585, %v4643
      %v4657 = vadd.f32 %v4586, %v4643
      %v4658 = vadd.f32 %v4587, %v4643
      %v4659 = vadd.f32 %v4588, %v4643
      %v4660 = vadd.f32 %v4589, %v4643
      %v4661 = vadd.f32 %v4590, %v4643
      %v4662 = vadd.f32 %v4591, %v4643
      %v4663 = vadd.f32 %v4592, %v4643
      %v4664 = vadd.f32 %v4593, %v4643
      %v4665 = vadd.f32 %v4594, %v4643
      %v4666 = vadd.f32 %v4595, %v4643
      %v4667 = vadd.f32 %v4596, %v4643
      %v4668 = vadd.f32 %v4597, %v4643
      %v4669 = vadd.f32 %v4598, %v4643
      %v4670 = vadd.f32 %v4599, %v4643
      %v4671 = vadd.f32 %v4600, %v4643
      %v4672 = vadd.f32 %v4601, %v4643
      %v4673 = vadd.f32 %v4602, %v4643
      %v4674 = vadd.f32 %v4603, %v4643
      %v4675 = vadd.f32 %v4604, %v4643
      %v4676 = vadd.f32 %v4605, %v4643
      %v4677 = vadd.f32 %v4606, %v4643
      %v4678 = vadd.f32 %v4607, %v4643
      %v4679 = vadd.f32 %v4608, %v4643
      %v4680 = vadd.f32 %v4609, %v4643
      %v4681 = vadd.f32 %v4610, %v4643
      %v4682 = vadd.f32 %v4611, %v4643
      %v4683 = vadd.f32 %v4612, %v4643
      %v4684 = vadd.f32 %v4613, %v4643
      %v4685 = vadd.f32 %v4614, %v4643
      %v4686 = vadd.f32 %v4615, %v4643
      %v4687 = vadd.f32 %v4616, %v4643
      %v4688 = vadd.f32 %v4617, %v4643
      %v4689 = vadd.f32 %v4618, %v4643
      %v4690 = vadd.f32 %v4619, %v4643
      %v4691 = vadd.f32 %v4620, %v4643
      %v4692 = vadd.f32 %v4621, %v4643
      %v4693 = vadd.f32 %v4622, %v4643
      %v4694 = vadd.f32 %v4623, %v4643
      %v4695 = vadd.f32 %v4624, %v4643
      %v4696 = vadd.f32 %v4625, %v4643
      %v4697 = vadd.f32 %v4626, %v4643
      %v4698 = vadd.f32 %v4627, %v4643
      %v4699 = vadd.f32 %v4628, %v4643
      %v4700 = vadd.f32 %v4629, %v4643
      %v4701 = vadd.f32 %v4630, %v4643
      %v4702 = vadd.f32 %v4631, %v4643
      %v4703 = vadd.f32 %v4632, %v4643
      %v4704 = vadd.f32 %v4633, %v4643
      %v4705 = vadd.f32 %v4634, %v4643
      %v4706 = vadd.f32 %v4635, %v4643
      %v4707 = vadd.f32 %v4636, %v4643
      %v4708 = vadd.f32 %v4637, %v4643
      %vm4709 = vcmp.ge.f32.partialorder %v4645, 0.0
      %vm4710 = vcmp.ge.f32.partialorder %v4646, 0.0
      %vm4711 = vcmp.ge.f32.partialorder %v4647, 0.0
      %vm4712 = vcmp.ge.f32.partialorder %v4648, 0.0
      %vm4713 = vcmp.ge.f32.partialorder %v4649, 0.0
      %vm4714 = vcmp.ge.f32.partialorder %v4650, 0.0
      %vm4715 = vcmp.ge.f32.partialorder %v4651, 0.0
      %vm4716 = vcmp.ge.f32.partialorder %v4652, 0.0
      %vm4717 = vcmp.ge.f32.partialorder %v4653, 0.0
      %vm4718 = vcmp.ge.f32.partialorder %v4654, 0.0
      %vm4719 = vcmp.ge.f32.partialorder %v4655, 0.0
      %vm4720 = vcmp.ge.f32.partialorder %v4656, 0.0
      %vm4721 = vcmp.ge.f32.partialorder %v4657, 0.0
      %vm4722 = vcmp.ge.f32.partialorder %v4658, 0.0
      %vm4723 = vcmp.ge.f32.partialorder %v4659, 0.0
      %vm4724 = vcmp.ge.f32.partialorder %v4660, 0.0
      %vm4725 = vcmp.ge.f32.partialorder %v4661, 0.0
      %vm4726 = vcmp.ge.f32.partialorder %v4662, 0.0
      %vm4727 = vcmp.ge.f32.partialorder %v4663, 0.0
      %vm4728 = vcmp.ge.f32.partialorder %v4664, 0.0
      %vm4729 = vcmp.ge.f32.partialorder %v4665, 0.0
      %vm4730 = vcmp.ge.f32.partialorder %v4666, 0.0
      %vm4731 = vcmp.ge.f32.partialorder %v4667, 0.0
      %vm4732 = vcmp.ge.f32.partialorder %v4668, 0.0
      %vm4733 = vcmp.ge.f32.partialorder %v4669, 0.0
      %vm4734 = vcmp.ge.f32.partialorder %v4670, 0.0
      %vm4735 = vcmp.ge.f32.partialorder %v4671, 0.0
      %vm4736 = vcmp.ge.f32.partialorder %v4672, 0.0
      %vm4737 = vcmp.ge.f32.partialorder %v4673, 0.0
      %vm4738 = vcmp.ge.f32.partialorder %v4674, 0.0
      %vm4739 = vcmp.ge.f32.partialorder %v4675, 0.0
      %vm4740 = vcmp.ge.f32.partialorder %v4676, 0.0
      %vm4741 = vcmp.ge.f32.partialorder %v4677, 0.0
      %vm4742 = vcmp.ge.f32.partialorder %v4678, 0.0
      %vm4743 = vcmp.ge.f32.partialorder %v4679, 0.0
      %vm4744 = vcmp.ge.f32.partialorder %v4680, 0.0
      %vm4745 = vcmp.ge.f32.partialorder %v4681, 0.0
      %vm4746 = vcmp.ge.f32.partialorder %v4682, 0.0
      %vm4747 = vcmp.ge.f32.partialorder %v4683, 0.0
      %vm4748 = vcmp.ge.f32.partialorder %v4684, 0.0
      %vm4749 = vcmp.ge.f32.partialorder %v4685, 0.0
      %vm4750 = vcmp.ge.f32.partialorder %v4686, 0.0
      %vm4751 = vcmp.ge.f32.partialorder %v4687, 0.0
      %vm4752 = vcmp.ge.f32.partialorder %v4688, 0.0
      %vm4753 = vcmp.ge.f32.partialorder %v4689, 0.0
      %vm4754 = vcmp.ge.f32.partialorder %v4690, 0.0
      %vm4755 = vcmp.ge.f32.partialorder %v4691, 0.0
      %vm4756 = vcmp.ge.f32.partialorder %v4692, 0.0
      %vm4757 = vcmp.ge.f32.partialorder %v4693, 0.0
      %vm4758 = vcmp.ge.f32.partialorder %v4694, 0.0
      %vm4759 = vcmp.ge.f32.partialorder %v4695, 0.0
      %vm4760 = vcmp.ge.f32.partialorder %v4696, 0.0
      %vm4761 = vcmp.ge.f32.partialorder %v4697, 0.0
      %vm4762 = vcmp.ge.f32.partialorder %v4698, 0.0
      %vm4763 = vcmp.ge.f32.partialorder %v4699, 0.0
      %vm4764 = vcmp.ge.f32.partialorder %v4700, 0.0
      %vm4765 = vcmp.ge.f32.partialorder %v4701, 0.0
      %vm4766 = vcmp.ge.f32.partialorder %v4702, 0.0
      %vm4767 = vcmp.ge.f32.partialorder %v4703, 0.0
      %vm4768 = vcmp.ge.f32.partialorder %v4704, 0.0
      %vm4769 = vcmp.ge.f32.partialorder %v4705, 0.0
      %vm4770 = vcmp.ge.f32.partialorder %v4706, 0.0
      %vm4771 = vcmp.ge.f32.partialorder %v4707, 0.0
      %vm4772 = vcmp.ge.f32.partialorder %v4708, 0.0
      %v4773 = vmul.f32 %v4645, 0.01
      %v4774 = vmul.f32 %v4646, 0.01
      %v4775 = vmul.f32 %v4647, 0.01
      %v4776 = vmul.f32 %v4648, 0.01
      %v4777 = vmul.f32 %v4649, 0.01
      %v4778 = vmul.f32 %v4650, 0.01
      %v4779 = vmul.f32 %v4651, 0.01
      %v4780 = vmul.f32 %v4652, 0.01
      %v4781 = vmul.f32 %v4653, 0.01
      %v4782 = vmul.f32 %v4654, 0.01
      %v4783 = vmul.f32 %v4655, 0.01
      %v4784 = vmul.f32 %v4656, 0.01
      %v4785 = vmul.f32 %v4657, 0.01
      %v4786 = vmul.f32 %v4658, 0.01
      %v4787 = vmul.f32 %v4659, 0.01
      %v4788 = vmul.f32 %v4660, 0.01
      %v4789 = vmul.f32 %v4661, 0.01
      %v4790 = vmul.f32 %v4662, 0.01
      %v4791 = vmul.f32 %v4663, 0.01
      %v4792 = vmul.f32 %v4664, 0.01
      %v4793 = vmul.f32 %v4665, 0.01
      %v4794 = vmul.f32 %v4666, 0.01
      %v4795 = vmul.f32 %v4667, 0.01
      %v4796 = vmul.f32 %v4668, 0.01
      %v4797 = vmul.f32 %v4669, 0.01
      %v4798 = vmul.f32 %v4670, 0.01
      %v4799 = vmul.f32 %v4671, 0.01
      %v4800 = vmul.f32 %v4672, 0.01
      %v4801 = vmul.f32 %v4673, 0.01
      %v4802 = vmul.f32 %v4674, 0.01
      %v4803 = vmul.f32 %v4675, 0.01
      %v4804 = vmul.f32 %v4676, 0.01
      %v4805 = vmul.f32 %v4677, 0.01
      %v4806 = vmul.f32 %v4678, 0.01
      %v4807 = vmul.f32 %v4679, 0.01
      %v4808 = vmul.f32 %v4680, 0.01
      %v4809 = vmul.f32 %v4681, 0.01
      %v4810 = vmul.f32 %v4682, 0.01
      %v4811 = vmul.f32 %v4683, 0.01
      %v4812 = vmul.f32 %v4684, 0.01
      %v4813 = vmul.f32 %v4685, 0.01
      %v4814 = vmul.f32 %v4686, 0.01
      %v4815 = vmul.f32 %v4687, 0.01
      %v4816 = vmul.f32 %v4688, 0.01
      %v4817 = vmul.f32 %v4689, 0.01
      %v4818 = vmul.f32 %v4690, 0.01
      %v4819 = vmul.f32 %v4691, 0.01
      %v4820 = vmul.f32 %v4692, 0.01
      %v4821 = vmul.f32 %v4693, 0.01
      %v4822 = vmul.f32 %v4694, 0.01
      %v4823 = vmul.f32 %v4695, 0.01
      %v4824 = vmul.f32 %v4696, 0.01
      %v4825 = vmul.f32 %v4697, 0.01
      %v4826 = vmul.f32 %v4698, 0.01
      %v4827 = vmul.f32 %v4699, 0.01
      %v4828 = vmul.f32 %v4700, 0.01
      %v4829 = vmul.f32 %v4701, 0.01
      %v4830 = vmul.f32 %v4702, 0.01
      %v4831 = vmul.f32 %v4703, 0.01
      %v4832 = vmul.f32 %v4704, 0.01
      %v4833 = vmul.f32 %v4705, 0.01
      %v4834 = vmul.f32 %v4706, 0.01
      %v4835 = vmul.f32 %v4707, 0.01
      %v4836 = vmul.f32 %v4708, 0.01
      %v4837 = vsel %vm4709, %v4645, %v4773
      %v4838 = vsel %vm4710, %v4646, %v4774
      %v4839 = vsel %vm4711, %v4647, %v4775
      %v4840 = vsel %vm4712, %v4648, %v4776
      %v4841 = vsel %vm4713, %v4649, %v4777
      %v4842 = vsel %vm4714, %v4650, %v4778
      %v4843 = vsel %vm4715, %v4651, %v4779
      %v4844 = vsel %vm4716, %v4652, %v4780
      %v4845 = vsel %vm4717, %v4653, %v4781
      %v4846 = vsel %vm4718, %v4654, %v4782
      %v4847 = vsel %vm4719, %v4655, %v4783
      %v4848 = vsel %vm4720, %v4656, %v4784
      %v4849 = vsel %vm4721, %v4657, %v4785
      %v4850 = vsel %vm4722, %v4658, %v4786
      %v4851 = vsel %vm4723, %v4659, %v4787
      %v4852 = vsel %vm4724, %v4660, %v4788
      %v4853 = vsel %vm4725, %v4661, %v4789
      %v4854 = vsel %vm4726, %v4662, %v4790
      %v4855 = vsel %vm4727, %v4663, %v4791
      %v4856 = vsel %vm4728, %v4664, %v4792
      %v4857 = vsel %vm4729, %v4665, %v4793
      %v4858 = vsel %vm4730, %v4666, %v4794
      %v4859 = vsel %vm4731, %v4667, %v4795
      %v4860 = vsel %vm4732, %v4668, %v4796
      %v4861 = vsel %vm4733, %v4669, %v4797
      %v4862 = vsel %vm4734, %v4670, %v4798
      %v4863 = vsel %vm4735, %v4671, %v4799
      %v4864 = vsel %vm4736, %v4672, %v4800
      %v4865 = vsel %vm4737, %v4673, %v4801
      %v4866 = vsel %vm4738, %v4674, %v4802
      %v4867 = vsel %vm4739, %v4675, %v4803
      %v4868 = vsel %vm4740, %v4676, %v4804
      %v4869 = vsel %vm4741, %v4677, %v4805
      %v4870 = vsel %vm4742, %v4678, %v4806
      %v4871 = vsel %vm4743, %v4679, %v4807
      %v4872 = vsel %vm4744, %v4680, %v4808
      %v4873 = vsel %vm4745, %v4681, %v4809
      %v4874 = vsel %vm4746, %v4682, %v4810
      %v4875 = vsel %vm4747, %v4683, %v4811
      %v4876 = vsel %vm4748, %v4684, %v4812
      %v4877 = vsel %vm4749, %v4685, %v4813
      %v4878 = vsel %vm4750, %v4686, %v4814
      %v4879 = vsel %vm4751, %v4687, %v4815
      %v4880 = vsel %vm4752, %v4688, %v4816
      %v4881 = vsel %vm4753, %v4689, %v4817
      %v4882 = vsel %vm4754, %v4690, %v4818
      %v4883 = vsel %vm4755, %v4691, %v4819
      %v4884 = vsel %vm4756, %v4692, %v4820
      %v4885 = vsel %vm4757, %v4693, %v4821
      %v4886 = vsel %vm4758, %v4694, %v4822
      %v4887 = vsel %vm4759, %v4695, %v4823
      %v4888 = vsel %vm4760, %v4696, %v4824
      %v4889 = vsel %vm4761, %v4697, %v4825
      %v4890 = vsel %vm4762, %v4698, %v4826
      %v4891 = vsel %vm4763, %v4699, %v4827
      %v4892 = vsel %vm4764, %v4700, %v4828
      %v4893 = vsel %vm4765, %v4701, %v4829
      %v4894 = vsel %vm4766, %v4702, %v4830
      %v4895 = vsel %vm4767, %v4703, %v4831
      %v4896 = vsel %vm4768, %v4704, %v4832
      %v4897 = vsel %vm4769, %v4705, %v4833
      %v4898 = vsel %vm4770, %v4706, %v4834
      %v4899 = vsel %vm4771, %v4707, %v4835
      %v4900 = vsel %vm4772, %v4708, %v4836
      %vm4901 = vcmask 64512
      %4902 = vst.msk [vmem:[%s194] sm:$0xff] %vm4901, %v4837
      %4903 = vst.msk [vmem:[%s194 + $0x8] sm:$0xff] %vm4901, %v4838
      %4904 = vst.msk [vmem:[%s194 + $0x10] sm:$0xff] %vm4901, %v4839
      %4905 = vst.msk [vmem:[%s194 + $0x18] sm:$0xff] %vm4901, %v4840
      %4906 = vst.msk [vmem:[%s194 + $0x20] sm:$0xff] %vm4901, %v4841
      %4907 = vst.msk [vmem:[%s194 + $0x28] sm:$0xff] %vm4901, %v4842
      %4908 = vst.msk [vmem:[%s194 + $0x30] sm:$0xff] %vm4901, %v4843
      %4909 = vst.msk [vmem:[%s194 + $0x38] sm:$0xff] %vm4901, %v4844
      %4910 = vst.msk [vmem:[%s194 + $0x40] sm:$0xff] %vm4901, %v4845
      %4911 = vst.msk [vmem:[%s194 + $0x48] sm:$0xff] %vm4901, %v4846
      %4912 = vst.msk [vmem:[%s194 + $0x50] sm:$0xff] %vm4901, %v4847
      %4913 = vst.msk [vmem:[%s194 + $0x58] sm:$0xff] %vm4901, %v4848
      %4914 = vst.msk [vmem:[%s194 + $0x60] sm:$0xff] %vm4901, %v4849
      %4915 = vst.msk [vmem:[%s194 + $0x68] sm:$0xff] %vm4901, %v4850
      %4916 = vst.msk [vmem:[%s194 + $0x70] sm:$0xff] %vm4901, %v4851
      %4917 = vst.msk [vmem:[%s194 + $0x78] sm:$0xff] %vm4901, %v4852
      %4918 = vst.msk [vmem:[%s194 + $0x80] sm:$0xff] %vm4901, %v4853
      %4919 = vst.msk [vmem:[%s194 + $0x88] sm:$0xff] %vm4901, %v4854
      %4920 = vst.msk [vmem:[%s194 + $0x90] sm:$0xff] %vm4901, %v4855
      %4921 = vst.msk [vmem:[%s194 + $0x98] sm:$0xff] %vm4901, %v4856
      %4922 = vst.msk [vmem:[%s194 + $0xa0] sm:$0xff] %vm4901, %v4857
      %4923 = vst.msk [vmem:[%s194 + $0xa8] sm:$0xff] %vm4901, %v4858
      %4924 = vst.msk [vmem:[%s194 + $0xb0] sm:$0xff] %vm4901, %v4859
      %4925 = vst.msk [vmem:[%s194 + $0xb8] sm:$0xff] %vm4901, %v4860
      %4926 = vst.msk [vmem:[%s194 + $0xc0] sm:$0xff] %vm4901, %v4861
      %4927 = vst.msk [vmem:[%s194 + $0xc8] sm:$0xff] %vm4901, %v4862
      %4928 = vst.msk [vmem:[%s194 + $0xd0] sm:$0xff] %vm4901, %v4863
      %4929 = vst.msk [vmem:[%s194 + $0xd8] sm:$0xff] %vm4901, %v4864
      %4930 = vst.msk [vmem:[%s194 + $0xe0] sm:$0xff] %vm4901, %v4865
      %4931 = vst.msk [vmem:[%s194 + $0xe8] sm:$0xff] %vm4901, %v4866
      %4932 = vst.msk [vmem:[%s194 + $0xf0] sm:$0xff] %vm4901, %v4867
      %4933 = vst.msk [vmem:[%s194 + $0xf8] sm:$0xff] %vm4901, %v4868
      %4934 = vst.msk [vmem:[%s194 + $0x100] sm:$0xff] %vm4901, %v4869
      %4935 = vst.msk [vmem:[%s194 + $0x108] sm:$0xff] %vm4901, %v4870
      %4936 = vst.msk [vmem:[%s194 + $0x110] sm:$0xff] %vm4901, %v4871
      %4937 = vst.msk [vmem:[%s194 + $0x118] sm:$0xff] %vm4901, %v4872
      %4938 = vst.msk [vmem:[%s194 + $0x120] sm:$0xff] %vm4901, %v4873
      %4939 = vst.msk [vmem:[%s194 + $0x128] sm:$0xff] %vm4901, %v4874
      %4940 = vst.msk [vmem:[%s194 + $0x130] sm:$0xff] %vm4901, %v4875
      %4941 = vst.msk [vmem:[%s194 + $0x138] sm:$0xff] %vm4901, %v4876
      %4942 = vst.msk [vmem:[%s194 + $0x140] sm:$0xff] %vm4901, %v4877
      %4943 = vst.msk [vmem:[%s194 + $0x148] sm:$0xff] %vm4901, %v4878
      %4944 = vst.msk [vmem:[%s194 + $0x150] sm:$0xff] %vm4901, %v4879
      %4945 = vst.msk [vmem:[%s194 + $0x158] sm:$0xff] %vm4901, %v4880
      %4946 = vst.msk [vmem:[%s194 + $0x160] sm:$0xff] %vm4901, %v4881
      %4947 = vst.msk [vmem:[%s194 + $0x168] sm:$0xff] %vm4901, %v4882
      %4948 = vst.msk [vmem:[%s194 + $0x170] sm:$0xff] %vm4901, %v4883
      %4949 = vst.msk [vmem:[%s194 + $0x178] sm:$0xff] %vm4901, %v4884
      %4950 = vst.msk [vmem:[%s194 + $0x180] sm:$0xff] %vm4901, %v4885
      %4951 = vst.msk [vmem:[%s194 + $0x188] sm:$0xff] %vm4901, %v4886
      %4952 = vst.msk [vmem:[%s194 + $0x190] sm:$0xff] %vm4901, %v4887
      %4953 = vst.msk [vmem:[%s194 + $0x198] sm:$0xff] %vm4901, %v4888
      %4954 = vst.msk [vmem:[%s194 + $0x1a0] sm:$0xff] %vm4901, %v4889
      %4955 = vst.msk [vmem:[%s194 + $0x1a8] sm:$0xff] %vm4901, %v4890
      %4956 = vst.msk [vmem:[%s194 + $0x1b0] sm:$0xff] %vm4901, %v4891
      %4957 = vst.msk [vmem:[%s194 + $0x1b8] sm:$0xff] %vm4901, %v4892
      %4958 = vst.msk [vmem:[%s194 + $0x1c0] sm:$0xff] %vm4901, %v4893
      %4959 = vst.msk [vmem:[%s194 + $0x1c8] sm:$0xff] %vm4901, %v4894
      %4960 = vst.msk [vmem:[%s194 + $0x1d0] sm:$0xff] %vm4901, %v4895
      %4961 = vst.msk [vmem:[%s194 + $0x1d8] sm:$0xff] %vm4901, %v4896
      %4962 = vst.msk [vmem:[%s194 + $0x1e0] sm:$0xff] %vm4901, %v4897
      %4963 = vst.msk [vmem:[%s194 + $0x1e8] sm:$0xff] %vm4901, %v4898
      %4964 = vst.msk [vmem:[%s194 + $0x1f0] sm:$0xff] %vm4901, %v4899
      %4965 = vst.msk [vmem:[%s194 + $0x1f8] sm:$0xff] %vm4901, %v4900
      %s4966 = smul.u32 16, %s19
      %p4967 = scmp.lt.s32.totalorder %s18, 1
      %s4968 = scalar_select %p4967, %s18, 1
      %p4969 = scmp.lt.s32.totalorder %s4966, 31
      %s4970 = scalar_select %p4969, %s4966, 31
      %s4971 = smul.addr %s4970, 4
      %s4972 = smul.addr %s4968, 128
      %s4973 = sadd.s32 %s4971, %s4972
      %s4974 = smul.addr %s4973, 8
      %s4975 = scalar_lea.vmem %s3, %s4974
      // Predicated region
      $region33: #{tpu_custom_call.1} parent=31 // pred_check
        %p4976 = pneg %p114
      $region34: #{tpu_custom_call.1} parent=31 // pred_check_branch
        %4978 = sbr.rel (%p4976) target = $region36
      $region35: #{tpu_custom_call.1} parent=31 // pred_region
        %s4979 = smul.u32 16, %s19
      $region36: #{tpu_custom_call.1} parent=31 // pred_fallthru
        _
    $region32: #{tpu_custom_call.1} parent=5 // pred_fallthru
      _
    %p4980 = scmp.le.s32.totalorder 2, %s9
    // Predicated region
    $region37: #{tpu_custom_call.1} parent=5 // pred_check
      %p4981 = pneg %p4980
    $region38: #{tpu_custom_call.1} parent=5 // pred_check_branch
      %4983 = sbr.rel (%p4981) target = $region40
    $region39: #{tpu_custom_call.1} parent=5 // pred_region
      %s4984 = ssub.s32 %s9, 2
      // Predicated region
      $region41: #{tpu_custom_call.1} parent=39 // pred_check
        %p4985 = pneg %p120
      $region42: #{tpu_custom_call.1} parent=39 // pred_check_branch
        %4987 = sbr.rel (%p4985) target = $region44
      $region43: #{tpu_custom_call.1} parent=39 // pred_region
        %s4988 = smul.u32 16, %s21
        %p4989 = scmp.lt.s32.totalorder %s20, 1
        %s4990 = scalar_select %p4989, %s20, 1
        %p4991 = scmp.lt.s32.totalorder %s4988, 31
        %s4992 = scalar_select %p4991, %s4988, 31
        %s4993 = smul.addr %s4992, 4
        %s4994 = smul.addr %s4990, 128
        %s4995 = sadd.s32 %s4993, %s4994
        %s4996 = smul.addr %s4995, 8
        %s4997 = scalar_lea.vmem %s3, %s4996
      $region44: #{tpu_custom_call.1} parent=39 // pred_fallthru
        _
    $region40: #{tpu_custom_call.1} parent=5 // pred_fallthru
      _
  $region6: #{tpu_custom_call.1} parent=0 // loop_footer
    %s13 = sadd.s32 1, %s9
  $region7: #{tpu_custom_call.1} parent=0 // loop_footer_branch
    %8 = sbr.rel target = $region3
  $region8: #{tpu_custom_call.1} parent=0 // loop_exit
    _

</llo_original>
